<compile_context>
chip_gen: v7x
topology: tpu7x:2x2x1
jax: 0.10.0
libtpu: 0.0.40
codegen_flags: <defaults>
</compile_context>

<pallas_src>
import functools

import jax
import jax.numpy as jnp
from jax import lax
from jax.experimental import pallas as pl
from jax.experimental.pallas import tpu as pltpu


# ------------------------------- helpers -------------------------------------

def _pick_tile(n, candidates=(2048, 1024, 512, 256, 128)):
    """Largest candidate tile that divides n, else n itself (single full block)."""
    for c in candidates:
        if n % c == 0:
            return c
    return n


# ----------------- ConvTranspose2d(4,2,1) phase matmul + BN stats ------------

def _convt_stats_kernel(w_ref, p_ref, o_ref, s_ref, ss_ref):
    # One MXU dot per (phase, pixel-tile); weight block is the full phase
    # weight (resident across pixel tiles).  Partial BN stats go to outputs
    # indexed by (phase, tile) so the grid can be fully parallel.
    o = jnp.dot(w_ref[0], p_ref[0], preferred_element_type=jnp.float32)   # (Cout, tn)
    o_ref[0] = o
    s_ref[0, 0] = jnp.sum(o, axis=1, keepdims=True)                       # (Cout, 1)
    ss_ref[0, 0] = jnp.sum(o * o, axis=1, keepdims=True)                  # (Cout, 1)


def pallas_convt_phases(patches, w4):
    """patches: (4, K, Npix); w4: (4, Cout, K) -> conv (4, Cout, Npix),
    per-tile partial sums (4, ni, Cout, 1) and sumsq (4, ni, Cout, 1)."""
    P, K, npx = patches.shape
    cout = w4.shape[1]
    tn = _pick_tile(npx)
    ni = npx // tn
    return pl.pallas_call(
        _convt_stats_kernel,
        out_shape=(jax.ShapeDtypeStruct((P, cout, npx), jnp.float32),
                   jax.ShapeDtypeStruct((P, ni, cout, 1), jnp.float32),
                   jax.ShapeDtypeStruct((P, ni, cout, 1), jnp.float32)),
        grid=(P, ni),
        in_specs=[
            pl.BlockSpec((1, cout, K), lambda p, i: (p, 0, 0)),   # resident weights
            pl.BlockSpec((1, K, tn), lambda p, i: (p, 0, i)),
        ],
        out_specs=(
            pl.BlockSpec((1, cout, tn), lambda p, i: (p, 0, i)),
            pl.BlockSpec((1, 1, cout, 1), lambda p, i: (p, i, 0, 0)),
            pl.BlockSpec((1, 1, cout, 1), lambda p, i: (p, i, 0, 0)),
        ),
        compiler_params=pltpu.CompilerParams(
            dimension_semantics=("parallel", "parallel")),
    )(w4, patches)


# ------------------------ BatchNorm(apply) + ReLU ----------------------------

def _bn_relu_kernel(x_ref, a_ref, b_ref, o_ref):
    o_ref[0] = jnp.maximum(x_ref[0] * a_ref[...] + b_ref[...], 0.0)


def pallas_bn_relu_apply(x, a, b):
    P, C, npx = x.shape
    tn = _pick_tile(npx)
    return pl.pallas_call(
        _bn_relu_kernel,
        out_shape=jax.ShapeDtypeStruct((P, C, npx), jnp.float32),
        grid=(P, npx // tn),
        in_specs=[
            pl.BlockSpec((1, C, tn), lambda p, i: (p, 0, i)),
            pl.BlockSpec((C, 1), lambda p, i: (0, 0)),
            pl.BlockSpec((C, 1), lambda p, i: (0, 0)),
        ],
        out_specs=pl.BlockSpec((1, C, tn), lambda p, i: (p, 0, i)),
        compiler_params=pltpu.CompilerParams(
            dimension_semantics=("parallel", "parallel")),
    )(x, a, b)


# ------------------- Self_Attn + Softmax2d (flash-style) ---------------------

def _attn_softmax2d_kernel(xq_ref, xk_ref, mqk_ref, cb_ref, wv_ref, bv_ref,
                           gamma_ref, o_ref, *, key_chunk):
    C = xq_ref.shape[1]
    tq = xq_ref.shape[2]
    N = xk_ref.shape[2]

    xq = xq_ref[0]                                                    # (C, tq)
    # Query projection (once per query tile).  Key-side bias Wk^T bq is folded
    # in:  e[j,i] = xk_j . (Mqk xq_i + Wk^T bq); per-query constants cancel in
    # the softmax over keys.
    qm = jnp.dot(mqk_ref[...], xq, preferred_element_type=jnp.float32) + cb_ref[...]

    m = jnp.full((1, tq), -jnp.inf, jnp.float32)
    l = jnp.zeros((1, tq), jnp.float32)
    acc = jnp.zeros((C, tq), jnp.float32)

    # Keys are fully VMEM-resident; statically unrolled online-softmax loop
    # over asymmetric (key_chunk sublane x tq lane) chunks.
    # TODO(synk): switch to lax.fori_loop + pl.ds for very large N.
    for off in range(0, N, key_chunk):
        xk = xk_ref[0, :, off:off + key_chunk]                        # (C, tk)
        # dim0/dim0 contraction (xk^T qm); MXU handles the lhs-transposed load.
        e = lax.dot_general(xk, qm, (((0,), (0,)), ((), ())),
                            preferred_element_type=jnp.float32)       # (tk, tq)
        v = jnp.dot(wv_ref[...], xk, preferred_element_type=jnp.float32) + bv_ref[...]
        m_new = jnp.maximum(m, jnp.max(e, axis=0, keepdims=True))
        alpha = jnp.exp(m - m_new)
        p = jnp.exp(e - m_new)                                        # (tk, tq)
        l = alpha * l + jnp.sum(p, axis=0, keepdims=True)
        acc = alpha * acc + jnp.dot(v, p, preferred_element_type=jnp.float32)
        m = m_new

    # gamma * attn_out + x, then Softmax2d over channels.
    y = gamma_ref[0] * (acc * pl.reciprocal(l, approx=True)) + xq
    my = jnp.max(y, axis=0, keepdims=True)
    ey = jnp.exp(y - my)
    # Exact reciprocal for the user-visible softmax (keeps the 2e-3 check).
    o_ref[0] = ey * pl.reciprocal(jnp.sum(ey, axis=0, keepdims=True), approx=False)


def pallas_self_attn_softmax2d(x_bcn, mqk, colb, wv, bv_col, gamma):
    B, C, N = x_bcn.shape
    tq = _pick_tile(N, candidates=(512, 256, 128))
    kc = 128 if N % 128 == 0 else N
    kernel = functools.partial(_attn_softmax2d_kernel, key_chunk=kc)
    return pl.pallas_call(
        kernel,
        out_shape=jax.ShapeDtypeStruct((B, C, N), jnp.float32),
        grid=(B, N // tq),
        in_specs=[
            pl.BlockSpec((1, C, tq), lambda b, qi: (b, 0, qi)),       # query tile
            pl.BlockSpec((1, C, N), lambda b, qi: (b, 0, 0)),         # resident keys
            pl.BlockSpec((C, C), lambda b, qi: (0, 0)),               # Wk^T Wq
            pl.BlockSpec((C, 1), lambda b, qi: (0, 0)),               # Wk^T bq
            pl.BlockSpec((C, C), lambda b, qi: (0, 0)),               # Wv
            pl.BlockSpec((C, 1), lambda b, qi: (0, 0)),               # bv
            pl.BlockSpec(memory_space=pltpu.MemorySpace.SMEM),        # gamma (1,)
        ],
        out_specs=pl.BlockSpec((1, C, tq), lambda b, qi: (b, 0, qi)),
        compiler_params=pltpu.CompilerParams(
            dimension_semantics=("parallel", "parallel")),
    )(x_bcn, x_bcn, mqk, colb, wv, bv_col, gamma)


# -------------------- ConvTranspose2d 4-phase XLA glue -----------------------

def _phase_patches(x_cbhw):
    """x: (Cin, B, H, W) channel-first -> (4, 4*Cin, B*H*W), one matrix per parity."""
    C, B, H, W = x_cbhw.shape
    xp = jnp.pad(x_cbhw, ((0, 0), (0, 0), (1, 1), (1, 1)))
    n = B * H * W
    phases = []
    for py in range(2):
        for px in range(2):
            sl = [xp[:, :, py + dy:py + dy + H, px + dx:px + dx + W].reshape(C, n)
                  for dy in range(2) for dx in range(2)]
            phases.append(jnp.concatenate(sl, axis=0))               # (4*Cin, n)
    return jnp.stack(phases, axis=0), (B, H, W)


def _phase_weights(wt):
    """PyTorch ConvTranspose2d weight (Cin, Cout, 4, 4) -> (4, Cout, 4*Cin)."""
    ws = []
    for py in range(2):
        for px in range(2):
            taps = [wt[:, :, 3 - py - 2 * dy, 3 - px - 2 * dx]
                    for dy in range(2) for dx in range(2)]           # each (Cin, Cout)
            ws.append(jnp.concatenate(taps, axis=0).T)               # (Cout, 4*Cin)
    return jnp.stack(ws, axis=0)


def _depth_to_space(conv_out, B, H, W, batch_major):
    """(4, Cout, B*H*W) phase layout -> (Cout,B,2H,2W) or (B,Cout,2H,2W)."""
    cout = conv_out.shape[1]
    y = conv_out.reshape(2, 2, cout, B, H, W)                        # (py, px, c, b, m, n)
    if batch_major:
        return y.transpose(3, 2, 4, 0, 5, 1).reshape(B, cout, 2 * H, 2 * W)
    return y.transpose(2, 3, 4, 0, 5, 1).reshape(cout, B, 2 * H, 2 * W)


# ------------------------------- Decoder --------------------------------------

def _convt_bn_relu_layer(y_cbhw, w4, bn_w, bn_b):
    patches, (B, H, W) = _phase_patches(y_cbhw)
    conv, psum, psumsq = pallas_convt_phases(patches, w4)
    ntot = 4.0 * patches.shape[2]                                    # B * 2H * 2W pixels
    mean = jnp.sum(psum, axis=(0, 1)) / ntot                         # (Cout, 1)
    var = jnp.sum(psumsq, axis=(0, 1)) / ntot - mean * mean          # biased, train-mode BN
    a = bn_w.reshape(-1, 1) * lax.rsqrt(var + 1e-5)
    b = bn_b.reshape(-1, 1) - mean * a
    act = pallas_bn_relu_apply(conv, a, b)
    return _depth_to_space(act, B, H, W, batch_major=False)


def decoder_forward(x, params):
    """Decoder(isize, nz, nc, ngf, self_attention=True).forward — input (B, cngf, 4, 4)."""
    y = jnp.transpose(x, (1, 0, 2, 3))                               # channel-first pipeline
    for w4, bn_w, bn_b in zip(params['pyramid_w4'],
                              params['pyramid_bn_w'],
                              params['pyramid_bn_b']):
        y = _convt_bn_relu_layer(y, w4, bn_w, bn_b)
    patches, (B, H, W) = _phase_patches(y)
    conv, _, _ = pallas_convt_phases(patches, params['w_final4'])    # final conv, no BN
    yf = _depth_to_space(conv, B, H, W, batch_major=True)            # (B, nc, isize, isize)
    Bn, C, Ho, Wo = yf.shape
    att = pallas_self_attn_softmax2d(yf.reshape(Bn, C, Ho * Wo),
                                     params['mqk'], params['colb'],
                                     params['wv'], params['bv_col'],
                                     params['gamma'])
    return att.reshape(Bn, C, Ho, Wo)


def init_decoder_params(key, isize=16, nz=8, nc=16, ngf=8):
    assert isize % 16 == 0, 'isize has to be a multiple of 16'
    assert nc % 8 == 0, 'Self_Attn requires nc // 8 >= 1'
    cngf, tisize = ngf // 2, 4
    while tisize != isize:
        cngf, tisize = cngf * 2, tisize * 2
    n_pyr, csize = 0, 4
    while csize < isize // 2:
        n_pyr += 1
        csize *= 2
    keys = iter(jax.random.split(key, 3 * n_pyr + 8))
    hp = lax.Precision.HIGHEST
    pyr_w, pyr_bn_w, pyr_bn_b, pyr_w4 = [], [], [], []
    c = cngf
    for _ in range(n_pyr):
        w = 0.05 * jax.random.normal(next(keys), (c, c // 2, 4, 4), jnp.float32)
        bn_w = 1.0 + 0.1 * jax.random.normal(next(keys), (c // 2,), jnp.float32)
        bn_b = 0.1 * jax.random.normal(next(keys), (c // 2,), jnp.float32)
        pyr_w.append(w)
        pyr_bn_w.append(bn_w)
        pyr_bn_b.append(bn_b)
        pyr_w4.append(_phase_weights(w))                             # hoisted weight prep
        c //= 2
    w_final = 0.05 * jax.random.normal(next(keys), (c, nc, 4, 4), jnp.float32)
    cq = nc // 8
    wq = 0.2 * jax.random.normal(next(keys), (cq, nc), jnp.float32)
    bq = 0.05 * jax.random.normal(next(keys), (cq,), jnp.float32)
    wk = 0.2 * jax.random.normal(next(keys), (cq, nc), jnp.float32)
    bk = 0.05 * jax.random.normal(next(keys), (cq,), jnp.float32)
    wv = 0.2 * jax.random.normal(next(keys), (nc, nc), jnp.float32)
    bv = 0.05 * jax.random.normal(next(keys), (nc,), jnp.float32)
    # TODO(synk): PyTorch inits gamma = 0 (attention becomes a numeric no-op);
    # use 0.5 here so the attention path is actually exercised by the test.
    gamma = jnp.array([0.5], jnp.float32)
    return dict(
        pyramid_w=pyr_w, pyramid_bn_w=pyr_bn_w, pyramid_bn_b=pyr_bn_b,
        pyramid_w4=pyr_w4,
        w_final=w_final, w_final4=_phase_weights(w_final),
        wq=wq, bq=bq, wk=wk, bk=bk, wv=wv, bv=bv, gamma=gamma,
        # attention weights pre-folded for the kernel (hoisted out of forward):
        mqk=jnp.matmul(wk.T, wq, precision=hp),
        colb=jnp.matmul(wk.T, bq.reshape(cq, 1), precision=hp),
        bv_col=bv.reshape(nc, 1),
    )


# ------------------------------ pure-JAX reference ----------------------------

def ref_forward(x, params):
    hp = lax.Precision.HIGHEST

    def ref_convT(x, wt):
        wc = jnp.flip(wt, axis=(2, 3)).transpose(1, 0, 2, 3)         # OIHW, flipped
        return lax.conv_general_dilated(
            x, wc, window_strides=(1, 1), padding=((2, 2), (2, 2)),
            lhs_dilation=(2, 2), dimension_numbers=('NCHW', 'OIHW', 'NCHW'),
            precision=hp)

    y = x
    for w, bn_w, bn_b in zip(params['pyramid_w'], params['pyramid_bn_w'],
                             params['pyramid_bn_b']):
        y = ref_convT(y, w)
        mean = jnp.mean(y, axis=(0, 2, 3), keepdims=True)
        var = jnp.mean((y - mean) ** 2, axis=(0, 2, 3), keepdims=True)
        y = (y - mean) * lax.rsqrt(var + 1e-5)
        y = y * bn_w.reshape(1, -1, 1, 1) + bn_b.reshape(1, -1, 1, 1)
        y = jnp.maximum(y, 0.0)
    y = ref_convT(y, params['w_final'])
    B, C, H, W = y.shape
    xf = y.reshape(B, C, H * W)
    q = jnp.einsum('oc,bcn->bon', params['wq'], xf, precision=hp) + params['bq'].reshape(1, -1, 1)
    k = jnp.einsum('oc,bcn->bon', params['wk'], xf, precision=hp) + params['bk'].reshape(1, -1, 1)
    v = jnp.einsum('oc,bcn->bon', params['wv'], xf, precision=hp) + params['bv'].reshape(1, -1, 1)
    energy = jnp.einsum('bci,bcj->bij', q, k, precision=hp)
    attn = jax.nn.softmax(energy, axis=-1)
    out = jnp.einsum('bcj,bij->bci', v, attn, precision=hp).reshape(B, C, H, W)
    y = params['gamma'][0] * out + y
    return jax.nn.softmax(y, axis=1)                                 # Softmax2d


if __name__ == "__main__":
    key = jax.random.PRNGKey(0)
    k_in, k_p = jax.random.split(key)

    isize, nz, nc, ngf = 16, 8, 16, 8
    params = init_decoder_params(k_p, isize=isize, nz=nz, nc=nc, ngf=ngf)
    cngf = params['pyramid_w'][0].shape[0]            # channels expected at 4x4 input
    x = 0.5 * jax.random.normal(k_in, (2, cngf, 4, 4), jnp.float32)

    out = jax.jit(decoder_forward)(x, params)
    out = jax.block_until_ready(out)

    ref = ref_forward(x, params)
    assert out.shape == (2, nc, isize, isize), out.shape
    err = float(jnp.max(jnp.abs(out - ref)))
    assert err < 2e-3, f"max abs err vs reference: {err}"
    print("KERNEL_OK")
</pallas_src>

<mosaic_0001>
module attributes {stable_mosaic.version = 11 : i64} {
  func.func @_convt_stats_kernel(%arg0: i32, %arg1: i32, %arg2: memref<1x8x64xf32, #tpu.memory_space<vmem>>, %arg3: memref<1x64x32xf32, #tpu.memory_space<vmem>>, %arg4: memref<1x8x32xf32, #tpu.memory_space<vmem>>, %arg5: memref<1x1x8x1xf32, #tpu.memory_space<vmem>>, %arg6: memref<1x1x8x1xf32, #tpu.memory_space<vmem>>) attributes {dimension_semantics = [#tpu.dimension_semantics<parallel>, #tpu.dimension_semantics<parallel>], iteration_bounds = array<i64: 4, 1>, scalar_prefetch = 0 : i64, scratch_operands = 0 : i64, tpu.core_type = #tpu.core_type<tc>, window_params = [{transform_indices = @transform_0, window_bounds = array<i64: 1, 8, 64>}, {transform_indices = @transform_1, window_bounds = array<i64: 1, 64, 32>}, {transform_indices = @transform_2, window_bounds = array<i64: 1, 8, 32>}, {transform_indices = @transform_3, window_bounds = array<i64: 1, 1, 8, 1>}, {transform_indices = @transform_4, window_bounds = array<i64: 1, 1, 8, 1>}]} {
    %c0 = arith.constant 0 : index
    %c0_0 = arith.constant 0 : index
    %c0_1 = arith.constant 0 : index
    %0 = vector.load %arg2[%c0, %c0_0, %c0_1] : memref<1x8x64xf32, #tpu.memory_space<vmem>>, vector<1x8x64xf32>
    %1 = vector.shape_cast %0 : vector<1x8x64xf32> to vector<8x64xf32>
    %c0_2 = arith.constant 0 : index
    %c0_3 = arith.constant 0 : index
    %c0_4 = arith.constant 0 : index
    %2 = vector.load %arg3[%c0_2, %c0_3, %c0_4] : memref<1x64x32xf32, #tpu.memory_space<vmem>>, vector<1x64x32xf32>
    %3 = vector.shape_cast %2 : vector<1x64x32xf32> to vector<64x32xf32>
    %cst = arith.constant dense<0.000000e+00> : vector<8x32xf32>
    %4 = tpu.matmul %1, %3, %cst {dimension_numbers = #tpu.dot_dimension_numbers<[1], [0], [0], [1], [0, 0, 1, 1], [], []>} : vector<8x64xf32>, vector<64x32xf32>, vector<8x32xf32> -> vector<8x32xf32>
    %c0_5 = arith.constant 0 : index
    %c0_6 = arith.constant 0 : index
    %c0_7 = arith.constant 0 : index
    %5 = vector.load %arg4[%c0_5, %c0_6, %c0_7] : memref<1x8x32xf32, #tpu.memory_space<vmem>>, vector<1x8x32xf32>
    %6 = vector.shape_cast %5 : vector<1x8x32xf32> to vector<8x32xf32>
    %7 = vector.shape_cast %4 : vector<8x32xf32> to vector<1x8x32xf32>
    tpu.vector_store %arg4[%c0_5, %c0_6, %c0_7], %7 {strides = array<i32>} : memref<1x8x32xf32, #tpu.memory_space<vmem>>, vector<1x8x32xf32>,
    %cst_8 = arith.constant dense<0.000000e+00> : vector<8xf32>
    %8 = vector.multi_reduction <add>, %4, %cst_8 [1] : vector<8x32xf32> to vector<8xf32>
    %9 = vector.shape_cast %8 : vector<8xf32> to vector<8x1xf32>
    %c0_9 = arith.constant 0 : index
    %c0_10 = arith.constant 0 : index
    %c0_11 = arith.constant 0 : index
    %c0_12 = arith.constant 0 : index
    %10 = vector.load %arg5[%c0_9, %c0_10, %c0_11, %c0_12] : memref<1x1x8x1xf32, #tpu.memory_space<vmem>>, vector<1x1x8x1xf32>
    %11 = vector.shape_cast %10 : vector<1x1x8x1xf32> to vector<8x1xf32>
    %12 = vector.shape_cast %9 : vector<8x1xf32> to vector<1x1x8x1xf32>
    tpu.vector_store %arg5[%c0_9, %c0_10, %c0_11, %c0_12], %12 {strides = array<i32>} : memref<1x1x8x1xf32, #tpu.memory_space<vmem>>, vector<1x1x8x1xf32>,
    %13 = arith.mulf %4, %4 : vector<8x32xf32>
    %cst_13 = arith.constant dense<0.000000e+00> : vector<8xf32>
    %14 = vector.multi_reduction <add>, %13, %cst_13 [1] : vector<8x32xf32> to vector<8xf32>
    %15 = vector.shape_cast %14 : vector<8xf32> to vector<8x1xf32>
    %c0_14 = arith.constant 0 : index
    %c0_15 = arith.constant 0 : index
    %c0_16 = arith.constant 0 : index
    %c0_17 = arith.constant 0 : index
    %16 = vector.load %arg6[%c0_14, %c0_15, %c0_16, %c0_17] : memref<1x1x8x1xf32, #tpu.memory_space<vmem>>, vector<1x1x8x1xf32>
    %17 = vector.shape_cast %16 : vector<1x1x8x1xf32> to vector<8x1xf32>
    %18 = vector.shape_cast %15 : vector<8x1xf32> to vector<1x1x8x1xf32>
    tpu.vector_store %arg6[%c0_14, %c0_15, %c0_16, %c0_17], %18 {strides = array<i32>} : memref<1x1x8x1xf32, #tpu.memory_space<vmem>>, vector<1x1x8x1xf32>,
    return
  }
  func.func @transform_0(%arg0: i32, %arg1: i32) -> (i32, i32, i32) {
    %c0_i32 = arith.constant 0 : i32
    %c0_i32_0 = arith.constant 0 : i32
    %c0_i32_1 = arith.constant 0 : i32
    return %arg0, %c0_i32, %c0_i32_0 : i32, i32, i32
  }
  func.func @transform_1(%arg0: i32, %arg1: i32) -> (i32, i32, i32) {
    %c0_i32 = arith.constant 0 : i32
    %c0_i32_0 = arith.constant 0 : i32
    return %arg0, %c0_i32, %arg1 : i32, i32, i32
  }
  func.func @transform_2(%arg0: i32, %arg1: i32) -> (i32, i32, i32) {
    %c0_i32 = arith.constant 0 : i32
    %c0_i32_0 = arith.constant 0 : i32
    return %arg0, %c0_i32, %arg1 : i32, i32, i32
  }
  func.func @transform_3(%arg0: i32, %arg1: i32) -> (i32, i32, i32, i32) {
    %c0_i32 = arith.constant 0 : i32
    %c0_i32_0 = arith.constant 0 : i32
    %c0_i32_1 = arith.constant 0 : i32
    return %arg0, %arg1, %c0_i32, %c0_i32_0 : i32, i32, i32, i32
  }
  func.func @transform_4(%arg0: i32, %arg1: i32) -> (i32, i32, i32, i32) {
    %c0_i32 = arith.constant 0 : i32
    %c0_i32_0 = arith.constant 0 : i32
    %c0_i32_1 = arith.constant 0 : i32
    return %arg0, %arg1, %c0_i32, %c0_i32_0 : i32, i32, i32, i32
  }
}

module attributes {stable_mosaic.version = 11 : i64} {
  func.func @_bn_relu_kernel(%arg0: i32, %arg1: i32, %arg2: memref<1x8x32xf32, #tpu.memory_space<vmem>>, %arg3: memref<8x1xf32, #tpu.memory_space<vmem>>, %arg4: memref<8x1xf32, #tpu.memory_space<vmem>>, %arg5: memref<1x8x32xf32, #tpu.memory_space<vmem>>) attributes {dimension_semantics = [#tpu.dimension_semantics<parallel>, #tpu.dimension_semantics<parallel>], iteration_bounds = array<i64: 4, 1>, scalar_prefetch = 0 : i64, scratch_operands = 0 : i64, tpu.core_type = #tpu.core_type<tc>, window_params = [{transform_indices = @transform_0, window_bounds = array<i64: 1, 8, 32>}, {pipeline_mode = #tpu.pipeline_mode<synchronous>, transform_indices = @transform_1, window_bounds = array<i64: 8, 1>}, {pipeline_mode = #tpu.pipeline_mode<synchronous>, transform_indices = @transform_2, window_bounds = array<i64: 8, 1>}, {transform_indices = @transform_3, window_bounds = array<i64: 1, 8, 32>}]} {
    %c0 = arith.constant 0 : index
    %c0_0 = arith.constant 0 : index
    %c0_1 = arith.constant 0 : index
    %0 = vector.load %arg2[%c0, %c0_0, %c0_1] : memref<1x8x32xf32, #tpu.memory_space<vmem>>, vector<1x8x32xf32>
    %1 = vector.shape_cast %0 : vector<1x8x32xf32> to vector<8x32xf32>
    %c0_2 = arith.constant 0 : index
    %c0_3 = arith.constant 0 : index
    %2 = vector.load %arg3[%c0_2, %c0_3] : memref<8x1xf32, #tpu.memory_space<vmem>>, vector<8x1xf32>
    %3 = vector.broadcast %2 : vector<8x1xf32> to vector<8x32xf32>
    %4 = arith.mulf %1, %3 : vector<8x32xf32>
    %c0_4 = arith.constant 0 : index
    %c0_5 = arith.constant 0 : index
    %5 = vector.load %arg4[%c0_4, %c0_5] : memref<8x1xf32, #tpu.memory_space<vmem>>, vector<8x1xf32>
    %6 = vector.broadcast %5 : vector<8x1xf32> to vector<8x32xf32>
    %7 = arith.addf %4, %6 : vector<8x32xf32>
    %cst = arith.constant 0.000000e+00 : f32
    %8 = vector.broadcast %cst : f32 to vector<8x32xf32>
    %9 = arith.maximumf %7, %8 : vector<8x32xf32>
    %c0_6 = arith.constant 0 : index
    %c0_7 = arith.constant 0 : index
    %c0_8 = arith.constant 0 : index
    %10 = vector.load %arg5[%c0_6, %c0_7, %c0_8] : memref<1x8x32xf32, #tpu.memory_space<vmem>>, vector<1x8x32xf32>
    %11 = vector.shape_cast %10 : vector<1x8x32xf32> to vector<8x32xf32>
    %12 = vector.shape_cast %9 : vector<8x32xf32> to vector<1x8x32xf32>
    tpu.vector_store %arg5[%c0_6, %c0_7, %c0_8], %12 {strides = array<i32>} : memref<1x8x32xf32, #tpu.memory_space<vmem>>, vector<1x8x32xf32>,
    return
  }
  func.func @transform_0(%arg0: i32, %arg1: i32) -> (i32, i32, i32) {
    %c0_i32 = arith.constant 0 : i32
    %c0_i32_0 = arith.constant 0 : i32
    return %arg0, %c0_i32, %arg1 : i32, i32, i32
  }
  func.func @transform_1(%arg0: i32, %arg1: i32) -> (i32, i32) {
    %c0_i32 = arith.constant 0 : i32
    %c0_i32_0 = arith.constant 0 : i32
    %c0_i32_1 = arith.constant 0 : i32
    return %c0_i32, %c0_i32_0 : i32, i32
  }
  func.func @transform_2(%arg0: i32, %arg1: i32) -> (i32, i32) {
    %c0_i32 = arith.constant 0 : i32
    %c0_i32_0 = arith.constant 0 : i32
    %c0_i32_1 = arith.constant 0 : i32
    return %c0_i32, %c0_i32_0 : i32, i32
  }
  func.func @transform_3(%arg0: i32, %arg1: i32) -> (i32, i32, i32) {
    %c0_i32 = arith.constant 0 : i32
    %c0_i32_0 = arith.constant 0 : i32
    return %arg0, %c0_i32, %arg1 : i32, i32, i32
  }
}

module attributes {stable_mosaic.version = 11 : i64} {
  func.func @_convt_stats_kernel(%arg0: i32, %arg1: i32, %arg2: memref<1x16x32xf32, #tpu.memory_space<vmem>>, %arg3: memref<1x32x128xf32, #tpu.memory_space<vmem>>, %arg4: memref<1x16x128xf32, #tpu.memory_space<vmem>>, %arg5: memref<1x1x16x1xf32, #tpu.memory_space<vmem>>, %arg6: memref<1x1x16x1xf32, #tpu.memory_space<vmem>>) attributes {dimension_semantics = [#tpu.dimension_semantics<parallel>, #tpu.dimension_semantics<parallel>], iteration_bounds = array<i64: 4, 1>, scalar_prefetch = 0 : i64, scratch_operands = 0 : i64, tpu.core_type = #tpu.core_type<tc>, window_params = [{transform_indices = @transform_0, window_bounds = array<i64: 1, 16, 32>}, {transform_indices = @transform_1, window_bounds = array<i64: 1, 32, 128>}, {transform_indices = @transform_2, window_bounds = array<i64: 1, 16, 128>}, {transform_indices = @transform_3, window_bounds = array<i64: 1, 1, 16, 1>}, {transform_indices = @transform_4, window_bounds = array<i64: 1, 1, 16, 1>}]} {
    %c0 = arith.constant 0 : index
    %c0_0 = arith.constant 0 : index
    %c0_1 = arith.constant 0 : index
    %0 = vector.load %arg2[%c0, %c0_0, %c0_1] : memref<1x16x32xf32, #tpu.memory_space<vmem>>, vector<1x16x32xf32>
    %1 = vector.shape_cast %0 : vector<1x16x32xf32> to vector<16x32xf32>
    %c0_2 = arith.constant 0 : index
    %c0_3 = arith.constant 0 : index
    %c0_4 = arith.constant 0 : index
    %2 = vector.load %arg3[%c0_2, %c0_3, %c0_4] : memref<1x32x128xf32, #tpu.memory_space<vmem>>, vector<1x32x128xf32>
    %3 = vector.shape_cast %2 : vector<1x32x128xf32> to vector<32x128xf32>
    %cst = arith.constant dense<0.000000e+00> : vector<16x128xf32>
    %4 = tpu.matmul %1, %3, %cst {dimension_numbers = #tpu.dot_dimension_numbers<[1], [0], [0], [1], [0, 0, 1, 1], [], []>} : vector<16x32xf32>, vector<32x128xf32>, vector<16x128xf32> -> vector<16x128xf32>
    %c0_5 = arith.constant 0 : index
    %c0_6 = arith.constant 0 : index
    %c0_7 = arith.constant 0 : index
    %5 = vector.load %arg4[%c0_5, %c0_6, %c0_7] : memref<1x16x128xf32, #tpu.memory_space<vmem>>, vector<1x16x128xf32>
    %6 = vector.shape_cast %5 : vector<1x16x128xf32> to vector<16x128xf32>
    %7 = vector.shape_cast %4 : vector<16x128xf32> to vector<1x16x128xf32>
    tpu.vector_store %arg4[%c0_5, %c0_6, %c0_7], %7 {strides = array<i32>} : memref<1x16x128xf32, #tpu.memory_space<vmem>>, vector<1x16x128xf32>,
    %cst_8 = arith.constant dense<0.000000e+00> : vector<16xf32>
    %8 = vector.multi_reduction <add>, %4, %cst_8 [1] : vector<16x128xf32> to vector<16xf32>
    %9 = vector.shape_cast %8 : vector<16xf32> to vector<16x1xf32>
    %c0_9 = arith.constant 0 : index
    %c0_10 = arith.constant 0 : index
    %c0_11 = arith.constant 0 : index
    %c0_12 = arith.constant 0 : index
    %10 = vector.load %arg5[%c0_9, %c0_10, %c0_11, %c0_12] : memref<1x1x16x1xf32, #tpu.memory_space<vmem>>, vector<1x1x16x1xf32>
    %11 = vector.shape_cast %10 : vector<1x1x16x1xf32> to vector<16x1xf32>
    %12 = vector.shape_cast %9 : vector<16x1xf32> to vector<1x1x16x1xf32>
    tpu.vector_store %arg5[%c0_9, %c0_10, %c0_11, %c0_12], %12 {strides = array<i32>} : memref<1x1x16x1xf32, #tpu.memory_space<vmem>>, vector<1x1x16x1xf32>,
    %13 = arith.mulf %4, %4 : vector<16x128xf32>
    %cst_13 = arith.constant dense<0.000000e+00> : vector<16xf32>
    %14 = vector.multi_reduction <add>, %13, %cst_13 [1] : vector<16x128xf32> to vector<16xf32>
    %15 = vector.shape_cast %14 : vector<16xf32> to vector<16x1xf32>
    %c0_14 = arith.constant 0 : index
    %c0_15 = arith.constant 0 : index
    %c0_16 = arith.constant 0 : index
    %c0_17 = arith.constant 0 : index
    %16 = vector.load %arg6[%c0_14, %c0_15, %c0_16, %c0_17] : memref<1x1x16x1xf32, #tpu.memory_space<vmem>>, vector<1x1x16x1xf32>
    %17 = vector.shape_cast %16 : vector<1x1x16x1xf32> to vector<16x1xf32>
    %18 = vector.shape_cast %15 : vector<16x1xf32> to vector<1x1x16x1xf32>
    tpu.vector_store %arg6[%c0_14, %c0_15, %c0_16, %c0_17], %18 {strides = array<i32>} : memref<1x1x16x1xf32, #tpu.memory_space<vmem>>, vector<1x1x16x1xf32>,
    return
  }
  func.func @transform_0(%arg0: i32, %arg1: i32) -> (i32, i32, i32) {
    %c0_i32 = arith.constant 0 : i32
    %c0_i32_0 = arith.constant 0 : i32
    %c0_i32_1 = arith.constant 0 : i32
    return %arg0, %c0_i32, %c0_i32_0 : i32, i32, i32
  }
  func.func @transform_1(%arg0: i32, %arg1: i32) -> (i32, i32, i32) {
    %c0_i32 = arith.constant 0 : i32
    %c0_i32_0 = arith.constant 0 : i32
    return %arg0, %c0_i32, %arg1 : i32, i32, i32
  }
  func.func @transform_2(%arg0: i32, %arg1: i32) -> (i32, i32, i32) {
    %c0_i32 = arith.constant 0 : i32
    %c0_i32_0 = arith.constant 0 : i32
    return %arg0, %c0_i32, %arg1 : i32, i32, i32
  }
  func.func @transform_3(%arg0: i32, %arg1: i32) -> (i32, i32, i32, i32) {
    %c0_i32 = arith.constant 0 : i32
    %c0_i32_0 = arith.constant 0 : i32
    %c0_i32_1 = arith.constant 0 : i32
    return %arg0, %arg1, %c0_i32, %c0_i32_0 : i32, i32, i32, i32
  }
  func.func @transform_4(%arg0: i32, %arg1: i32) -> (i32, i32, i32, i32) {
    %c0_i32 = arith.constant 0 : i32
    %c0_i32_0 = arith.constant 0 : i32
    %c0_i32_1 = arith.constant 0 : i32
    return %arg0, %arg1, %c0_i32, %c0_i32_0 : i32, i32, i32, i32
  }
}

module attributes {stable_mosaic.version = 11 : i64} {
  func.func @_attn_softmax2d_kernel(%arg0: i32, %arg1: i32, %arg2: memref<1x16x256xf32, #tpu.memory_space<vmem>>, %arg3: memref<1x16x256xf32, #tpu.memory_space<vmem>>, %arg4: memref<16x16xf32, #tpu.memory_space<vmem>>, %arg5: memref<16x1xf32, #tpu.memory_space<vmem>>, %arg6: memref<16x16xf32, #tpu.memory_space<vmem>>, %arg7: memref<16x1xf32, #tpu.memory_space<vmem>>, %arg8: memref<1xf32, #tpu.memory_space<smem>>, %arg9: memref<1x16x256xf32, #tpu.memory_space<vmem>>) attributes {dimension_semantics = [#tpu.dimension_semantics<parallel>, #tpu.dimension_semantics<parallel>], iteration_bounds = array<i64: 2, 1>, scalar_prefetch = 0 : i64, scratch_operands = 0 : i64, tpu.core_type = #tpu.core_type<tc>, window_params = [{transform_indices = @transform_0, window_bounds = array<i64: 1, 16, 256>}, {transform_indices = @transform_1, window_bounds = array<i64: 1, 16, 256>}, {pipeline_mode = #tpu.pipeline_mode<synchronous>, transform_indices = @transform_2, window_bounds = array<i64: 16, 16>}, {pipeline_mode = #tpu.pipeline_mode<synchronous>, transform_indices = @transform_3, window_bounds = array<i64: 16, 1>}, {pipeline_mode = #tpu.pipeline_mode<synchronous>, transform_indices = @transform_4, window_bounds = array<i64: 16, 16>}, {pipeline_mode = #tpu.pipeline_mode<synchronous>, transform_indices = @transform_5, window_bounds = array<i64: 16, 1>}, {transform_indices = @transform_6, window_bounds = array<i64: 1>}, {transform_indices = @transform_7, window_bounds = array<i64: 1, 16, 256>}]} {
    %c0 = arith.constant 0 : index
    %c0_0 = arith.constant 0 : index
    %c0_1 = arith.constant 0 : index
    %0 = vector.load %arg2[%c0, %c0_0, %c0_1] : memref<1x16x256xf32, #tpu.memory_space<vmem>>, vector<1x16x256xf32>
    %1 = vector.shape_cast %0 : vector<1x16x256xf32> to vector<16x256xf32>
    %c0_2 = arith.constant 0 : index
    %c0_3 = arith.constant 0 : index
    %2 = vector.load %arg4[%c0_2, %c0_3] : memref<16x16xf32, #tpu.memory_space<vmem>>, vector<16x16xf32>
    %cst = arith.constant dense<0.000000e+00> : vector<16x256xf32>
    %3 = tpu.matmul %2, %1, %cst {dimension_numbers = #tpu.dot_dimension_numbers<[1], [0], [0], [1], [0, 0, 1, 1], [], []>} : vector<16x16xf32>, vector<16x256xf32>, vector<16x256xf32> -> vector<16x256xf32>
    %c0_4 = arith.constant 0 : index
    %c0_5 = arith.constant 0 : index
    %4 = vector.load %arg5[%c0_4, %c0_5] : memref<16x1xf32, #tpu.memory_space<vmem>>, vector<16x1xf32>
    %5 = vector.broadcast %4 : vector<16x1xf32> to vector<16x256xf32>
    %6 = arith.addf %3, %5 : vector<16x256xf32>
    %cst_6 = arith.constant 0xFF800000 : f32
    %7 = vector.broadcast %cst_6 : f32 to vector<1x256xf32>
    %cst_7 = arith.constant 0.000000e+00 : f32
    %8 = vector.broadcast %cst_7 : f32 to vector<1x256xf32>
    %cst_8 = arith.constant 0.000000e+00 : f32
    %9 = vector.broadcast %cst_8 : f32 to vector<16x256xf32>
    %c0_9 = arith.constant 0 : index
    %c0_10 = arith.constant 0 : index
    %c0_11 = arith.constant 0 : index
    %10 = vector.load %arg3[%c0_9, %c0_10, %c0_11] : memref<1x16x256xf32, #tpu.memory_space<vmem>>, vector<1x16x128xf32>
    %11 = vector.shape_cast %10 : vector<1x16x128xf32> to vector<16x128xf32>
    %cst_12 = arith.constant dense<0.000000e+00> : vector<128x256xf32>
    %12 = tpu.matmul %11, %6, %cst_12 {dimension_numbers = #tpu.dot_dimension_numbers<[0], [0], [1], [1], [0, 1, 1, 1], [], []>} : vector<16x128xf32>, vector<16x256xf32>, vector<128x256xf32> -> vector<128x256xf32>
    %c0_13 = arith.constant 0 : index
    %c0_14 = arith.constant 0 : index
    %13 = vector.load %arg6[%c0_13, %c0_14] : memref<16x16xf32, #tpu.memory_space<vmem>>, vector<16x16xf32>
    %cst_15 = arith.constant dense<0.000000e+00> : vector<16x128xf32>
    %14 = tpu.matmul %13, %11, %cst_15 {dimension_numbers = #tpu.dot_dimension_numbers<[1], [0], [0], [1], [0, 0, 1, 1], [], []>} : vector<16x16xf32>, vector<16x128xf32>, vector<16x128xf32> -> vector<16x128xf32>
    %c0_16 = arith.constant 0 : index
    %c0_17 = arith.constant 0 : index
    %15 = vector.load %arg7[%c0_16, %c0_17] : memref<16x1xf32, #tpu.memory_space<vmem>>, vector<16x1xf32>
    %16 = vector.broadcast %15 : vector<16x1xf32> to vector<16x128xf32>
    %17 = arith.addf %14, %16 : vector<16x128xf32>
    %cst_18 = arith.constant dense<0xFF800000> : vector<256xf32>
    %18 = vector.multi_reduction <maximumf>, %12, %cst_18 [0] : vector<128x256xf32> to vector<256xf32>
    %19 = vector.shape_cast %18 : vector<256xf32> to vector<1x256xf32>
    %20 = arith.maximumf %7, %19 : vector<1x256xf32>
    %21 = arith.subf %7, %20 : vector<1x256xf32>
    %22 = math.exp %21 : vector<1x256xf32>
    %23 = vector.broadcast %20 : vector<1x256xf32> to vector<128x256xf32>
    %24 = arith.subf %12, %23 : vector<128x256xf32>
    %25 = math.exp %24 : vector<128x256xf32>
    %26 = arith.mulf %22, %8 : vector<1x256xf32>
    %cst_19 = arith.constant dense<0.000000e+00> : vector<256xf32>
    %27 = vector.multi_reduction <add>, %25, %cst_19 [0] : vector<128x256xf32> to vector<256xf32>
    %28 = vector.shape_cast %27 : vector<256xf32> to vector<1x256xf32>
    %29 = arith.addf %26, %28 : vector<1x256xf32>
    %30 = vector.broadcast %22 : vector<1x256xf32> to vector<16x256xf32>
    %31 = arith.mulf %30, %9 : vector<16x256xf32>
    %cst_20 = arith.constant dense<0.000000e+00> : vector<16x256xf32>
    %32 = tpu.matmul %17, %25, %cst_20 {dimension_numbers = #tpu.dot_dimension_numbers<[1], [0], [0], [1], [0, 0, 1, 1], [], []>} : vector<16x128xf32>, vector<128x256xf32>, vector<16x256xf32> -> vector<16x256xf32>
    %33 = arith.addf %31, %32 : vector<16x256xf32>
    %c0_21 = arith.constant 0 : index
    %c0_22 = arith.constant 0 : index
    %c128 = arith.constant 128 : index
    %34 = vector.load %arg3[%c0_21, %c0_22, %c128] : memref<1x16x256xf32, #tpu.memory_space<vmem>>, vector<1x16x128xf32>
    %35 = vector.shape_cast %34 : vector<1x16x128xf32> to vector<16x128xf32>
    %cst_23 = arith.constant dense<0.000000e+00> : vector<128x256xf32>
    %36 = tpu.matmul %35, %6, %cst_23 {dimension_numbers = #tpu.dot_dimension_numbers<[0], [0], [1], [1], [0, 1, 1, 1], [], []>} : vector<16x128xf32>, vector<16x256xf32>, vector<128x256xf32> -> vector<128x256xf32>
    %c0_24 = arith.constant 0 : index
    %c0_25 = arith.constant 0 : index
    %37 = vector.load %arg6[%c0_24, %c0_25] : memref<16x16xf32, #tpu.memory_space<vmem>>, vector<16x16xf32>
    %cst_26 = arith.constant dense<0.000000e+00> : vector<16x128xf32>
    %38 = tpu.matmul %37, %35, %cst_26 {dimension_numbers = #tpu.dot_dimension_numbers<[1], [0], [0], [1], [0, 0, 1, 1], [], []>} : vector<16x16xf32>, vector<16x128xf32>, vector<16x128xf32> -> vector<16x128xf32>
    %c0_27 = arith.constant 0 : index
    %c0_28 = arith.constant 0 : index
    %39 = vector.load %arg7[%c0_27, %c0_28] : memref<16x1xf32, #tpu.memory_space<vmem>>, vector<16x1xf32>
    %40 = vector.broadcast %39 : vector<16x1xf32> to vector<16x128xf32>
    %41 = arith.addf %38, %40 : vector<16x128xf32>
    %cst_29 = arith.constant dense<0xFF800000> : vector<256xf32>
    %42 = vector.multi_reduction <maximumf>, %36, %cst_29 [0] : vector<128x256xf32> to vector<256xf32>
    %43 = vector.shape_cast %42 : vector<256xf32> to vector<1x256xf32>
    %44 = arith.maximumf %20, %43 : vector<1x256xf32>
    %45 = arith.subf %20, %44 : vector<1x256xf32>
    %46 = math.exp %45 : vector<1x256xf32>
    %47 = vector.broadcast %44 : vector<1x256xf32> to vector<128x256xf32>
    %48 = arith.subf %36, %47 : vector<128x256xf32>
    %49 = math.exp %48 : vector<128x256xf32>
    %50 = arith.mulf %46, %29 : vector<1x256xf32>
    %cst_30 = arith.constant dense<0.000000e+00> : vector<256xf32>
    %51 = vector.multi_reduction <add>, %49, %cst_30 [0] : vector<128x256xf32> to vector<256xf32>
    %52 = vector.shape_cast %51 : vector<256xf32> to vector<1x256xf32>
    %53 = arith.addf %50, %52 : vector<1x256xf32>
    %54 = vector.broadcast %46 : vector<1x256xf32> to vector<16x256xf32>
    %55 = arith.mulf %54, %33 : vector<16x256xf32>
    %cst_31 = arith.constant dense<0.000000e+00> : vector<16x256xf32>
    %56 = tpu.matmul %41, %49, %cst_31 {dimension_numbers = #tpu.dot_dimension_numbers<[1], [0], [0], [1], [0, 0, 1, 1], [], []>} : vector<16x128xf32>, vector<128x256xf32>, vector<16x256xf32> -> vector<16x256xf32>
    %57 = arith.addf %55, %56 : vector<16x256xf32>
    %c0_32 = arith.constant 0 : index
    %58 = memref.load %arg8[%c0_32] : memref<1xf32, #tpu.memory_space<smem>>
    %59 = tpu.reciprocal %53 {approx = true} : vector<1x256xf32> -> vector<1x256xf32>
    %60 = vector.broadcast %59 : vector<1x256xf32> to vector<16x256xf32>
    %61 = arith.mulf %57, %60 : vector<16x256xf32>
    %62 = vector.broadcast %58 : f32 to vector<16x256xf32>
    %63 = arith.mulf %62, %61 : vector<16x256xf32>
    %64 = arith.addf %63, %1 : vector<16x256xf32>
    %cst_33 = arith.constant dense<0xFF800000> : vector<256xf32>
    %65 = vector.multi_reduction <maximumf>, %64, %cst_33 [0] : vector<16x256xf32> to vector<256xf32>
    %66 = vector.shape_cast %65 : vector<256xf32> to vector<1x256xf32>
    %67 = vector.broadcast %66 : vector<1x256xf32> to vector<16x256xf32>
    %68 = arith.subf %64, %67 : vector<16x256xf32>
    %69 = math.exp %68 : vector<16x256xf32>
    %cst_34 = arith.constant dense<0.000000e+00> : vector<256xf32>
    %70 = vector.multi_reduction <add>, %69, %cst_34 [0] : vector<16x256xf32> to vector<256xf32>
    %71 = vector.shape_cast %70 : vector<256xf32> to vector<1x256xf32>
    %72 = tpu.reciprocal %71 : vector<1x256xf32> -> vector<1x256xf32>
    %73 = vector.broadcast %72 : vector<1x256xf32> to vector<16x256xf32>
    %74 = arith.mulf %69, %73 : vector<16x256xf32>
    %c0_35 = arith.constant 0 : index
    %c0_36 = arith.constant 0 : index
    %c0_37 = arith.constant 0 : index
    %75 = vector.load %arg9[%c0_35, %c0_36, %c0_37] : memref<1x16x256xf32, #tpu.memory_space<vmem>>, vector<1x16x256xf32>
    %76 = vector.shape_cast %75 : vector<1x16x256xf32> to vector<16x256xf32>
    %77 = vector.shape_cast %74 : vector<16x256xf32> to vector<1x16x256xf32>
    tpu.vector_store %arg9[%c0_35, %c0_36, %c0_37], %77 {strides = array<i32>} : memref<1x16x256xf32, #tpu.memory_space<vmem>>, vector<1x16x256xf32>,
    return
  }
  func.func @transform_0(%arg0: i32, %arg1: i32) -> (i32, i32, i32) {
    %c0_i32 = arith.constant 0 : i32
    %c0_i32_0 = arith.constant 0 : i32
    return %arg0, %c0_i32, %arg1 : i32, i32, i32
  }
  func.func @transform_1(%arg0: i32, %arg1: i32) -> (i32, i32, i32) {
    %c0_i32 = arith.constant 0 : i32
    %c0_i32_0 = arith.constant 0 : i32
    %c0_i32_1 = arith.constant 0 : i32
    return %arg0, %c0_i32, %c0_i32_0 : i32, i32, i32
  }
  func.func @transform_2(%arg0: i32, %arg1: i32) -> (i32, i32) {
    %c0_i32 = arith.constant 0 : i32
    %c0_i32_0 = arith.constant 0 : i32
    %c0_i32_1 = arith.constant 0 : i32
    return %c0_i32, %c0_i32_0 : i32, i32
  }
  func.func @transform_3(%arg0: i32, %arg1: i32) -> (i32, i32) {
    %c0_i32 = arith.constant 0 : i32
    %c0_i32_0 = arith.constant 0 : i32
    %c0_i32_1 = arith.constant 0 : i32
    return %c0_i32, %c0_i32_0 : i32, i32
  }
  func.func @transform_4(%arg0: i32, %arg1: i32) -> (i32, i32) {
    %c0_i32 = arith.constant 0 : i32
    %c0_i32_0 = arith.constant 0 : i32
    %c0_i32_1 = arith.constant 0 : i32
    return %c0_i32, %c0_i32_0 : i32, i32
  }
  func.func @transform_5(%arg0: i32, %arg1: i32) -> (i32, i32) {
    %c0_i32 = arith.constant 0 : i32
    %c0_i32_0 = arith.constant 0 : i32
    %c0_i32_1 = arith.constant 0 : i32
    return %c0_i32, %c0_i32_0 : i32, i32
  }
  func.func @transform_6(%arg0: i32, %arg1: i32) -> i32 {
    %c0_i32 = arith.constant 0 : i32
    %c0_i32_0 = arith.constant 0 : i32
    return %c0_i32 : i32
  }
  func.func @transform_7(%arg0: i32, %arg1: i32) -> (i32, i32, i32) {
    %c0_i32 = arith.constant 0 : i32
    %c0_i32_0 = arith.constant 0 : i32
    return %arg0, %c0_i32, %arg1 : i32, i32, i32
  }
}

</mosaic_0001>

<llo_original>
// kernel: decoder_forward.5
$region0: #{decoder_forward.5}
  #allocation0 [shape = 'u32[]', space=smem, size = 0x4, offset = 0x4, fixed_abs, tag = 'smem constant byte address 0x4 - core index']
  #allocation1 [shape = 'u32[144,128]{1,0:T(1,128)}', space=vmem, size = 0x12000, scoped, tag = 'internal scratch']
  %s0 = inlined_call_operand.vmem [shape: f32[4,8,32], index: 0, kind: input, shape index: {}]
  %s1 = inlined_call_operand.vmem [shape: f32[8,1], index: 1, kind: input, shape index: {}]
  %s2 = inlined_call_operand.vmem [shape: f32[8,1], index: 2, kind: input, shape index: {}]
  %s3 = inlined_call_operand.vmem [shape: f32[4,8,32], index: 3, kind: output, shape index: {}]
  %s4 = sld [smem:[#allocation0]]
  $region45: #{decoder_forward.5} parent=0
    _
  %s6 = ssub.s32 1, %s4
  %s7 = scalar_select 0, %s6, %s4
  loop: start=0, step=1, limit=6
  $region2: #{decoder_forward.5} parent=0 // loop_pre_header
    _
  $region3: #{decoder_forward.5} parent=0 // loop_header
    %s9 = sphi 0, %s13
    %p10 = scmp.ge.s32.totalorder %s9, 6
    %s16 = sphi 0, %s28
    %s17 = sphi 0, %s24
    %s18 = sphi 0, %s16
    %s19 = sphi 0, %s17
    %s20 = sphi 0, %s18
    %s21 = sphi 0, %s19
    %s33 = sphi 0, %s35
    %s36 = sphi 0, %s33
    %s37 = sphi 0, %s36
    %s53 = sphi 0, %s37
    %s57 = sphi 0, %s57
    %s59 = sphi 0, %s57
    %s60 = sphi 0, %s59
    %s74 = sphi 0, %s60
    %s78 = sphi 0, %s78
    %s80 = sphi 0, %s78
    %s81 = sphi 0, %s80
    %s95 = sphi 0, %s81
    %s103 = sphi 0, %s105
    %s106 = sphi 0, %s103
    %s107 = sphi 0, %s106
    %s123 = sphi 0, %s107
  $region4: #{decoder_forward.5} parent=0 // loop_header_branch
    %12 = sbr.rel (%p10) target = $region8
  $region5: #{decoder_forward.5} parent=0 // loop_body
    %s14 = ssub.s32 %s9, 1
    %s15 = ssub.s32 %s9, 2
    %s22 = sadd.s32 1, %s17
    %p23 = scmp.ge.s32.totalorder %s22, 1
    %s24 = scalar_select %p23, 0, %s22
    %s25 = sadd.s32 1, %s16
    %s26 = scalar_select %p23, %s25, %s16
    %p27 = scmp.ge.s32.totalorder %s26, 4
    %s28 = scalar_select %p27, 0, %s26
    %s29 = ssub.s32 %s16, %s28
    %s30 = ssub.s32 %s17, %s24
    %s31 = sor.u32 %s29, %s30
    %p32 = scmp.eq.s32.totalorder %s31, 0
    %s34 = sadd.s32 %s33, 1
    %s35 = scalar_select %p32, %s33, %s34
    %p38 = pneg %p32
    %p39 = scmp.eq.s32.totalorder %s9, 3
    %p40 = por %p38, %p39
    %p41 = scmp.ne.s32.totalorder %s33, %s36
    %p42 = scmp.eq.s32.totalorder %s9, 0
    %p43 = por %p41, %p42
    %p44 = scmp.ne.s32.totalorder %s33, %s36
    %p45 = scmp.eq.s32.totalorder %s14, 3
    %p46 = por %p44, %p45
    %p47 = scmp.ne.s32.totalorder %s36, %s37
    %p48 = scmp.eq.s32.totalorder %s14, 0
    %p49 = por %p47, %p48
    %p50 = scmp.ne.s32.totalorder %s36, %s37
    %p51 = scmp.eq.s32.totalorder %s15, 3
    %p52 = por %p50, %p51
    %p54 = scmp.ne.s32.totalorder %s37, %s53
    %p55 = scmp.eq.s32.totalorder %s15, 0
    %p56 = por %p54, %p55
    %s58 = sadd.s32 %s57, 1
    %p61 = scmp.eq.s32.totalorder %s9, 3
    %p62 = scmp.ne.s32.totalorder %s57, %s59
    %p63 = scmp.eq.s32.totalorder %s9, 0
    %p64 = por %p62, %p63
    %p65 = scmp.ne.s32.totalorder %s57, %s59
    %p66 = scmp.eq.s32.totalorder %s14, 3
    %p67 = por %p65, %p66
    %p68 = scmp.ne.s32.totalorder %s59, %s60
    %p69 = scmp.eq.s32.totalorder %s14, 0
    %p70 = por %p68, %p69
    %p71 = scmp.ne.s32.totalorder %s59, %s60
    %p72 = scmp.eq.s32.totalorder %s15, 3
    %p73 = por %p71, %p72
    %p75 = scmp.ne.s32.totalorder %s60, %s74
    %p76 = scmp.eq.s32.totalorder %s15, 0
    %p77 = por %p75, %p76
    %s79 = sadd.s32 %s78, 1
    %p82 = scmp.eq.s32.totalorder %s9, 3
    %p83 = scmp.ne.s32.totalorder %s78, %s80
    %p84 = scmp.eq.s32.totalorder %s9, 0
    %p85 = por %p83, %p84
    %p86 = scmp.ne.s32.totalorder %s78, %s80
    %p87 = scmp.eq.s32.totalorder %s14, 3
    %p88 = por %p86, %p87
    %p89 = scmp.ne.s32.totalorder %s80, %s81
    %p90 = scmp.eq.s32.totalorder %s14, 0
    %p91 = por %p89, %p90
    %p92 = scmp.ne.s32.totalorder %s80, %s81
    %p93 = scmp.eq.s32.totalorder %s15, 3
    %p94 = por %p92, %p93
    %p96 = scmp.ne.s32.totalorder %s81, %s95
    %p97 = scmp.eq.s32.totalorder %s15, 0
    %p98 = por %p96, %p97
    %s99 = ssub.s32 %s16, %s28
    %s100 = ssub.s32 %s17, %s24
    %s101 = sor.u32 %s99, %s100
    %p102 = scmp.eq.s32.totalorder %s101, 0
    %s104 = sadd.s32 %s103, 1
    %s105 = scalar_select %p102, %s103, %s104
    %p108 = pneg %p102
    %p109 = scmp.eq.s32.totalorder %s9, 3
    %p110 = por %p108, %p109
    %p111 = scmp.ne.s32.totalorder %s103, %s106
    %p112 = scmp.eq.s32.totalorder %s9, 0
    %p113 = por %p111, %p112
    %p114 = scmp.ne.s32.totalorder %s103, %s106
    %p115 = scmp.eq.s32.totalorder %s14, 3
    %p116 = por %p114, %p115
    %p117 = scmp.ne.s32.totalorder %s106, %s107
    %p118 = scmp.eq.s32.totalorder %s14, 0
    %p119 = por %p117, %p118
    %p120 = scmp.ne.s32.totalorder %s106, %s107
    %p121 = scmp.eq.s32.totalorder %s15, 3
    %p122 = por %p120, %p121
    %p124 = scmp.ne.s32.totalorder %s107, %s123
    %p125 = scmp.eq.s32.totalorder %s15, 0
    %p126 = por %p124, %p125
    %p127 = scmp.le.s32.totalorder 1, %s9
    %p128 = scmp.lt.s32.totalorder %s9, 5
    %p129 = pnand %p127, %p128
    %p130 = pneg %p129
    // Predicated region
    $region9: #{decoder_forward.5} parent=5 // pred_check
      _
    $region10: #{decoder_forward.5} parent=5 // pred_check_branch
      %132 = sbr.rel (%p129) target = $region12
    $region11: #{decoder_forward.5} parent=5 // pred_region
      %s133 = ssub.s32 %s9, 1
      // Predicated region
      $region13: #{decoder_forward.5} parent=11 // pred_check
        %p134 = pneg %p70
      $region14: #{decoder_forward.5} parent=11 // pred_check_branch
        %136 = sbr.rel (%p134) target = $region16
      $region15: #{decoder_forward.5} parent=11 // pred_region
        _
      $region16: #{decoder_forward.5} parent=11 // pred_fallthru
        _
      // Predicated region
      $region17: #{decoder_forward.5} parent=11 // pred_check
        %p137 = pneg %p91
      $region18: #{decoder_forward.5} parent=11 // pred_check_branch
        %139 = sbr.rel (%p137) target = $region20
      $region19: #{decoder_forward.5} parent=11 // pred_region
        _
      $region20: #{decoder_forward.5} parent=11 // pred_fallthru
        _
    $region12: #{decoder_forward.5} parent=5 // pred_fallthru
      _
    %p140 = scmp.lt.s32.totalorder %s9, 4
    // Predicated region
    $region21: #{decoder_forward.5} parent=5 // pred_check
      %p141 = pneg %p140
    $region22: #{decoder_forward.5} parent=5 // pred_check_branch
      %143 = sbr.rel (%p141) target = $region24
    $region23: #{decoder_forward.5} parent=5 // pred_region
      // Predicated region
      $region25: #{decoder_forward.5} parent=23 // pred_check
        %p144 = pneg %p43
      $region26: #{decoder_forward.5} parent=23 // pred_check_branch
        %146 = sbr.rel (%p144) target = $region28
      $region27: #{decoder_forward.5} parent=23 // pred_region
        %p147 = scmp.lt.s32.totalorder %s16, 3
        %s148 = scalar_select %p147, %s16, 3
        %p149 = scmp.lt.s32.totalorder %s17, 0
        %s150 = scalar_select %p149, %s17, 0
        %s151 = sadd.s32 %s150, %s148
        %s152 = smul.addr %s151, 8
        %s153 = scalar_lea.vmem %s0, %s152
      $region28: #{decoder_forward.5} parent=23 // pred_fallthru
        _
    $region24: #{decoder_forward.5} parent=5 // pred_fallthru
      _
    %p154 = scmp.le.s32.totalorder 1, %s9
    %p155 = scmp.lt.s32.totalorder %s9, 5
    %p156 = pnand %p154, %p155
    %p157 = pneg %p156
    // Predicated region
    $region29: #{decoder_forward.5} parent=5 // pred_check
      _
    $region30: #{decoder_forward.5} parent=5 // pred_check_branch
      %159 = sbr.rel (%p156) target = $region32
    $region31: #{decoder_forward.5} parent=5 // pred_region
      %s160 = ssub.s32 %s9, 1
      %p161 = scmp.lt.s32.totalorder %s18, 3
      %s162 = scalar_select %p161, %s18, 3
      %p163 = scmp.lt.s32.totalorder %s19, 0
      %s164 = scalar_select %p163, %s19, 0
      %s165 = sadd.s32 %s164, %s162
      %s166 = smul.addr %s165, 8
      %s167 = scalar_lea.vmem %s0, %s166
      %p168 = pneg %p49
      %p169 = pneg %p46
      %p170 = pneg %p70
      %p171 = pneg %p67
      %p172 = pneg %p91
      %p173 = pneg %p88
      %p174 = pneg %p119
      %p175 = pneg %p116
      %p176 = scmp.lt.s32.totalorder %s18, 3
      %s177 = scalar_select %p176, %s18, 3
      %p178 = scmp.lt.s32.totalorder %s19, 0
      %s179 = scalar_select %p178, %s19, 0
      %s180 = sadd.s32 %s179, %s177
      %s181 = smul.addr %s180, 8
      %s182 = scalar_lea.vmem %s3, %s181
      %p183 = scmp.lt.s32.totalorder %s18, 3
      %s184 = scalar_select %p183, %s18, 3
      %p185 = scmp.lt.s32.totalorder %s19, 0
      %s186 = scalar_select %p185, %s19, 0
      %s187 = sadd.s32 %s186, %s184
      %s188 = smul.addr %s187, 8
      %s189 = scalar_lea.vmem %s0, %s188
      %p190 = scmp.lt.s32.totalorder %s18, 3
      %s191 = scalar_select %p190, %s18, 3
      %p192 = scmp.lt.s32.totalorder %s19, 0
      %s193 = scalar_select %p192, %s19, 0
      %s194 = sadd.s32 %s193, %s191
      %s195 = smul.addr %s194, 8
      %s196 = scalar_lea.vmem %s3, %s195
      %v197 = vld [vmem:[%s189] sm:$0xff]
      %v198 = vld [vmem:[%s1] sm:$0xff]
      %200 = vset.pattern.permute.xlu0 0
      %201 = vperm.xlu0 %200, %v198
      %v202 = vpop.permute.xlu0 %201
      %v204 = vmul.f32 %v197, %v202
      %v205 = vld [vmem:[%s2] sm:$0xff]
      %207 = vset.pattern.permute.xlu0 0
      %208 = vperm.xlu0 %207, %v205
      %v209 = vpop.permute.xlu0 %208
      %v211 = vadd.f32 %v204, %v209
      %v212 = vmax.f32 %v211, 0.0
      %vm213 = vcmask 261120
      %214 = vst.msk [vmem:[%s196] sm:$0xff] %vm213, %v212
      %p215 = scmp.lt.s32.totalorder %s18, 3
      %s216 = scalar_select %p215, %s18, 3
      %p217 = scmp.lt.s32.totalorder %s19, 0
      %s218 = scalar_select %p217, %s19, 0
      %s219 = sadd.s32 %s218, %s216
      %s220 = smul.addr %s219, 8
      %s221 = scalar_lea.vmem %s3, %s220
      // Predicated region
      $region33: #{decoder_forward.5} parent=31 // pred_check
        %p222 = pneg %p116
      $region34: #{decoder_forward.5} parent=31 // pred_check_branch
        %224 = sbr.rel (%p222) target = $region36
      $region35: #{decoder_forward.5} parent=31 // pred_region
        _
      $region36: #{decoder_forward.5} parent=31 // pred_fallthru
        _
    $region32: #{decoder_forward.5} parent=5 // pred_fallthru
      _
    %p225 = scmp.le.s32.totalorder 2, %s9
    // Predicated region
    $region37: #{decoder_forward.5} parent=5 // pred_check
      %p226 = pneg %p225
    $region38: #{decoder_forward.5} parent=5 // pred_check_branch
      %228 = sbr.rel (%p226) target = $region40
    $region39: #{decoder_forward.5} parent=5 // pred_region
      %s229 = ssub.s32 %s9, 2
      // Predicated region
      $region41: #{decoder_forward.5} parent=39 // pred_check
        %p230 = pneg %p122
      $region42: #{decoder_forward.5} parent=39 // pred_check_branch
        %232 = sbr.rel (%p230) target = $region44
      $region43: #{decoder_forward.5} parent=39 // pred_region
        %p233 = scmp.lt.s32.totalorder %s20, 3
        %s234 = scalar_select %p233, %s20, 3
        %p235 = scmp.lt.s32.totalorder %s21, 0
        %s236 = scalar_select %p235, %s21, 0
        %s237 = sadd.s32 %s236, %s234
        %s238 = smul.addr %s237, 8
        %s239 = scalar_lea.vmem %s3, %s238
      $region44: #{decoder_forward.5} parent=39 // pred_fallthru
        _
    $region40: #{decoder_forward.5} parent=5 // pred_fallthru
      _
  $region6: #{decoder_forward.5} parent=0 // loop_footer
    %s13 = sadd.s32 1, %s9
  $region7: #{decoder_forward.5} parent=0 // loop_footer_branch
    %8 = sbr.rel target = $region3
  $region8: #{decoder_forward.5} parent=0 // loop_exit
    _

// kernel: decoder_forward.4
$region0: #{decoder_forward.4}
  #allocation0 [shape = 'u32[]', space=smem, size = 0x4, offset = 0x4, fixed_abs, tag = 'smem constant byte address 0x4 - core index']
  #allocation1 [shape = 'u32[144,128]{1,0:T(1,128)}', space=vmem, size = 0x12000, scoped, tag = 'internal scratch']
  %s0 = inlined_call_operand.vmem [shape: f32[4,8,64], index: 0, kind: input, shape index: {}]
  %s1 = inlined_call_operand.vmem [shape: f32[4,64,32], index: 1, kind: input, shape index: {}]
  %s2 = inlined_call_operand.vmem [shape: f32[4,8,32], index: 2, kind: output, shape index: {0}]
  %s3 = inlined_call_operand.vmem [shape: f32[4,1,8,1], index: 3, kind: output, shape index: {1}]
  %s4 = inlined_call_operand.vmem [shape: f32[4,1,8,1], index: 4, kind: output, shape index: {2}]
  %5 = xla_tuple %s2, %s3, %s4
  %s6 = sld [smem:[#allocation0]]
  $region57: #{decoder_forward.4} parent=0
    _
  %s8 = ssub.s32 1, %s6
  %s9 = scalar_select 0, %s8, %s6
  loop: start=0, step=1, limit=6
  $region2: #{decoder_forward.4} parent=0 // loop_pre_header
    _
  $region3: #{decoder_forward.4} parent=0 // loop_header
    %s11 = sphi 0, %s15
    %p12 = scmp.ge.s32.totalorder %s11, 6
    %s18 = sphi 0, %s30
    %s19 = sphi 0, %s26
    %s20 = sphi 0, %s18
    %s21 = sphi 0, %s19
    %s22 = sphi 0, %s20
    %s23 = sphi 0, %s21
    %s33 = sphi 0, %s35
    %s36 = sphi 0, %s33
    %s37 = sphi 0, %s36
    %s53 = sphi 0, %s37
    %s61 = sphi 0, %s63
    %s64 = sphi 0, %s61
    %s65 = sphi 0, %s64
    %s81 = sphi 0, %s65
    %s89 = sphi 0, %s91
    %s92 = sphi 0, %s89
    %s93 = sphi 0, %s92
    %s109 = sphi 0, %s93
    %s117 = sphi 0, %s119
    %s120 = sphi 0, %s117
    %s121 = sphi 0, %s120
    %s137 = sphi 0, %s121
    %s145 = sphi 0, %s147
    %s148 = sphi 0, %s145
    %s149 = sphi 0, %s148
    %s165 = sphi 0, %s149
  $region4: #{decoder_forward.4} parent=0 // loop_header_branch
    %14 = sbr.rel (%p12) target = $region8
  $region5: #{decoder_forward.4} parent=0 // loop_body
    %s16 = ssub.s32 %s11, 1
    %s17 = ssub.s32 %s11, 2
    %s24 = sadd.s32 1, %s19
    %p25 = scmp.ge.s32.totalorder %s24, 1
    %s26 = scalar_select %p25, 0, %s24
    %s27 = sadd.s32 1, %s18
    %s28 = scalar_select %p25, %s27, %s18
    %p29 = scmp.ge.s32.totalorder %s28, 4
    %s30 = scalar_select %p29, 0, %s28
    %s31 = ssub.s32 %s18, %s30
    %p32 = scmp.eq.s32.totalorder %s31, 0
    %s34 = sadd.s32 %s33, 1
    %s35 = scalar_select %p32, %s33, %s34
    %p38 = pneg %p32
    %p39 = scmp.eq.s32.totalorder %s11, 3
    %p40 = por %p38, %p39
    %p41 = scmp.ne.s32.totalorder %s33, %s36
    %p42 = scmp.eq.s32.totalorder %s11, 0
    %p43 = por %p41, %p42
    %p44 = scmp.ne.s32.totalorder %s33, %s36
    %p45 = scmp.eq.s32.totalorder %s16, 3
    %p46 = por %p44, %p45
    %p47 = scmp.ne.s32.totalorder %s36, %s37
    %p48 = scmp.eq.s32.totalorder %s16, 0
    %p49 = por %p47, %p48
    %p50 = scmp.ne.s32.totalorder %s36, %s37
    %p51 = scmp.eq.s32.totalorder %s17, 3
    %p52 = por %p50, %p51
    %p54 = scmp.ne.s32.totalorder %s37, %s53
    %p55 = scmp.eq.s32.totalorder %s17, 0
    %p56 = por %p54, %p55
    %s57 = ssub.s32 %s18, %s30
    %s58 = ssub.s32 %s19, %s26
    %s59 = sor.u32 %s57, %s58
    %p60 = scmp.eq.s32.totalorder %s59, 0
    %s62 = sadd.s32 %s61, 1
    %s63 = scalar_select %p60, %s61, %s62
    %p66 = pneg %p60
    %p67 = scmp.eq.s32.totalorder %s11, 3
    %p68 = por %p66, %p67
    %p69 = scmp.ne.s32.totalorder %s61, %s64
    %p70 = scmp.eq.s32.totalorder %s11, 0
    %p71 = por %p69, %p70
    %p72 = scmp.ne.s32.totalorder %s61, %s64
    %p73 = scmp.eq.s32.totalorder %s16, 3
    %p74 = por %p72, %p73
    %p75 = scmp.ne.s32.totalorder %s64, %s65
    %p76 = scmp.eq.s32.totalorder %s16, 0
    %p77 = por %p75, %p76
    %p78 = scmp.ne.s32.totalorder %s64, %s65
    %p79 = scmp.eq.s32.totalorder %s17, 3
    %p80 = por %p78, %p79
    %p82 = scmp.ne.s32.totalorder %s65, %s81
    %p83 = scmp.eq.s32.totalorder %s17, 0
    %p84 = por %p82, %p83
    %s85 = ssub.s32 %s18, %s30
    %s86 = ssub.s32 %s19, %s26
    %s87 = sor.u32 %s85, %s86
    %p88 = scmp.eq.s32.totalorder %s87, 0
    %s90 = sadd.s32 %s89, 1
    %s91 = scalar_select %p88, %s89, %s90
    %p94 = pneg %p88
    %p95 = scmp.eq.s32.totalorder %s11, 3
    %p96 = por %p94, %p95
    %p97 = scmp.ne.s32.totalorder %s89, %s92
    %p98 = scmp.eq.s32.totalorder %s11, 0
    %p99 = por %p97, %p98
    %p100 = scmp.ne.s32.totalorder %s89, %s92
    %p101 = scmp.eq.s32.totalorder %s16, 3
    %p102 = por %p100, %p101
    %p103 = scmp.ne.s32.totalorder %s92, %s93
    %p104 = scmp.eq.s32.totalorder %s16, 0
    %p105 = por %p103, %p104
    %p106 = scmp.ne.s32.totalorder %s92, %s93
    %p107 = scmp.eq.s32.totalorder %s17, 3
    %p108 = por %p106, %p107
    %p110 = scmp.ne.s32.totalorder %s93, %s109
    %p111 = scmp.eq.s32.totalorder %s17, 0
    %p112 = por %p110, %p111
    %s113 = ssub.s32 %s18, %s30
    %s114 = ssub.s32 %s19, %s26
    %s115 = sor.u32 %s113, %s114
    %p116 = scmp.eq.s32.totalorder %s115, 0
    %s118 = sadd.s32 %s117, 1
    %s119 = scalar_select %p116, %s117, %s118
    %p122 = pneg %p116
    %p123 = scmp.eq.s32.totalorder %s11, 3
    %p124 = por %p122, %p123
    %p125 = scmp.ne.s32.totalorder %s117, %s120
    %p126 = scmp.eq.s32.totalorder %s11, 0
    %p127 = por %p125, %p126
    %p128 = scmp.ne.s32.totalorder %s117, %s120
    %p129 = scmp.eq.s32.totalorder %s16, 3
    %p130 = por %p128, %p129
    %p131 = scmp.ne.s32.totalorder %s120, %s121
    %p132 = scmp.eq.s32.totalorder %s16, 0
    %p133 = por %p131, %p132
    %p134 = scmp.ne.s32.totalorder %s120, %s121
    %p135 = scmp.eq.s32.totalorder %s17, 3
    %p136 = por %p134, %p135
    %p138 = scmp.ne.s32.totalorder %s121, %s137
    %p139 = scmp.eq.s32.totalorder %s17, 0
    %p140 = por %p138, %p139
    %s141 = ssub.s32 %s18, %s30
    %s142 = ssub.s32 %s19, %s26
    %s143 = sor.u32 %s141, %s142
    %p144 = scmp.eq.s32.totalorder %s143, 0
    %s146 = sadd.s32 %s145, 1
    %s147 = scalar_select %p144, %s145, %s146
    %p150 = pneg %p144
    %p151 = scmp.eq.s32.totalorder %s11, 3
    %p152 = por %p150, %p151
    %p153 = scmp.ne.s32.totalorder %s145, %s148
    %p154 = scmp.eq.s32.totalorder %s11, 0
    %p155 = por %p153, %p154
    %p156 = scmp.ne.s32.totalorder %s145, %s148
    %p157 = scmp.eq.s32.totalorder %s16, 3
    %p158 = por %p156, %p157
    %p159 = scmp.ne.s32.totalorder %s148, %s149
    %p160 = scmp.eq.s32.totalorder %s16, 0
    %p161 = por %p159, %p160
    %p162 = scmp.ne.s32.totalorder %s148, %s149
    %p163 = scmp.eq.s32.totalorder %s17, 3
    %p164 = por %p162, %p163
    %p166 = scmp.ne.s32.totalorder %s149, %s165
    %p167 = scmp.eq.s32.totalorder %s17, 0
    %p168 = por %p166, %p167
    %p169 = scmp.le.s32.totalorder 1, %s11
    %p170 = scmp.lt.s32.totalorder %s11, 5
    %p171 = pnand %p169, %p170
    %p172 = pneg %p171
    // Predicated region
    $region9: #{decoder_forward.4} parent=5 // pred_check
      _
    $region10: #{decoder_forward.4} parent=5 // pred_check_branch
      %174 = sbr.rel (%p171) target = $region12
    $region11: #{decoder_forward.4} parent=5 // pred_region
      %s175 = ssub.s32 %s11, 1
    $region12: #{decoder_forward.4} parent=5 // pred_fallthru
      _
    %p176 = scmp.lt.s32.totalorder %s11, 4
    // Predicated region
    $region13: #{decoder_forward.4} parent=5 // pred_check
      %p177 = pneg %p176
    $region14: #{decoder_forward.4} parent=5 // pred_check_branch
      %179 = sbr.rel (%p177) target = $region16
    $region15: #{decoder_forward.4} parent=5 // pred_region
      // Predicated region
      $region17: #{decoder_forward.4} parent=15 // pred_check
        %p180 = pneg %p43
      $region18: #{decoder_forward.4} parent=15 // pred_check_branch
        %182 = sbr.rel (%p180) target = $region20
      $region19: #{decoder_forward.4} parent=15 // pred_region
        %p183 = scmp.lt.s32.totalorder %s18, 3
        %s184 = scalar_select %p183, %s18, 3
        %s185 = smul.addr %s184, 8
        %s186 = scalar_lea.vmem %s0, %s185
      $region20: #{decoder_forward.4} parent=15 // pred_fallthru
        _
      // Predicated region
      $region21: #{decoder_forward.4} parent=15 // pred_check
        %p187 = pneg %p71
      $region22: #{decoder_forward.4} parent=15 // pred_check_branch
        %189 = sbr.rel (%p187) target = $region24
      $region23: #{decoder_forward.4} parent=15 // pred_region
        %p190 = scmp.lt.s32.totalorder %s18, 3
        %s191 = scalar_select %p190, %s18, 3
        %p192 = scmp.lt.s32.totalorder %s19, 0
        %s193 = scalar_select %p192, %s19, 0
        %s194 = smul.addr %s191, 8
        %s195 = sadd.s32 %s193, %s194
        %s196 = smul.addr %s195, 8
        %s197 = scalar_lea.vmem %s1, %s196
      $region24: #{decoder_forward.4} parent=15 // pred_fallthru
        _
    $region16: #{decoder_forward.4} parent=5 // pred_fallthru
      _
    %p198 = scmp.le.s32.totalorder 1, %s11
    %p199 = scmp.lt.s32.totalorder %s11, 5
    %p200 = pnand %p198, %p199
    %p201 = pneg %p200
    // Predicated region
    $region25: #{decoder_forward.4} parent=5 // pred_check
      _
    $region26: #{decoder_forward.4} parent=5 // pred_check_branch
      %203 = sbr.rel (%p200) target = $region28
    $region27: #{decoder_forward.4} parent=5 // pred_region
      %s204 = ssub.s32 %s11, 1
      %p205 = scmp.lt.s32.totalorder %s20, 3
      %s206 = scalar_select %p205, %s20, 3
      %s207 = smul.addr %s206, 8
      %s208 = scalar_lea.vmem %s0, %s207
      %p209 = pneg %p49
      %p210 = pneg %p46
      %p211 = scmp.lt.s32.totalorder %s20, 3
      %s212 = scalar_select %p211, %s20, 3
      %p213 = scmp.lt.s32.totalorder %s21, 0
      %s214 = scalar_select %p213, %s21, 0
      %s215 = smul.addr %s212, 8
      %s216 = sadd.s32 %s214, %s215
      %s217 = smul.addr %s216, 8
      %s218 = scalar_lea.vmem %s1, %s217
      %p219 = pneg %p77
      %p220 = pneg %p74
      %p221 = pneg %p105
      %p222 = pneg %p102
      %p223 = scmp.lt.s32.totalorder %s20, 3
      %s224 = scalar_select %p223, %s20, 3
      %p225 = scmp.lt.s32.totalorder %s21, 0
      %s226 = scalar_select %p225, %s21, 0
      %s227 = sadd.s32 %s226, %s224
      %s228 = smul.addr %s227, 8
      %s229 = scalar_lea.vmem %s2, %s228
      %p230 = pneg %p133
      %p231 = pneg %p130
      %p232 = scmp.lt.s32.totalorder %s20, 3
      %s233 = scalar_select %p232, %s20, 3
      %p234 = scmp.lt.s32.totalorder %s21, 0
      %s235 = scalar_select %p234, %s21, 0
      %s236 = sadd.s32 %s235, %s233
      %s237 = smul.addr %s236, 8
      %s238 = scalar_lea.vmem %s3, %s237
      %p239 = pneg %p161
      %p240 = pneg %p158
      %p241 = scmp.lt.s32.totalorder %s20, 3
      %s242 = scalar_select %p241, %s20, 3
      %p243 = scmp.lt.s32.totalorder %s21, 0
      %s244 = scalar_select %p243, %s21, 0
      %s245 = sadd.s32 %s244, %s242
      %s246 = smul.addr %s245, 8
      %s247 = scalar_lea.vmem %s4, %s246
      %p248 = scmp.lt.s32.totalorder %s20, 3
      %s249 = scalar_select %p248, %s20, 3
      %s250 = smul.addr %s249, 8
      %s251 = scalar_lea.vmem %s0, %s250
      %p252 = scmp.lt.s32.totalorder %s20, 3
      %s253 = scalar_select %p252, %s20, 3
      %p254 = scmp.lt.s32.totalorder %s21, 0
      %s255 = scalar_select %p254, %s21, 0
      %s256 = smul.addr %s253, 8
      %s257 = sadd.s32 %s255, %s256
      %s258 = smul.addr %s257, 8
      %s259 = scalar_lea.vmem %s1, %s258
      %p260 = scmp.lt.s32.totalorder %s20, 3
      %s261 = scalar_select %p260, %s20, 3
      %p262 = scmp.lt.s32.totalorder %s21, 0
      %s263 = scalar_select %p262, %s21, 0
      %s264 = sadd.s32 %s263, %s261
      %s265 = smul.addr %s264, 8
      %s266 = scalar_lea.vmem %s2, %s265
      %p267 = scmp.lt.s32.totalorder %s20, 3
      %s268 = scalar_select %p267, %s20, 3
      %p269 = scmp.lt.s32.totalorder %s21, 0
      %s270 = scalar_select %p269, %s21, 0
      %s271 = sadd.s32 %s270, %s268
      %s272 = smul.addr %s271, 8
      %s273 = scalar_lea.vmem %s3, %s272
      %p274 = scmp.lt.s32.totalorder %s20, 3
      %s275 = scalar_select %p274, %s20, 3
      %p276 = scmp.lt.s32.totalorder %s21, 0
      %s277 = scalar_select %p276, %s21, 0
      %s278 = sadd.s32 %s277, %s275
      %s279 = smul.addr %s278, 8
      %s280 = scalar_lea.vmem %s4, %s279
      %v281 = vld [vmem:[%s251] sm:$0xff]
      %v282 = vld [vmem:[%s259] sm:$0xff]
      %v283 = vld [vmem:[%s259 + $0x8] sm:$0xff]
      %v284 = vld [vmem:[%s259 + $0x10] sm:$0xff]
      %v285 = vld [vmem:[%s259 + $0x18] sm:$0xff]
      %v286 = vld [vmem:[%s259 + $0x20] sm:$0xff]
      %v287 = vld [vmem:[%s259 + $0x28] sm:$0xff]
      %v288 = vld [vmem:[%s259 + $0x30] sm:$0xff]
      %v289 = vld [vmem:[%s259 + $0x38] sm:$0xff]
      %vm290 = vcmask 523264
      %v292 = vsel %vm290, %v281, 0
      %294 = vmatprep.subr.mxu0 0.0
      %295 = vmatpush1.msra.mxu0 %v282
      %296 = vmatprep.subr.mxu0 0.0
      %297 = vmatpush1.msra.mxu0 %v283
      %298 = vmatprep.subr.mxu0 0.0
      %299 = vmatpush1.msra.mxu0 %v284
      %300 = vmatprep.subr.mxu0 0.0
      %301 = vmatpush1.msra.mxu0 %v285
      %302 = vmatprep.subr.mxu0 0.0
      %303 = vmatpush1.msra.mxu0 %v286
      %304 = vmatprep.subr.mxu0 0.0
      %305 = vmatpush1.msra.mxu0 %v287
      %306 = vmatprep.subr.mxu0 0.0
      %307 = vmatpush1.msra.mxu0 %v288
      %308 = vmatprep.subr.mxu0 0.0
      %309 = vmatpush1.msra.mxu0 %v289
      %310 = vmatprep.subr.mxu0 0.0
      %311 = vmatpush1.msra.mxu0 0.0
      %312 = vmatprep.subr.mxu0 0.0
      %313 = vmatpush1.msra.mxu0 0.0
      %314 = vmatprep.subr.mxu0 0.0
      %315 = vmatpush1.msra.mxu0 0.0
      %316 = vmatprep.subr.mxu0 0.0
      %317 = vmatpush1.msra.mxu0 0.0
      %318 = vmatprep.subr.mxu0 0.0
      %319 = vmatpush1.msra.mxu0 0.0
      %320 = vmatprep.subr.mxu0 0.0
      %321 = vmatpush1.msra.mxu0 0.0
      %322 = vmatprep.subr.mxu0 0.0
      %323 = vmatpush1.msra.mxu0 0.0
      %324 = vmatprep.subr.mxu0 0.0
      %325 = vmatpush1.msra.mxu0 0.0
      %326 = vmatprep.subr.mxu0 0.0
      %327 = vmatpush1.msra.mxu0 0.0
      %328 = vmatprep.subr.mxu0 0.0
      %329 = vmatpush1.msra.mxu0 0.0
      %330 = vmatprep.subr.mxu0 0.0
      %331 = vmatpush1.msra.mxu0 0.0
      %332 = vmatprep.subr.mxu0 0.0
      %333 = vmatpush1.msra.mxu0 0.0
      %334 = vmatprep.subr.mxu0 0.0
      %335 = vmatpush1.msra.mxu0 0.0
      %336 = vmatprep.subr.mxu0 0.0
      %337 = vmatpush1.msra.mxu0 0.0
      %338 = vmatprep.subr.mxu0 0.0
      %339 = vmatpush1.msra.mxu0 0.0
      %340 = vmatprep.subr.mxu0 0.0
      %341 = vmatpush1.msra.mxu0 0.0
      %342 = vmatprep.subr.mxu0 0.0
      %343 = vmatpush1.msra.mxu0 0.0
      %344 = vmatprep.subr.mxu0 0.0
      %345 = vmatpush1.msra.mxu0 0.0
      %346 = vmatprep.subr.mxu0 0.0
      %347 = vmatpush1.msra.mxu0 0.0
      %348 = vmatprep.subr.mxu0 0.0
      %349 = vmatpush1.msra.mxu0 0.0
      %350 = vmatprep.subr.mxu0 0.0
      %351 = vmatpush1.msra.mxu0 0.0
      %352 = vmatprep.subr.mxu0 0.0
      %353 = vmatpush1.msra.mxu0 0.0
      %354 = vmatprep.subr.mxu0 0.0
      %355 = vmatpush1.msra.mxu0 0.0
      %356 = vmatprep.subr.mxu0 0.0
      %357 = vmatpush1.msra.mxu0 0.0
      %358 = vmatprep.mubr.f32.mxu0 0.0
      %359 = vmatmul.mubr.f32.gmra.mrb[0].mxu0 %v292
      %v360 = vpop.f32.mrb[0].mxu0
      %v361 = vadd.f32 0.0, %v360
      %v362 = vpop.f32.mrb[0].mxu0
      %363 = vdwg.mxu0
      %vm364 = vcmask 261120
      %365 = vst.msk [vmem:[%s266] sm:$0xff] %vm364, %v361
      %v366 = vsel %vm364, %v361, 0.0
      %367 = vadd.xlane.f32.xlu0 %v366
      %v368 = vpop.xlane.xlu0 %367
      %vm369 = vcmask 7168
      %370 = vst.msk [vmem:[%s273] sm:$0xff] %vm369, %v368
      %v371 = vmul.f32 %v361, %v361
      %v372 = vsel %vm364, %v371, 0.0
      %373 = vadd.xlane.f32.xlu0 %v372
      %v374 = vpop.xlane.xlu0 %373
      %375 = vst.msk [vmem:[%s280] sm:$0xff] %vm369, %v374
      %p376 = scmp.lt.s32.totalorder %s20, 3
      %s377 = scalar_select %p376, %s20, 3
      %p378 = scmp.lt.s32.totalorder %s21, 0
      %s379 = scalar_select %p378, %s21, 0
      %s380 = sadd.s32 %s379, %s377
      %s381 = smul.addr %s380, 8
      %s382 = scalar_lea.vmem %s2, %s381
      %p383 = scmp.lt.s32.totalorder %s20, 3
      %s384 = scalar_select %p383, %s20, 3
      %p385 = scmp.lt.s32.totalorder %s21, 0
      %s386 = scalar_select %p385, %s21, 0
      %s387 = sadd.s32 %s386, %s384
      %s388 = smul.addr %s387, 8
      %s389 = scalar_lea.vmem %s3, %s388
      %p390 = scmp.lt.s32.totalorder %s20, 3
      %s391 = scalar_select %p390, %s20, 3
      %p392 = scmp.lt.s32.totalorder %s21, 0
      %s393 = scalar_select %p392, %s21, 0
      %s394 = sadd.s32 %s393, %s391
      %s395 = smul.addr %s394, 8
      %s396 = scalar_lea.vmem %s4, %s395
      // Predicated region
      $region29: #{decoder_forward.4} parent=27 // pred_check
        %p397 = pneg %p102
      $region30: #{decoder_forward.4} parent=27 // pred_check_branch
        %399 = sbr.rel (%p397) target = $region32
      $region31: #{decoder_forward.4} parent=27 // pred_region
        _
      $region32: #{decoder_forward.4} parent=27 // pred_fallthru
        _
      // Predicated region
      $region33: #{decoder_forward.4} parent=27 // pred_check
        %p400 = pneg %p130
      $region34: #{decoder_forward.4} parent=27 // pred_check_branch
        %402 = sbr.rel (%p400) target = $region36
      $region35: #{decoder_forward.4} parent=27 // pred_region
        _
      $region36: #{decoder_forward.4} parent=27 // pred_fallthru
        _
      // Predicated region
      $region37: #{decoder_forward.4} parent=27 // pred_check
        %p403 = pneg %p158
      $region38: #{decoder_forward.4} parent=27 // pred_check_branch
        %405 = sbr.rel (%p403) target = $region40
      $region39: #{decoder_forward.4} parent=27 // pred_region
        _
      $region40: #{decoder_forward.4} parent=27 // pred_fallthru
        _
    $region28: #{decoder_forward.4} parent=5 // pred_fallthru
      _
    %p406 = scmp.le.s32.totalorder 2, %s11
    // Predicated region
    $region41: #{decoder_forward.4} parent=5 // pred_check
      %p407 = pneg %p406
    $region42: #{decoder_forward.4} parent=5 // pred_check_branch
      %409 = sbr.rel (%p407) target = $region44
    $region43: #{decoder_forward.4} parent=5 // pred_region
      %s410 = ssub.s32 %s11, 2
      // Predicated region
      $region45: #{decoder_forward.4} parent=43 // pred_check
        %p411 = pneg %p108
      $region46: #{decoder_forward.4} parent=43 // pred_check_branch
        %413 = sbr.rel (%p411) target = $region48
      $region47: #{decoder_forward.4} parent=43 // pred_region
        %p414 = scmp.lt.s32.totalorder %s22, 3
        %s415 = scalar_select %p414, %s22, 3
        %p416 = scmp.lt.s32.totalorder %s23, 0
        %s417 = scalar_select %p416, %s23, 0
        %s418 = sadd.s32 %s417, %s415
        %s419 = smul.addr %s418, 8
        %s420 = scalar_lea.vmem %s2, %s419
      $region48: #{decoder_forward.4} parent=43 // pred_fallthru
        _
      // Predicated region
      $region49: #{decoder_forward.4} parent=43 // pred_check
        %p421 = pneg %p136
      $region50: #{decoder_forward.4} parent=43 // pred_check_branch
        %423 = sbr.rel (%p421) target = $region52
      $region51: #{decoder_forward.4} parent=43 // pred_region
        %p424 = scmp.lt.s32.totalorder %s22, 3
        %s425 = scalar_select %p424, %s22, 3
        %p426 = scmp.lt.s32.totalorder %s23, 0
        %s427 = scalar_select %p426, %s23, 0
        %s428 = sadd.s32 %s427, %s425
        %s429 = smul.addr %s428, 8
        %s430 = scalar_lea.vmem %s3, %s429
      $region52: #{decoder_forward.4} parent=43 // pred_fallthru
        _
      // Predicated region
      $region53: #{decoder_forward.4} parent=43 // pred_check
        %p431 = pneg %p164
      $region54: #{decoder_forward.4} parent=43 // pred_check_branch
        %433 = sbr.rel (%p431) target = $region56
      $region55: #{decoder_forward.4} parent=43 // pred_region
        %p434 = scmp.lt.s32.totalorder %s22, 3
        %s435 = scalar_select %p434, %s22, 3
        %p436 = scmp.lt.s32.totalorder %s23, 0
        %s437 = scalar_select %p436, %s23, 0
        %s438 = sadd.s32 %s437, %s435
        %s439 = smul.addr %s438, 8
        %s440 = scalar_lea.vmem %s4, %s439
      $region56: #{decoder_forward.4} parent=43 // pred_fallthru
        _
    $region44: #{decoder_forward.4} parent=5 // pred_fallthru
      _
  $region6: #{decoder_forward.4} parent=0 // loop_footer
    %s15 = sadd.s32 1, %s11
  $region7: #{decoder_forward.4} parent=0 // loop_footer_branch
    %10 = sbr.rel target = $region3
  $region8: #{decoder_forward.4} parent=0 // loop_exit
    _

// kernel: decoder_forward.6
$region0: #{decoder_forward.6}
  #allocation0 [shape = 'u32[]', space=smem, size = 0x4, offset = 0x4, fixed_abs, tag = 'smem constant byte address 0x4 - core index']
  #allocation1 [shape = 'u32[144,128]{1,0:T(1,128)}', space=vmem, size = 0x12000, scoped, tag = 'internal scratch']
  %s0 = inlined_call_operand.vmem [shape: f32[4,16,32], index: 0, kind: input, shape index: {}]
  %s1 = inlined_call_operand.vmem [shape: f32[4,32,128], index: 1, kind: input, shape index: {}]
  %s2 = inlined_call_operand.vmem [shape: f32[4,16,128], index: 2, kind: output, shape index: {0}]
  %s3 = inlined_call_operand.hbm [shape: f32[4,1,16,1], index: 3, kind: output, shape index: {1}]
  %s4 = inlined_call_operand.hbm [shape: f32[4,1,16,1], index: 4, kind: output, shape index: {2}]
  %5 = xla_tuple %s2, %s3, %s4
  %s6 = sld [smem:[#allocation0]]
  $region57: #{decoder_forward.6} parent=0
    _
  %s8 = ssub.s32 1, %s6
  %s9 = scalar_select 0, %s8, %s6
  $region1: #{decoder_forward.6} parent=0
    #allocation2 [shape = 'u8[16384]{0}', space=vmem, size = 0x4000, scoped, tag = 'output window, operand 1']
    #allocation3 [shape = 's32[2]{0}', space=sflag, size = 0x8, scoped, tag = 'scoped memory for decoder_forward.6']
    #allocation4 [shape = 'u8[16384]{0}', space=vmem, size = 0x4000, scoped, tag = 'output window, operand 2']
    #allocation5 [shape = 's32[2]{0}', space=sflag, size = 0x8, scoped, tag = 'scoped memory for decoder_forward.6']
    %10 = vsyncpa [#allocation3], 0
    %s11 = scalar_lea.sflag [#allocation3], 1
    %12 = vsyncpa %s11, 0
    %13 = vsyncpa [#allocation5], 0
    %s14 = scalar_lea.sflag [#allocation5], 1
    %15 = vsyncpa %s14, 0
    loop: start=0, step=1, limit=6
    $region2: #{decoder_forward.6} parent=1 // loop_pre_header
      _
    $region3: #{decoder_forward.6} parent=1 // loop_header
      %s17 = sphi 0, %s21
      %p18 = scmp.ge.s32.totalorder %s17, 6
      %s24 = sphi 0, %s36
      %s25 = sphi 0, %s32
      %s26 = sphi 0, %s24
      %s27 = sphi 0, %s25
      %s28 = sphi 0, %s26
      %s29 = sphi 0, %s27
      %s39 = sphi 0, %s41
      %s42 = sphi 0, %s39
      %s43 = sphi 0, %s42
      %s59 = sphi 0, %s43
      %s67 = sphi 0, %s69
      %s70 = sphi 0, %s67
      %s71 = sphi 0, %s70
      %s87 = sphi 0, %s71
      %s95 = sphi 0, %s97
      %s98 = sphi 0, %s95
      %s99 = sphi 0, %s98
      %s115 = sphi 0, %s99
      %s123 = sphi 0, %s125
      %s126 = sphi 0, %s123
      %s127 = sphi 0, %s126
      %s143 = sphi 0, %s127
      %s151 = sphi 0, %s153
      %s154 = sphi 0, %s151
      %s155 = sphi 0, %s154
      %s171 = sphi 0, %s155
    $region4: #{decoder_forward.6} parent=1 // loop_header_branch
      %20 = sbr.rel (%p18) target = $region8
    $region5: #{decoder_forward.6} parent=1 // loop_body
      %s22 = ssub.s32 %s17, 1
      %s23 = ssub.s32 %s17, 2
      %s30 = sadd.s32 1, %s25
      %p31 = scmp.ge.s32.totalorder %s30, 1
      %s32 = scalar_select %p31, 0, %s30
      %s33 = sadd.s32 1, %s24
      %s34 = scalar_select %p31, %s33, %s24
      %p35 = scmp.ge.s32.totalorder %s34, 4
      %s36 = scalar_select %p35, 0, %s34
      %s37 = ssub.s32 %s24, %s36
      %p38 = scmp.eq.s32.totalorder %s37, 0
      %s40 = sadd.s32 %s39, 1
      %s41 = scalar_select %p38, %s39, %s40
      %p44 = pneg %p38
      %p45 = scmp.eq.s32.totalorder %s17, 3
      %p46 = por %p44, %p45
      %p47 = scmp.ne.s32.totalorder %s39, %s42
      %p48 = scmp.eq.s32.totalorder %s17, 0
      %p49 = por %p47, %p48
      %p50 = scmp.ne.s32.totalorder %s39, %s42
      %p51 = scmp.eq.s32.totalorder %s22, 3
      %p52 = por %p50, %p51
      %p53 = scmp.ne.s32.totalorder %s42, %s43
      %p54 = scmp.eq.s32.totalorder %s22, 0
      %p55 = por %p53, %p54
      %p56 = scmp.ne.s32.totalorder %s42, %s43
      %p57 = scmp.eq.s32.totalorder %s23, 3
      %p58 = por %p56, %p57
      %p60 = scmp.ne.s32.totalorder %s43, %s59
      %p61 = scmp.eq.s32.totalorder %s23, 0
      %p62 = por %p60, %p61
      %s63 = ssub.s32 %s24, %s36
      %s64 = ssub.s32 %s25, %s32
      %s65 = sor.u32 %s63, %s64
      %p66 = scmp.eq.s32.totalorder %s65, 0
      %s68 = sadd.s32 %s67, 1
      %s69 = scalar_select %p66, %s67, %s68
      %p72 = pneg %p66
      %p73 = scmp.eq.s32.totalorder %s17, 3
      %p74 = por %p72, %p73
      %p75 = scmp.ne.s32.totalorder %s67, %s70
      %p76 = scmp.eq.s32.totalorder %s17, 0
      %p77 = por %p75, %p76
      %p78 = scmp.ne.s32.totalorder %s67, %s70
      %p79 = scmp.eq.s32.totalorder %s22, 3
      %p80 = por %p78, %p79
      %p81 = scmp.ne.s32.totalorder %s70, %s71
      %p82 = scmp.eq.s32.totalorder %s22, 0
      %p83 = por %p81, %p82
      %p84 = scmp.ne.s32.totalorder %s70, %s71
      %p85 = scmp.eq.s32.totalorder %s23, 3
      %p86 = por %p84, %p85
      %p88 = scmp.ne.s32.totalorder %s71, %s87
      %p89 = scmp.eq.s32.totalorder %s23, 0
      %p90 = por %p88, %p89
      %s91 = ssub.s32 %s24, %s36
      %s92 = ssub.s32 %s25, %s32
      %s93 = sor.u32 %s91, %s92
      %p94 = scmp.eq.s32.totalorder %s93, 0
      %s96 = sadd.s32 %s95, 1
      %s97 = scalar_select %p94, %s95, %s96
      %p100 = pneg %p94
      %p101 = scmp.eq.s32.totalorder %s17, 3
      %p102 = por %p100, %p101
      %p103 = scmp.ne.s32.totalorder %s95, %s98
      %p104 = scmp.eq.s32.totalorder %s17, 0
      %p105 = por %p103, %p104
      %p106 = scmp.ne.s32.totalorder %s95, %s98
      %p107 = scmp.eq.s32.totalorder %s22, 3
      %p108 = por %p106, %p107
      %p109 = scmp.ne.s32.totalorder %s98, %s99
      %p110 = scmp.eq.s32.totalorder %s22, 0
      %p111 = por %p109, %p110
      %p112 = scmp.ne.s32.totalorder %s98, %s99
      %p113 = scmp.eq.s32.totalorder %s23, 3
      %p114 = por %p112, %p113
      %p116 = scmp.ne.s32.totalorder %s99, %s115
      %p117 = scmp.eq.s32.totalorder %s23, 0
      %p118 = por %p116, %p117
      %s119 = ssub.s32 %s24, %s36
      %s120 = ssub.s32 %s25, %s32
      %s121 = sor.u32 %s119, %s120
      %p122 = scmp.eq.s32.totalorder %s121, 0
      %s124 = sadd.s32 %s123, 1
      %s125 = scalar_select %p122, %s123, %s124
      %p128 = pneg %p122
      %p129 = scmp.eq.s32.totalorder %s17, 3
      %p130 = por %p128, %p129
      %p131 = scmp.ne.s32.totalorder %s123, %s126
      %p132 = scmp.eq.s32.totalorder %s17, 0
      %p133 = por %p131, %p132
      %p134 = scmp.ne.s32.totalorder %s123, %s126
      %p135 = scmp.eq.s32.totalorder %s22, 3
      %p136 = por %p134, %p135
      %p137 = scmp.ne.s32.totalorder %s126, %s127
      %p138 = scmp.eq.s32.totalorder %s22, 0
      %p139 = por %p137, %p138
      %p140 = scmp.ne.s32.totalorder %s126, %s127
      %p141 = scmp.eq.s32.totalorder %s23, 3
      %p142 = por %p140, %p141
      %p144 = scmp.ne.s32.totalorder %s127, %s143
      %p145 = scmp.eq.s32.totalorder %s23, 0
      %p146 = por %p144, %p145
      %s147 = ssub.s32 %s24, %s36
      %s148 = ssub.s32 %s25, %s32
      %s149 = sor.u32 %s147, %s148
      %p150 = scmp.eq.s32.totalorder %s149, 0
      %s152 = sadd.s32 %s151, 1
      %s153 = scalar_select %p150, %s151, %s152
      %p156 = pneg %p150
      %p157 = scmp.eq.s32.totalorder %s17, 3
      %p158 = por %p156, %p157
      %p159 = scmp.ne.s32.totalorder %s151, %s154
      %p160 = scmp.eq.s32.totalorder %s17, 0
      %p161 = por %p159, %p160
      %p162 = scmp.ne.s32.totalorder %s151, %s154
      %p163 = scmp.eq.s32.totalorder %s22, 3
      %p164 = por %p162, %p163
      %p165 = scmp.ne.s32.totalorder %s154, %s155
      %p166 = scmp.eq.s32.totalorder %s22, 0
      %p167 = por %p165, %p166
      %p168 = scmp.ne.s32.totalorder %s154, %s155
      %p169 = scmp.eq.s32.totalorder %s23, 3
      %p170 = por %p168, %p169
      %p172 = scmp.ne.s32.totalorder %s155, %s171
      %p173 = scmp.eq.s32.totalorder %s23, 0
      %p174 = por %p172, %p173
      %p175 = scmp.le.s32.totalorder 1, %s17
      %p176 = scmp.lt.s32.totalorder %s17, 5
      %p177 = pnand %p175, %p176
      %p178 = pneg %p177
      // Predicated region
      $region9: #{decoder_forward.6} parent=5 // pred_check
        _
      $region10: #{decoder_forward.6} parent=5 // pred_check_branch
        %180 = sbr.rel (%p177) target = $region12
      $region11: #{decoder_forward.6} parent=5 // pred_region
        %s181 = ssub.s32 %s17, 1
      $region12: #{decoder_forward.6} parent=5 // pred_fallthru
        _
      %p182 = scmp.lt.s32.totalorder %s17, 4
      // Predicated region
      $region13: #{decoder_forward.6} parent=5 // pred_check
        %p183 = pneg %p182
      $region14: #{decoder_forward.6} parent=5 // pred_check_branch
        %185 = sbr.rel (%p183) target = $region16
      $region15: #{decoder_forward.6} parent=5 // pred_region
        // Predicated region
        $region17: #{decoder_forward.6} parent=15 // pred_check
          %p186 = pneg %p49
        $region18: #{decoder_forward.6} parent=15 // pred_check_branch
          %188 = sbr.rel (%p186) target = $region20
        $region19: #{decoder_forward.6} parent=15 // pred_region
          %p189 = scmp.lt.s32.totalorder %s24, 3
          %s190 = scalar_select %p189, %s24, 3
          %s191 = smul.addr %s190, 2
          %s192 = smul.addr %s191, 8
          %s193 = scalar_lea.vmem %s0, %s192
        $region20: #{decoder_forward.6} parent=15 // pred_fallthru
          _
        // Predicated region
        $region21: #{decoder_forward.6} parent=15 // pred_check
          %p194 = pneg %p77
        $region22: #{decoder_forward.6} parent=15 // pred_check_branch
          %196 = sbr.rel (%p194) target = $region24
        $region23: #{decoder_forward.6} parent=15 // pred_region
          %p197 = scmp.lt.s32.totalorder %s24, 3
          %s198 = scalar_select %p197, %s24, 3
          %p199 = scmp.lt.s32.totalorder %s25, 0
          %s200 = scalar_select %p199, %s25, 0
          %s201 = smul.addr %s198, 4
          %s202 = sadd.s32 %s200, %s201
          %s203 = smul.addr %s202, 8
          %s204 = scalar_lea.vmem %s1, %s203
        $region24: #{decoder_forward.6} parent=15 // pred_fallthru
          _
      $region16: #{decoder_forward.6} parent=5 // pred_fallthru
        _
      %p205 = scmp.le.s32.totalorder 1, %s17
      %p206 = scmp.lt.s32.totalorder %s17, 5
      %p207 = pnand %p205, %p206
      %p208 = pneg %p207
      // Predicated region
      $region25: #{decoder_forward.6} parent=5 // pred_check
        _
      $region26: #{decoder_forward.6} parent=5 // pred_check_branch
        %210 = sbr.rel (%p207) target = $region28
      $region27: #{decoder_forward.6} parent=5 // pred_region
        %s211 = ssub.s32 %s17, 1
        %p212 = scmp.lt.s32.totalorder %s26, 3
        %s213 = scalar_select %p212, %s26, 3
        %s214 = smul.addr %s213, 2
        %s215 = smul.addr %s214, 8
        %s216 = scalar_lea.vmem %s0, %s215
        %p217 = pneg %p55
        %p218 = pneg %p52
        %p219 = scmp.lt.s32.totalorder %s26, 3
        %s220 = scalar_select %p219, %s26, 3
        %p221 = scmp.lt.s32.totalorder %s27, 0
        %s222 = scalar_select %p221, %s27, 0
        %s223 = smul.addr %s220, 4
        %s224 = sadd.s32 %s222, %s223
        %s225 = smul.addr %s224, 8
        %s226 = scalar_lea.vmem %s1, %s225
        %p227 = pneg %p83
        %p228 = pneg %p80
        %p229 = pneg %p111
        %p230 = pneg %p108
        %p231 = scmp.lt.s32.totalorder %s26, 3
        %s232 = scalar_select %p231, %s26, 3
        %p233 = scmp.lt.s32.totalorder %s27, 0
        %s234 = scalar_select %p233, %s27, 0
        %s235 = smul.addr %s232, 2
        %s236 = sadd.s32 %s234, %s235
        %s237 = smul.addr %s236, 8
        %s238 = scalar_lea.vmem %s2, %s237
        %p239 = pneg %p139
        %p240 = pneg %p136
        %s241 = sand.u32 %s126, 1
        %s242 = scalar_lea.sflag [#allocation3], %s241
        %s243 = sand.u32 %s126, 1
        %s244 = smul.addr %s243, 16
        %s245 = scalar_lea.vmem [#allocation2], %s244
        %p246 = pneg %p167
        %p247 = pneg %p164
        %s248 = sand.u32 %s154, 1
        %s249 = scalar_lea.sflag [#allocation5], %s248
        %s250 = sand.u32 %s154, 1
        %s251 = smul.addr %s250, 16
        %s252 = scalar_lea.vmem [#allocation4], %s251
        %p253 = scmp.lt.s32.totalorder %s26, 3
        %s254 = scalar_select %p253, %s26, 3
        %s255 = smul.addr %s254, 2
        %s256 = smul.addr %s255, 8
        %s257 = scalar_lea.vmem %s0, %s256
        %p258 = scmp.lt.s32.totalorder %s26, 3
        %s259 = scalar_select %p258, %s26, 3
        %p260 = scmp.lt.s32.totalorder %s27, 0
        %s261 = scalar_select %p260, %s27, 0
        %s262 = smul.addr %s259, 4
        %s263 = sadd.s32 %s261, %s262
        %s264 = smul.addr %s263, 8
        %s265 = scalar_lea.vmem %s1, %s264
        %p266 = scmp.lt.s32.totalorder %s26, 3
        %s267 = scalar_select %p266, %s26, 3
        %p268 = scmp.lt.s32.totalorder %s27, 0
        %s269 = scalar_select %p268, %s27, 0
        %s270 = smul.addr %s267, 2
        %s271 = sadd.s32 %s269, %s270
        %s272 = smul.addr %s271, 8
        %s273 = scalar_lea.vmem %s2, %s272
        %v274 = vld [vmem:[%s257] sm:$0xff]
        %v275 = vld [vmem:[%s257 + $0x8] sm:$0xff]
        %v276 = vld [vmem:[%s265] sm:$0xff]
        %v277 = vld [vmem:[%s265 + $0x8] sm:$0xff]
        %v278 = vld [vmem:[%s265 + $0x10] sm:$0xff]
        %v279 = vld [vmem:[%s265 + $0x18] sm:$0xff]
        %vm280 = vcmask 261120
        %v282 = vsel %vm280, %v274, 0
        %v285 = vsel %vm280, %v275, 0
        %287 = vmatprep.subr.mxu0 0.0
        %288 = vmatpush1.msra.mxu0 %v276
        %289 = vmatprep.subr.mxu0 0.0
        %290 = vmatpush1.msra.mxu0 %v277
        %291 = vmatprep.subr.mxu0 0.0
        %292 = vmatpush1.msra.mxu0 %v278
        %293 = vmatprep.subr.mxu0 0.0
        %294 = vmatpush1.msra.mxu0 %v279
        %295 = vmatprep.subr.mxu0 0.0
        %296 = vmatpush1.msra.mxu0 0.0
        %297 = vmatprep.subr.mxu0 0.0
        %298 = vmatpush1.msra.mxu0 0.0
        %299 = vmatprep.subr.mxu0 0.0
        %300 = vmatpush1.msra.mxu0 0.0
        %301 = vmatprep.subr.mxu0 0.0
        %302 = vmatpush1.msra.mxu0 0.0
        %303 = vmatprep.subr.mxu0 0.0
        %304 = vmatpush1.msra.mxu0 0.0
        %305 = vmatprep.subr.mxu0 0.0
        %306 = vmatpush1.msra.mxu0 0.0
        %307 = vmatprep.subr.mxu0 0.0
        %308 = vmatpush1.msra.mxu0 0.0
        %309 = vmatprep.subr.mxu0 0.0
        %310 = vmatpush1.msra.mxu0 0.0
        %311 = vmatprep.subr.mxu0 0.0
        %312 = vmatpush1.msra.mxu0 0.0
        %313 = vmatprep.subr.mxu0 0.0
        %314 = vmatpush1.msra.mxu0 0.0
        %315 = vmatprep.subr.mxu0 0.0
        %316 = vmatpush1.msra.mxu0 0.0
        %317 = vmatprep.subr.mxu0 0.0
        %318 = vmatpush1.msra.mxu0 0.0
        %319 = vmatprep.subr.mxu0 0.0
        %320 = vmatpush1.msra.mxu0 0.0
        %321 = vmatprep.subr.mxu0 0.0
        %322 = vmatpush1.msra.mxu0 0.0
        %323 = vmatprep.subr.mxu0 0.0
        %324 = vmatpush1.msra.mxu0 0.0
        %325 = vmatprep.subr.mxu0 0.0
        %326 = vmatpush1.msra.mxu0 0.0
        %327 = vmatprep.subr.mxu0 0.0
        %328 = vmatpush1.msra.mxu0 0.0
        %329 = vmatprep.subr.mxu0 0.0
        %330 = vmatpush1.msra.mxu0 0.0
        %331 = vmatprep.subr.mxu0 0.0
        %332 = vmatpush1.msra.mxu0 0.0
        %333 = vmatprep.subr.mxu0 0.0
        %334 = vmatpush1.msra.mxu0 0.0
        %335 = vmatprep.subr.mxu0 0.0
        %336 = vmatpush1.msra.mxu0 0.0
        %337 = vmatprep.subr.mxu0 0.0
        %338 = vmatpush1.msra.mxu0 0.0
        %339 = vmatprep.subr.mxu0 0.0
        %340 = vmatpush1.msra.mxu0 0.0
        %341 = vmatprep.subr.mxu0 0.0
        %342 = vmatpush1.msra.mxu0 0.0
        %343 = vmatprep.subr.mxu0 0.0
        %344 = vmatpush1.msra.mxu0 0.0
        %345 = vmatprep.subr.mxu0 0.0
        %346 = vmatpush1.msra.mxu0 0.0
        %347 = vmatprep.subr.mxu0 0.0
        %348 = vmatpush1.msra.mxu0 0.0
        %349 = vmatprep.subr.mxu0 0.0
        %350 = vmatpush1.msra.mxu0 0.0
        %351 = vmatprep.mubr.f32.mxu0 0.0
        %352 = vmatmul.mubr.f32.gmra.mrb[0].mxu0 %v282
        %v353 = vpop.f32.mrb[0].mxu0
        %v354 = vadd.f32 0.0, %v353
        %v355 = vpop.f32.mrb[0].mxu0
        %356 = vmatprep.mubr.f32.mxu0 0.0
        %357 = vmatmul.mubr.f32.gmra.mrb[0].mxu0 %v285
        %v358 = vpop.f32.mrb[0].mxu0
        %v359 = vadd.f32 0.0, %v358
        %v360 = vpop.f32.mrb[0].mxu0
        %361 = vdwg.mxu0
        %362 = vst [vmem:[%s273] sm:$0xff] %v354
        %363 = vst [vmem:[%s273 + $0x8] sm:$0xff] %v359
        %364 = vadd.xlane.f32.xlu0 %v354
        %v365 = vpop.xlane.xlu0 %364
        %366 = vadd.xlane.f32.xlu0 %v359
        %v367 = vpop.xlane.xlu0 %366
        %vm368 = vcmask 7168
        %369 = vst.msk [vmem:[%s245] sm:$0xff] %vm368, %v365
        %370 = vst.msk [vmem:[%s245 + $0x8] sm:$0xff] %vm368, %v367
        %v371 = vmul.f32 %v354, %v354
        %v372 = vmul.f32 %v359, %v359
        %373 = vadd.xlane.f32.xlu0 %v371
        %v374 = vpop.xlane.xlu0 %373
        %375 = vadd.xlane.f32.xlu0 %v372
        %v376 = vpop.xlane.xlu0 %375
        %377 = vst.msk [vmem:[%s252] sm:$0xff] %vm368, %v374
        %378 = vst.msk [vmem:[%s252 + $0x8] sm:$0xff] %vm368, %v376
        %p379 = scmp.lt.s32.totalorder %s26, 3
        %s380 = scalar_select %p379, %s26, 3
        %p381 = scmp.lt.s32.totalorder %s27, 0
        %s382 = scalar_select %p381, %s27, 0
        %s383 = smul.addr %s380, 2
        %s384 = sadd.s32 %s382, %s383
        %s385 = smul.addr %s384, 8
        %s386 = scalar_lea.vmem %s2, %s385
        %s387 = sand.u32 %s126, 1
        %s388 = scalar_lea.sflag [#allocation3], %s387
        %s389 = sand.u32 %s126, 1
        %s390 = smul.addr %s389, 16
        %s391 = scalar_lea.vmem [#allocation2], %s390
        %s392 = sand.u32 %s154, 1
        %s393 = scalar_lea.sflag [#allocation5], %s392
        %s394 = sand.u32 %s154, 1
        %s395 = smul.addr %s394, 16
        %s396 = scalar_lea.vmem [#allocation4], %s395
        // Predicated region
        $region29: #{decoder_forward.6} parent=27 // pred_check
          %p397 = pneg %p108
        $region30: #{decoder_forward.6} parent=27 // pred_check_branch
          %399 = sbr.rel (%p397) target = $region32
        $region31: #{decoder_forward.6} parent=27 // pred_region
          _
        $region32: #{decoder_forward.6} parent=27 // pred_fallthru
          _
        // Predicated region
        $region33: #{decoder_forward.6} parent=27 // pred_check
          %p400 = pneg %p136
        $region34: #{decoder_forward.6} parent=27 // pred_check_branch
          %402 = sbr.rel (%p400) target = $region36
        $region35: #{decoder_forward.6} parent=27 // pred_region
          %s404 = ssub.s32 256, 256
          %405 = vsyncadd %s388, %s404
          %s406 = smul.addr %s27, 2
          %s407 = smul.addr %s26, 2
          %s408 = sadd.s32 %s406, %s407
          %s409 = smul.addr %s408, 128
          %s410 = scalar_lea.hbm %s3, %s409
          %s411 = sshll.u32 %s391, 4
          %s412 = int_to_ptr.vmem [resolvable:$true] %s411
          %417 = dma.vmem_to_hbm [thread:$0]  %s412, 256, %s410, %s388, 128, 128, 8
        $region36: #{decoder_forward.6} parent=27 // pred_fallthru
          _
        // Predicated region
        $region37: #{decoder_forward.6} parent=27 // pred_check
          %p418 = pneg %p164
        $region38: #{decoder_forward.6} parent=27 // pred_check_branch
          %420 = sbr.rel (%p418) target = $region40
        $region39: #{decoder_forward.6} parent=27 // pred_region
          %s422 = ssub.s32 256, 256
          %423 = vsyncadd %s393, %s422
          %s424 = smul.addr %s27, 2
          %s425 = smul.addr %s26, 2
          %s426 = sadd.s32 %s424, %s425
          %s427 = smul.addr %s426, 128
          %s428 = scalar_lea.hbm %s4, %s427
          %s429 = sshll.u32 %s396, 4
          %s430 = int_to_ptr.vmem [resolvable:$true] %s429
          %435 = dma.vmem_to_hbm [thread:$0]  %s430, 256, %s428, %s393, 128, 128, 8
        $region40: #{decoder_forward.6} parent=27 // pred_fallthru
          _
      $region28: #{decoder_forward.6} parent=5 // pred_fallthru
        _
      %p436 = scmp.le.s32.totalorder 2, %s17
      // Predicated region
      $region41: #{decoder_forward.6} parent=5 // pred_check
        %p437 = pneg %p436
      $region42: #{decoder_forward.6} parent=5 // pred_check_branch
        %439 = sbr.rel (%p437) target = $region44
      $region43: #{decoder_forward.6} parent=5 // pred_region
        %s440 = ssub.s32 %s17, 2
        // Predicated region
        $region45: #{decoder_forward.6} parent=43 // pred_check
          %p441 = pneg %p114
        $region46: #{decoder_forward.6} parent=43 // pred_check_branch
          %443 = sbr.rel (%p441) target = $region48
        $region47: #{decoder_forward.6} parent=43 // pred_region
          %p444 = scmp.lt.s32.totalorder %s28, 3
          %s445 = scalar_select %p444, %s28, 3
          %p446 = scmp.lt.s32.totalorder %s29, 0
          %s447 = scalar_select %p446, %s29, 0
          %s448 = smul.addr %s445, 2
          %s449 = sadd.s32 %s447, %s448
          %s450 = smul.addr %s449, 8
          %s451 = scalar_lea.vmem %s2, %s450
        $region48: #{decoder_forward.6} parent=43 // pred_fallthru
          _
        // Predicated region
        $region49: #{decoder_forward.6} parent=43 // pred_check
          %p452 = pneg %p142
        $region50: #{decoder_forward.6} parent=43 // pred_check_branch
          %454 = sbr.rel (%p452) target = $region52
        $region51: #{decoder_forward.6} parent=43 // pred_region
          %s455 = sand.u32 %s127, 1
          %s456 = scalar_lea.sflag [#allocation3], %s455
          %s457 = sand.u32 %s127, 1
          %s458 = smul.addr %s457, 16
          %s459 = scalar_lea.vmem [#allocation2], %s458
          %460 = dma.done %s456, 256
        $region52: #{decoder_forward.6} parent=43 // pred_fallthru
          _
        // Predicated region
        $region53: #{decoder_forward.6} parent=43 // pred_check
          %p461 = pneg %p170
        $region54: #{decoder_forward.6} parent=43 // pred_check_branch
          %463 = sbr.rel (%p461) target = $region56
        $region55: #{decoder_forward.6} parent=43 // pred_region
          %s464 = sand.u32 %s155, 1
          %s465 = scalar_lea.sflag [#allocation5], %s464
          %s466 = sand.u32 %s155, 1
          %s467 = smul.addr %s466, 16
          %s468 = scalar_lea.vmem [#allocation4], %s467
          %469 = dma.done %s465, 256
        $region56: #{decoder_forward.6} parent=43 // pred_fallthru
          _
      $region44: #{decoder_forward.6} parent=5 // pred_fallthru
        _
    $region6: #{decoder_forward.6} parent=1 // loop_footer
      %s21 = sadd.s32 1, %s17
    $region7: #{decoder_forward.6} parent=1 // loop_footer_branch
      %16 = sbr.rel target = $region3
    $region8: #{decoder_forward.6} parent=1 // loop_exit
      _
    %470 = vsyncpa [#allocation3], 1
    %s471 = scalar_lea.sflag [#allocation3], 1
    %472 = vsyncpa %s471, 1
    %473 = vsyncpa [#allocation5], 1
    %s474 = scalar_lea.sflag [#allocation5], 1
    %475 = vsyncpa %s474, 1

// kernel: decoder_forward.7
$region0: #{decoder_forward.7}
  #allocation0 [shape = 'u32[]', space=smem, size = 0x4, offset = 0x4, fixed_abs, tag = 'smem constant byte address 0x4 - core index']
  #allocation1 [shape = 'u32[144,128]{1,0:T(1,128)}', space=vmem, size = 0x12000, scoped, tag = 'internal scratch']
  #allocation2 [shape = 'f32[1]{0:T(128)S(6)}', space=smem, size = 0x200, scoped, tag = 'scoped memory for decoder_forward.7']
  %s0 = inlined_call_operand.vmem [shape: f32[2,16,256], index: 0, kind: input, shape index: {}, may-alias: {0,1}]
  %s1 = inlined_call_operand.vmem [shape: f32[2,16,256], index: 1, kind: input, shape index: {}, may-alias: {0,1}]
  %s2 = inlined_call_operand.vmem [shape: f32[16,16], index: 2, kind: input, shape index: {}]
  %s3 = inlined_call_operand.vmem [shape: f32[16,1], index: 3, kind: input, shape index: {}]
  %s4 = inlined_call_operand.vmem [shape: f32[16,16], index: 4, kind: input, shape index: {}]
  %s5 = inlined_call_operand.vmem [shape: f32[16,1], index: 5, kind: input, shape index: {}]
  %s6 = inlined_call_operand.<no memory space> [shape: f32[1], index: 6, kind: input, shape index: {}]
  %s7 = inlined_call_operand.vmem [shape: f32[2,16,256], index: 7, kind: output, shape index: {}]
  %s8 = sld [smem:[#allocation0]]
  $region61: #{decoder_forward.7} parent=0
    _
  %s10 = ssub.s32 1, %s8
  %s11 = scalar_select 0, %s10, %s8
  %12 = sst [smem:[#allocation2]] %s6
  loop: start=0, step=1, limit=4
  $region2: #{decoder_forward.7} parent=0 // loop_pre_header
    _
  $region3: #{decoder_forward.7} parent=0 // loop_header
    %s14 = sphi 0, %s18
    %p15 = scmp.ge.s32.totalorder %s14, 4
    %s21 = sphi 0, %s33
    %s22 = sphi 0, %s29
    %s23 = sphi 0, %s21
    %s24 = sphi 0, %s22
    %s25 = sphi 0, %s23
    %s26 = sphi 0, %s24
    %s38 = sphi 0, %s40
    %s41 = sphi 0, %s38
    %s42 = sphi 0, %s41
    %s58 = sphi 0, %s42
    %s64 = sphi 0, %s66
    %s67 = sphi 0, %s64
    %s68 = sphi 0, %s67
    %s84 = sphi 0, %s68
    %s88 = sphi 0, %s88
    %s90 = sphi 0, %s88
    %s91 = sphi 0, %s90
    %s105 = sphi 0, %s91
    %s109 = sphi 0, %s109
    %s111 = sphi 0, %s109
    %s112 = sphi 0, %s111
    %s126 = sphi 0, %s112
    %s130 = sphi 0, %s130
    %s132 = sphi 0, %s130
    %s133 = sphi 0, %s132
    %s147 = sphi 0, %s133
    %s151 = sphi 0, %s151
    %s153 = sphi 0, %s151
    %s154 = sphi 0, %s153
    %s168 = sphi 0, %s154
    %s172 = sphi 0, %s172
    %s174 = sphi 0, %s172
    %s175 = sphi 0, %s174
    %s189 = sphi 0, %s175
    %s197 = sphi 0, %s199
    %s200 = sphi 0, %s197
    %s201 = sphi 0, %s200
    %s217 = sphi 0, %s201
  $region4: #{decoder_forward.7} parent=0 // loop_header_branch
    %17 = sbr.rel (%p15) target = $region8
  $region5: #{decoder_forward.7} parent=0 // loop_body
    %s19 = ssub.s32 %s14, 1
    %s20 = ssub.s32 %s14, 2
    %s27 = sadd.s32 1, %s22
    %p28 = scmp.ge.s32.totalorder %s27, 1
    %s29 = scalar_select %p28, 0, %s27
    %s30 = sadd.s32 1, %s21
    %s31 = scalar_select %p28, %s30, %s21
    %p32 = scmp.ge.s32.totalorder %s31, 2
    %s33 = scalar_select %p32, 0, %s31
    %s34 = ssub.s32 %s21, %s33
    %s35 = ssub.s32 %s22, %s29
    %s36 = sor.u32 %s34, %s35
    %p37 = scmp.eq.s32.totalorder %s36, 0
    %s39 = sadd.s32 %s38, 1
    %s40 = scalar_select %p37, %s38, %s39
    %p43 = pneg %p37
    %p44 = scmp.eq.s32.totalorder %s14, 1
    %p45 = por %p43, %p44
    %p46 = scmp.ne.s32.totalorder %s38, %s41
    %p47 = scmp.eq.s32.totalorder %s14, 0
    %p48 = por %p46, %p47
    %p49 = scmp.ne.s32.totalorder %s38, %s41
    %p50 = scmp.eq.s32.totalorder %s19, 1
    %p51 = por %p49, %p50
    %p52 = scmp.ne.s32.totalorder %s41, %s42
    %p53 = scmp.eq.s32.totalorder %s19, 0
    %p54 = por %p52, %p53
    %p55 = scmp.ne.s32.totalorder %s41, %s42
    %p56 = scmp.eq.s32.totalorder %s20, 1
    %p57 = por %p55, %p56
    %p59 = scmp.ne.s32.totalorder %s42, %s58
    %p60 = scmp.eq.s32.totalorder %s20, 0
    %p61 = por %p59, %p60
    %s62 = ssub.s32 %s21, %s33
    %p63 = scmp.eq.s32.totalorder %s62, 0
    %s65 = sadd.s32 %s64, 1
    %s66 = scalar_select %p63, %s64, %s65
    %p69 = pneg %p63
    %p70 = scmp.eq.s32.totalorder %s14, 1
    %p71 = por %p69, %p70
    %p72 = scmp.ne.s32.totalorder %s64, %s67
    %p73 = scmp.eq.s32.totalorder %s14, 0
    %p74 = por %p72, %p73
    %p75 = scmp.ne.s32.totalorder %s64, %s67
    %p76 = scmp.eq.s32.totalorder %s19, 1
    %p77 = por %p75, %p76
    %p78 = scmp.ne.s32.totalorder %s67, %s68
    %p79 = scmp.eq.s32.totalorder %s19, 0
    %p80 = por %p78, %p79
    %p81 = scmp.ne.s32.totalorder %s67, %s68
    %p82 = scmp.eq.s32.totalorder %s20, 1
    %p83 = por %p81, %p82
    %p85 = scmp.ne.s32.totalorder %s68, %s84
    %p86 = scmp.eq.s32.totalorder %s20, 0
    %p87 = por %p85, %p86
    %s89 = sadd.s32 %s88, 1
    %p92 = scmp.eq.s32.totalorder %s14, 1
    %p93 = scmp.ne.s32.totalorder %s88, %s90
    %p94 = scmp.eq.s32.totalorder %s14, 0
    %p95 = por %p93, %p94
    %p96 = scmp.ne.s32.totalorder %s88, %s90
    %p97 = scmp.eq.s32.totalorder %s19, 1
    %p98 = por %p96, %p97
    %p99 = scmp.ne.s32.totalorder %s90, %s91
    %p100 = scmp.eq.s32.totalorder %s19, 0
    %p101 = por %p99, %p100
    %p102 = scmp.ne.s32.totalorder %s90, %s91
    %p103 = scmp.eq.s32.totalorder %s20, 1
    %p104 = por %p102, %p103
    %p106 = scmp.ne.s32.totalorder %s91, %s105
    %p107 = scmp.eq.s32.totalorder %s20, 0
    %p108 = por %p106, %p107
    %s110 = sadd.s32 %s109, 1
    %p113 = scmp.eq.s32.totalorder %s14, 1
    %p114 = scmp.ne.s32.totalorder %s109, %s111
    %p115 = scmp.eq.s32.totalorder %s14, 0
    %p116 = por %p114, %p115
    %p117 = scmp.ne.s32.totalorder %s109, %s111
    %p118 = scmp.eq.s32.totalorder %s19, 1
    %p119 = por %p117, %p118
    %p120 = scmp.ne.s32.totalorder %s111, %s112
    %p121 = scmp.eq.s32.totalorder %s19, 0
    %p122 = por %p120, %p121
    %p123 = scmp.ne.s32.totalorder %s111, %s112
    %p124 = scmp.eq.s32.totalorder %s20, 1
    %p125 = por %p123, %p124
    %p127 = scmp.ne.s32.totalorder %s112, %s126
    %p128 = scmp.eq.s32.totalorder %s20, 0
    %p129 = por %p127, %p128
    %s131 = sadd.s32 %s130, 1
    %p134 = scmp.eq.s32.totalorder %s14, 1
    %p135 = scmp.ne.s32.totalorder %s130, %s132
    %p136 = scmp.eq.s32.totalorder %s14, 0
    %p137 = por %p135, %p136
    %p138 = scmp.ne.s32.totalorder %s130, %s132
    %p139 = scmp.eq.s32.totalorder %s19, 1
    %p140 = por %p138, %p139
    %p141 = scmp.ne.s32.totalorder %s132, %s133
    %p142 = scmp.eq.s32.totalorder %s19, 0
    %p143 = por %p141, %p142
    %p144 = scmp.ne.s32.totalorder %s132, %s133
    %p145 = scmp.eq.s32.totalorder %s20, 1
    %p146 = por %p144, %p145
    %p148 = scmp.ne.s32.totalorder %s133, %s147
    %p149 = scmp.eq.s32.totalorder %s20, 0
    %p150 = por %p148, %p149
    %s152 = sadd.s32 %s151, 1
    %p155 = scmp.eq.s32.totalorder %s14, 1
    %p156 = scmp.ne.s32.totalorder %s151, %s153
    %p157 = scmp.eq.s32.totalorder %s14, 0
    %p158 = por %p156, %p157
    %p159 = scmp.ne.s32.totalorder %s151, %s153
    %p160 = scmp.eq.s32.totalorder %s19, 1
    %p161 = por %p159, %p160
    %p162 = scmp.ne.s32.totalorder %s153, %s154
    %p163 = scmp.eq.s32.totalorder %s19, 0
    %p164 = por %p162, %p163
    %p165 = scmp.ne.s32.totalorder %s153, %s154
    %p166 = scmp.eq.s32.totalorder %s20, 1
    %p167 = por %p165, %p166
    %p169 = scmp.ne.s32.totalorder %s154, %s168
    %p170 = scmp.eq.s32.totalorder %s20, 0
    %p171 = por %p169, %p170
    %s173 = sadd.s32 %s172, 1
    %p176 = scmp.eq.s32.totalorder %s14, 1
    %p177 = scmp.ne.s32.totalorder %s172, %s174
    %p178 = scmp.eq.s32.totalorder %s14, 0
    %p179 = por %p177, %p178
    %p180 = scmp.ne.s32.totalorder %s172, %s174
    %p181 = scmp.eq.s32.totalorder %s19, 1
    %p182 = por %p180, %p181
    %p183 = scmp.ne.s32.totalorder %s174, %s175
    %p184 = scmp.eq.s32.totalorder %s19, 0
    %p185 = por %p183, %p184
    %p186 = scmp.ne.s32.totalorder %s174, %s175
    %p187 = scmp.eq.s32.totalorder %s20, 1
    %p188 = por %p186, %p187
    %p190 = scmp.ne.s32.totalorder %s175, %s189
    %p191 = scmp.eq.s32.totalorder %s20, 0
    %p192 = por %p190, %p191
    %s193 = ssub.s32 %s21, %s33
    %s194 = ssub.s32 %s22, %s29
    %s195 = sor.u32 %s193, %s194
    %p196 = scmp.eq.s32.totalorder %s195, 0
    %s198 = sadd.s32 %s197, 1
    %s199 = scalar_select %p196, %s197, %s198
    %p202 = pneg %p196
    %p203 = scmp.eq.s32.totalorder %s14, 1
    %p204 = por %p202, %p203
    %p205 = scmp.ne.s32.totalorder %s197, %s200
    %p206 = scmp.eq.s32.totalorder %s14, 0
    %p207 = por %p205, %p206
    %p208 = scmp.ne.s32.totalorder %s197, %s200
    %p209 = scmp.eq.s32.totalorder %s19, 1
    %p210 = por %p208, %p209
    %p211 = scmp.ne.s32.totalorder %s200, %s201
    %p212 = scmp.eq.s32.totalorder %s19, 0
    %p213 = por %p211, %p212
    %p214 = scmp.ne.s32.totalorder %s200, %s201
    %p215 = scmp.eq.s32.totalorder %s20, 1
    %p216 = por %p214, %p215
    %p218 = scmp.ne.s32.totalorder %s201, %s217
    %p219 = scmp.eq.s32.totalorder %s20, 0
    %p220 = por %p218, %p219
    %p221 = scmp.le.s32.totalorder 1, %s14
    %p222 = scmp.lt.s32.totalorder %s14, 3
    %p223 = pnand %p221, %p222
    %p224 = pneg %p223
    // Predicated region
    $region9: #{decoder_forward.7} parent=5 // pred_check
      _
    $region10: #{decoder_forward.7} parent=5 // pred_check_branch
      %226 = sbr.rel (%p223) target = $region12
    $region11: #{decoder_forward.7} parent=5 // pred_region
      %s227 = ssub.s32 %s14, 1
      // Predicated region
      $region13: #{decoder_forward.7} parent=11 // pred_check
        %p228 = pneg %p101
      $region14: #{decoder_forward.7} parent=11 // pred_check_branch
        %230 = sbr.rel (%p228) target = $region16
      $region15: #{decoder_forward.7} parent=11 // pred_region
        _
      $region16: #{decoder_forward.7} parent=11 // pred_fallthru
        _
      // Predicated region
      $region17: #{decoder_forward.7} parent=11 // pred_check
        %p231 = pneg %p122
      $region18: #{decoder_forward.7} parent=11 // pred_check_branch
        %233 = sbr.rel (%p231) target = $region20
      $region19: #{decoder_forward.7} parent=11 // pred_region
        _
      $region20: #{decoder_forward.7} parent=11 // pred_fallthru
        _
      // Predicated region
      $region21: #{decoder_forward.7} parent=11 // pred_check
        %p234 = pneg %p143
      $region22: #{decoder_forward.7} parent=11 // pred_check_branch
        %236 = sbr.rel (%p234) target = $region24
      $region23: #{decoder_forward.7} parent=11 // pred_region
        _
      $region24: #{decoder_forward.7} parent=11 // pred_fallthru
        _
      // Predicated region
      $region25: #{decoder_forward.7} parent=11 // pred_check
        %p237 = pneg %p164
      $region26: #{decoder_forward.7} parent=11 // pred_check_branch
        %239 = sbr.rel (%p237) target = $region28
      $region27: #{decoder_forward.7} parent=11 // pred_region
        _
      $region28: #{decoder_forward.7} parent=11 // pred_fallthru
        _
      // Predicated region
      $region29: #{decoder_forward.7} parent=11 // pred_check
        %p240 = pneg %p185
      $region30: #{decoder_forward.7} parent=11 // pred_check_branch
        %242 = sbr.rel (%p240) target = $region32
      $region31: #{decoder_forward.7} parent=11 // pred_region
        _
      $region32: #{decoder_forward.7} parent=11 // pred_fallthru
        _
    $region12: #{decoder_forward.7} parent=5 // pred_fallthru
      _
    %p243 = scmp.lt.s32.totalorder %s14, 2
    // Predicated region
    $region33: #{decoder_forward.7} parent=5 // pred_check
      %p244 = pneg %p243
    $region34: #{decoder_forward.7} parent=5 // pred_check_branch
      %246 = sbr.rel (%p244) target = $region36
    $region35: #{decoder_forward.7} parent=5 // pred_region
      // Predicated region
      $region37: #{decoder_forward.7} parent=35 // pred_check
        %p247 = pneg %p48
      $region38: #{decoder_forward.7} parent=35 // pred_check_branch
        %249 = sbr.rel (%p247) target = $region40
      $region39: #{decoder_forward.7} parent=35 // pred_region
        %s250 = smul.u32 2, %s22
        %p251 = scmp.lt.s32.totalorder %s21, 1
        %s252 = scalar_select %p251, %s21, 1
        %p253 = scmp.lt.s32.totalorder %s250, 1
        %s254 = scalar_select %p253, %s250, 1
        %s255 = smul.addr %s252, 4
        %s256 = sadd.s32 %s254, %s255
        %s257 = smul.addr %s256, 8
        %s258 = scalar_lea.vmem %s0, %s257
        %s259 = smul.u32 2, %s22
      $region40: #{decoder_forward.7} parent=35 // pred_fallthru
        _
      // Predicated region
      $region41: #{decoder_forward.7} parent=35 // pred_check
        %p260 = pneg %p74
      $region42: #{decoder_forward.7} parent=35 // pred_check_branch
        %262 = sbr.rel (%p260) target = $region44
      $region43: #{decoder_forward.7} parent=35 // pred_region
        %p263 = scmp.lt.s32.totalorder %s21, 1
        %s264 = scalar_select %p263, %s21, 1
        %s265 = smul.addr %s264, 4
        %s266 = smul.addr %s265, 8
        %s267 = scalar_lea.vmem %s1, %s266
      $region44: #{decoder_forward.7} parent=35 // pred_fallthru
        _
    $region36: #{decoder_forward.7} parent=5 // pred_fallthru
      _
    %p268 = scmp.le.s32.totalorder 1, %s14
    %p269 = scmp.lt.s32.totalorder %s14, 3
    %p270 = pnand %p268, %p269
    %p271 = pneg %p270
    // Predicated region
    $region45: #{decoder_forward.7} parent=5 // pred_check
      _
    $region46: #{decoder_forward.7} parent=5 // pred_check_branch
      %273 = sbr.rel (%p270) target = $region48
    $region47: #{decoder_forward.7} parent=5 // pred_region
      %s274 = ssub.s32 %s14, 1
      %s275 = smul.u32 2, %s24
      %p276 = scmp.lt.s32.totalorder %s23, 1
      %s277 = scalar_select %p276, %s23, 1
      %p278 = scmp.lt.s32.totalorder %s275, 1
      %s279 = scalar_select %p278, %s275, 1
      %s280 = smul.addr %s277, 4
      %s281 = sadd.s32 %s279, %s280
      %s282 = smul.addr %s281, 8
      %s283 = scalar_lea.vmem %s0, %s282
      %p284 = pneg %p54
      %p285 = pneg %p51
      %p286 = scmp.lt.s32.totalorder %s23, 1
      %s287 = scalar_select %p286, %s23, 1
      %s288 = smul.addr %s287, 4
      %s289 = smul.addr %s288, 8
      %s290 = scalar_lea.vmem %s1, %s289
      %p291 = pneg %p80
      %p292 = pneg %p77
      %p293 = pneg %p101
      %p294 = pneg %p98
      %p295 = pneg %p122
      %p296 = pneg %p119
      %p297 = pneg %p143
      %p298 = pneg %p140
      %p299 = pneg %p164
      %p300 = pneg %p161
      %p301 = pneg %p185
      %p302 = pneg %p182
      %p303 = pneg %p213
      %p304 = pneg %p210
      %s305 = smul.u32 2, %s24
      %p306 = scmp.lt.s32.totalorder %s23, 1
      %s307 = scalar_select %p306, %s23, 1
      %p308 = scmp.lt.s32.totalorder %s305, 1
      %s309 = scalar_select %p308, %s305, 1
      %s310 = smul.addr %s307, 4
      %s311 = sadd.s32 %s309, %s310
      %s312 = smul.addr %s311, 8
      %s313 = scalar_lea.vmem %s7, %s312
      %s314 = smul.u32 2, %s24
      %p315 = scmp.lt.s32.totalorder %s23, 1
      %s316 = scalar_select %p315, %s23, 1
      %p317 = scmp.lt.s32.totalorder %s314, 1
      %s318 = scalar_select %p317, %s314, 1
      %s319 = smul.addr %s316, 4
      %s320 = sadd.s32 %s318, %s319
      %s321 = smul.addr %s320, 8
      %s322 = scalar_lea.vmem %s0, %s321
      %s323 = smul.u32 2, %s24
      %p324 = scmp.lt.s32.totalorder %s23, 1
      %s325 = scalar_select %p324, %s23, 1
      %s326 = smul.addr %s325, 4
      %s327 = smul.addr %s326, 8
      %s328 = scalar_lea.vmem %s1, %s327
      %s329 = smul.u32 2, %s24
      %p330 = scmp.lt.s32.totalorder %s23, 1
      %s331 = scalar_select %p330, %s23, 1
      %p332 = scmp.lt.s32.totalorder %s329, 1
      %s333 = scalar_select %p332, %s329, 1
      %s334 = smul.addr %s331, 4
      %s335 = sadd.s32 %s333, %s334
      %s336 = smul.addr %s335, 8
      %s337 = scalar_lea.vmem %s7, %s336
      %s338 = smul.u32 2, %s24
      %v339 = vld [vmem:[%s322] sm:$0xff]
      %v340 = vld [vmem:[%s322 + $0x8] sm:$0xff]
      %v341 = vld [vmem:[%s322 + $0x10] sm:$0xff]
      %v342 = vld [vmem:[%s322 + $0x18] sm:$0xff]
      %v343 = vld [vmem:[%s2] sm:$0xff]
      %v344 = vld [vmem:[%s2 + $0x8] sm:$0xff]
      %v345 = vld [vmem:[%s3] sm:$0xff]
      %v346 = vld [vmem:[%s3 + $0x8] sm:$0xff]
      %348 = vset.pattern.permute.xlu0 0
      %349 = vperm.xlu0 %348, %v345
      %v350 = vpop.permute.xlu0 %349
      %353 = vset.pattern.permute.xlu0 0
      %354 = vperm.xlu0 %353, %v346
      %v355 = vpop.permute.xlu0 %354
      %vm357 = vcmask 130048
      %v359 = vsel %vm357, %v343, 0
      %v362 = vsel %vm357, %v344, 0
      %364 = vmatprep.subr.mxu0 %v340
      %365 = vmatpush1.msra.mxu0 %v339
      %366 = vmatprep.subr.mxu0 %v342
      %367 = vmatpush1.msra.mxu0 %v341
      %368 = vmatprep.subr.mxu0 0.0
      %369 = vmatpush1.msra.mxu0 0.0
      %370 = vmatprep.subr.mxu0 0.0
      %371 = vmatpush1.msra.mxu0 0.0
      %372 = vmatprep.subr.mxu0 0.0
      %373 = vmatpush1.msra.mxu0 0.0
      %374 = vmatprep.subr.mxu0 0.0
      %375 = vmatpush1.msra.mxu0 0.0
      %376 = vmatprep.subr.mxu0 0.0
      %377 = vmatpush1.msra.mxu0 0.0
      %378 = vmatprep.subr.mxu0 0.0
      %379 = vmatpush1.msra.mxu0 0.0
      %380 = vmatprep.subr.mxu0 0.0
      %381 = vmatpush1.msra.mxu0 0.0
      %382 = vmatprep.subr.mxu0 0.0
      %383 = vmatpush1.msra.mxu0 0.0
      %384 = vmatprep.subr.mxu0 0.0
      %385 = vmatpush1.msra.mxu0 0.0
      %386 = vmatprep.subr.mxu0 0.0
      %387 = vmatpush1.msra.mxu0 0.0
      %388 = vmatprep.subr.mxu0 0.0
      %389 = vmatpush1.msra.mxu0 0.0
      %390 = vmatprep.subr.mxu0 0.0
      %391 = vmatpush1.msra.mxu0 0.0
      %392 = vmatprep.subr.mxu0 0.0
      %393 = vmatpush1.msra.mxu0 0.0
      %394 = vmatprep.subr.mxu0 0.0
      %395 = vmatpush1.msra.mxu0 0.0
      %396 = vmatprep.subr.mxu0 0.0
      %397 = vmatpush1.msra.mxu0 0.0
      %398 = vmatprep.subr.mxu0 0.0
      %399 = vmatpush1.msra.mxu0 0.0
      %400 = vmatprep.subr.mxu0 0.0
      %401 = vmatpush1.msra.mxu0 0.0
      %402 = vmatprep.subr.mxu0 0.0
      %403 = vmatpush1.msra.mxu0 0.0
      %404 = vmatprep.subr.mxu0 0.0
      %405 = vmatpush1.msra.mxu0 0.0
      %406 = vmatprep.subr.mxu0 0.0
      %407 = vmatpush1.msra.mxu0 0.0
      %408 = vmatprep.subr.mxu0 0.0
      %409 = vmatpush1.msra.mxu0 0.0
      %410 = vmatprep.subr.mxu0 0.0
      %411 = vmatpush1.msra.mxu0 0.0
      %412 = vmatprep.subr.mxu0 0.0
      %413 = vmatpush1.msra.mxu0 0.0
      %414 = vmatprep.subr.mxu0 0.0
      %415 = vmatpush1.msra.mxu0 0.0
      %416 = vmatprep.subr.mxu0 0.0
      %417 = vmatpush1.msra.mxu0 0.0
      %418 = vmatprep.subr.mxu0 0.0
      %419 = vmatpush1.msra.mxu0 0.0
      %420 = vmatprep.subr.mxu0 0.0
      %421 = vmatpush1.msra.mxu0 0.0
      %422 = vmatprep.subr.mxu0 0.0
      %423 = vmatpush1.msra.mxu0 0.0
      %424 = vmatprep.subr.mxu0 0.0
      %425 = vmatpush1.msra.mxu0 0.0
      %426 = vmatprep.subr.mxu0 0.0
      %427 = vmatpush1.msra.mxu0 0.0
      %428 = vmatprep.mubr.f32.mxu0 0.0
      %429 = vmatmul.mubr.f32.gmra.mrb[0].mxu0 %v359
      %v430 = vpop.f32.mrb[0].mxu0
      %v431 = vadd.f32 %v350, %v430
      %v432 = vpop.f32.mrb[0].mxu0
      %v433 = vadd.f32 %v350, %v432
      %434 = vmatprep.mubr.f32.mxu0 0.0
      %435 = vmatmul.mubr.f32.gmra.mrb[0].mxu0 %v362
      %v436 = vpop.f32.mrb[0].mxu0
      %v437 = vadd.f32 %v355, %v436
      %v438 = vpop.f32.mrb[0].mxu0
      %v439 = vadd.f32 %v355, %v438
      %440 = vdwg.mxu0
      %v441 = vld [vmem:[%s328] sm:$0xff]
      %v442 = vld [vmem:[%s328 + $0x10] sm:$0xff]
      %443 = vxpose.xlu0.b32.start [1/16] %v441, 128
      %444 = vxpose.xlu0.b32.cont [2/16] %v442, 128
      %445 = vxpose.xlu0.b32.cont [3/16] 0.0, 128
      %446 = vxpose.xlu0.b32.cont [4/16] 0.0, 128
      %447 = vxpose.xlu0.b32.cont [5/16] 0.0, 128
      %448 = vxpose.xlu0.b32.cont [6/16] 0.0, 128
      %449 = vxpose.xlu0.b32.cont [7/16] 0.0, 128
      %450 = vxpose.xlu0.b32.cont [8/16] 0.0, 128
      %451 = vxpose.xlu0.b32.cont [9/16] 0.0, 128
      %452 = vxpose.xlu0.b32.cont [10/16] 0.0, 128
      %453 = vxpose.xlu0.b32.cont [11/16] 0.0, 128
      %454 = vxpose.xlu0.b32.cont [12/16] 0.0, 128
      %455 = vxpose.xlu0.b32.cont [13/16] 0.0, 128
      %456 = vxpose.xlu0.b32.cont [14/16] 0.0, 128
      %457 = vxpose.xlu0.b32.cont [15/16] 0.0, 128
      %458 = vxpose.xlu0.b32.end [16/16] 0.0, 128
      %v459 = vpop.trf.xlu0
      %v460 = vpop.trf.xlu0
      %v461 = vpop.trf.xlu0
      %v462 = vpop.trf.xlu0
      %v463 = vpop.trf.xlu0
      %v464 = vpop.trf.xlu0
      %v465 = vpop.trf.xlu0
      %v466 = vpop.trf.xlu0
      %v467 = vpop.trf.xlu0
      %v468 = vpop.trf.xlu0
      %v469 = vpop.trf.xlu0
      %v470 = vpop.trf.xlu0
      %v471 = vpop.trf.xlu0
      %v472 = vpop.trf.xlu0
      %v473 = vpop.trf.xlu0
      %v474 = vpop.trf.xlu0
      %v476 = vsel %vm357, %v459, 0
      %v479 = vsel %vm357, %v460, 0
      %v482 = vsel %vm357, %v461, 0
      %v485 = vsel %vm357, %v462, 0
      %v488 = vsel %vm357, %v463, 0
      %v491 = vsel %vm357, %v464, 0
      %v494 = vsel %vm357, %v465, 0
      %v497 = vsel %vm357, %v466, 0
      %v500 = vsel %vm357, %v467, 0
      %v503 = vsel %vm357, %v468, 0
      %v506 = vsel %vm357, %v469, 0
      %v509 = vsel %vm357, %v470, 0
      %v512 = vsel %vm357, %v471, 0
      %v515 = vsel %vm357, %v472, 0
      %v518 = vsel %vm357, %v473, 0
      %v521 = vsel %vm357, %v474, 0
      %523 = vmatprep.subr.mxu0 %v433
      %524 = vmatpush1.msra.mxu0 %v431
      %525 = vmatprep.subr.mxu0 %v439
      %526 = vmatpush1.msra.mxu0 %v437
      %527 = vmatprep.subr.mxu0 0.0
      %528 = vmatpush1.msra.mxu0 0.0
      %529 = vmatprep.subr.mxu0 0.0
      %530 = vmatpush1.msra.mxu0 0.0
      %531 = vmatprep.subr.mxu0 0.0
      %532 = vmatpush1.msra.mxu0 0.0
      %533 = vmatprep.subr.mxu0 0.0
      %534 = vmatpush1.msra.mxu0 0.0
      %535 = vmatprep.subr.mxu0 0.0
      %536 = vmatpush1.msra.mxu0 0.0
      %537 = vmatprep.subr.mxu0 0.0
      %538 = vmatpush1.msra.mxu0 0.0
      %539 = vmatprep.subr.mxu0 0.0
      %540 = vmatpush1.msra.mxu0 0.0
      %541 = vmatprep.subr.mxu0 0.0
      %542 = vmatpush1.msra.mxu0 0.0
      %543 = vmatprep.subr.mxu0 0.0
      %544 = vmatpush1.msra.mxu0 0.0
      %545 = vmatprep.subr.mxu0 0.0
      %546 = vmatpush1.msra.mxu0 0.0
      %547 = vmatprep.subr.mxu0 0.0
      %548 = vmatpush1.msra.mxu0 0.0
      %549 = vmatprep.subr.mxu0 0.0
      %550 = vmatpush1.msra.mxu0 0.0
      %551 = vmatprep.subr.mxu0 0.0
      %552 = vmatpush1.msra.mxu0 0.0
      %553 = vmatprep.subr.mxu0 0.0
      %554 = vmatpush1.msra.mxu0 0.0
      %555 = vmatprep.subr.mxu0 0.0
      %556 = vmatpush1.msra.mxu0 0.0
      %557 = vmatprep.subr.mxu0 0.0
      %558 = vmatpush1.msra.mxu0 0.0
      %559 = vmatprep.subr.mxu0 0.0
      %560 = vmatpush1.msra.mxu0 0.0
      %561 = vmatprep.subr.mxu0 0.0
      %562 = vmatpush1.msra.mxu0 0.0
      %563 = vmatprep.subr.mxu0 0.0
      %564 = vmatpush1.msra.mxu0 0.0
      %565 = vmatprep.subr.mxu0 0.0
      %566 = vmatpush1.msra.mxu0 0.0
      %567 = vmatprep.subr.mxu0 0.0
      %568 = vmatpush1.msra.mxu0 0.0
      %569 = vmatprep.subr.mxu0 0.0
      %570 = vmatpush1.msra.mxu0 0.0
      %571 = vmatprep.subr.mxu0 0.0
      %572 = vmatpush1.msra.mxu0 0.0
      %573 = vmatprep.subr.mxu0 0.0
      %574 = vmatpush1.msra.mxu0 0.0
      %575 = vmatprep.subr.mxu0 0.0
      %576 = vmatpush1.msra.mxu0 0.0
      %577 = vmatprep.subr.mxu0 0.0
      %578 = vmatpush1.msra.mxu0 0.0
      %579 = vmatprep.subr.mxu0 0.0
      %580 = vmatpush1.msra.mxu0 0.0
      %581 = vmatprep.subr.mxu0 0.0
      %582 = vmatpush1.msra.mxu0 0.0
      %583 = vmatprep.subr.mxu0 0.0
      %584 = vmatpush1.msra.mxu0 0.0
      %585 = vmatprep.subr.mxu0 0.0
      %586 = vmatpush1.msra.mxu0 0.0
      %587 = vmatprep.mubr.f32.mxu0 0.0
      %588 = vmatmul.mubr.f32.gmra.mrb[0].mxu0 %v476
      %v589 = vpop.f32.mrb[0].mxu0
      %v590 = vadd.f32 0.0, %v589
      %v591 = vpop.f32.mrb[0].mxu0
      %v592 = vadd.f32 0.0, %v591
      %593 = vmatprep.mubr.f32.mxu0 0.0
      %594 = vmatmul.mubr.f32.gmra.mrb[0].mxu0 %v479
      %v595 = vpop.f32.mrb[0].mxu0
      %v596 = vadd.f32 0.0, %v595
      %v597 = vpop.f32.mrb[0].mxu0
      %v598 = vadd.f32 0.0, %v597
      %599 = vmatprep.mubr.f32.mxu0 0.0
      %600 = vmatmul.mubr.f32.gmra.mrb[0].mxu0 %v482
      %v601 = vpop.f32.mrb[0].mxu0
      %v602 = vadd.f32 0.0, %v601
      %v603 = vpop.f32.mrb[0].mxu0
      %v604 = vadd.f32 0.0, %v603
      %605 = vmatprep.mubr.f32.mxu0 0.0
      %606 = vmatmul.mubr.f32.gmra.mrb[0].mxu0 %v485
      %v607 = vpop.f32.mrb[0].mxu0
      %v608 = vadd.f32 0.0, %v607
      %v609 = vpop.f32.mrb[0].mxu0
      %v610 = vadd.f32 0.0, %v609
      %611 = vmatprep.mubr.f32.mxu0 0.0
      %612 = vmatmul.mubr.f32.gmra.mrb[0].mxu0 %v488
      %v613 = vpop.f32.mrb[0].mxu0
      %v614 = vadd.f32 0.0, %v613
      %v615 = vpop.f32.mrb[0].mxu0
      %v616 = vadd.f32 0.0, %v615
      %617 = vmatprep.mubr.f32.mxu0 0.0
      %618 = vmatmul.mubr.f32.gmra.mrb[0].mxu0 %v491
      %v619 = vpop.f32.mrb[0].mxu0
      %v620 = vadd.f32 0.0, %v619
      %v621 = vpop.f32.mrb[0].mxu0
      %v622 = vadd.f32 0.0, %v621
      %623 = vmatprep.mubr.f32.mxu0 0.0
      %624 = vmatmul.mubr.f32.gmra.mrb[0].mxu0 %v494
      %v625 = vpop.f32.mrb[0].mxu0
      %v626 = vadd.f32 0.0, %v625
      %v627 = vpop.f32.mrb[0].mxu0
      %v628 = vadd.f32 0.0, %v627
      %629 = vmatprep.mubr.f32.mxu0 0.0
      %630 = vmatmul.mubr.f32.gmra.mrb[0].mxu0 %v497
      %v631 = vpop.f32.mrb[0].mxu0
      %v632 = vadd.f32 0.0, %v631
      %v633 = vpop.f32.mrb[0].mxu0
      %v634 = vadd.f32 0.0, %v633
      %635 = vmatprep.mubr.f32.mxu0 0.0
      %636 = vmatmul.mubr.f32.gmra.mrb[0].mxu0 %v500
      %v637 = vpop.f32.mrb[0].mxu0
      %v638 = vadd.f32 0.0, %v637
      %v639 = vpop.f32.mrb[0].mxu0
      %v640 = vadd.f32 0.0, %v639
      %641 = vmatprep.mubr.f32.mxu0 0.0
      %642 = vmatmul.mubr.f32.gmra.mrb[0].mxu0 %v503
      %v643 = vpop.f32.mrb[0].mxu0
      %v644 = vadd.f32 0.0, %v643
      %v645 = vpop.f32.mrb[0].mxu0
      %v646 = vadd.f32 0.0, %v645
      %647 = vmatprep.mubr.f32.mxu0 0.0
      %648 = vmatmul.mubr.f32.gmra.mrb[0].mxu0 %v506
      %v649 = vpop.f32.mrb[0].mxu0
      %v650 = vadd.f32 0.0, %v649
      %v651 = vpop.f32.mrb[0].mxu0
      %v652 = vadd.f32 0.0, %v651
      %653 = vmatprep.mubr.f32.mxu0 0.0
      %654 = vmatmul.mubr.f32.gmra.mrb[0].mxu0 %v509
      %v655 = vpop.f32.mrb[0].mxu0
      %v656 = vadd.f32 0.0, %v655
      %v657 = vpop.f32.mrb[0].mxu0
      %v658 = vadd.f32 0.0, %v657
      %659 = vmatprep.mubr.f32.mxu0 0.0
      %660 = vmatmul.mubr.f32.gmra.mrb[0].mxu0 %v512
      %v661 = vpop.f32.mrb[0].mxu0
      %v662 = vadd.f32 0.0, %v661
      %v663 = vpop.f32.mrb[0].mxu0
      %v664 = vadd.f32 0.0, %v663
      %665 = vmatprep.mubr.f32.mxu0 0.0
      %666 = vmatmul.mubr.f32.gmra.mrb[0].mxu0 %v515
      %v667 = vpop.f32.mrb[0].mxu0
      %v668 = vadd.f32 0.0, %v667
      %v669 = vpop.f32.mrb[0].mxu0
      %v670 = vadd.f32 0.0, %v669
      %671 = vmatprep.mubr.f32.mxu0 0.0
      %672 = vmatmul.mubr.f32.gmra.mrb[0].mxu0 %v518
      %v673 = vpop.f32.mrb[0].mxu0
      %v674 = vadd.f32 0.0, %v673
      %v675 = vpop.f32.mrb[0].mxu0
      %v676 = vadd.f32 0.0, %v675
      %677 = vmatprep.mubr.f32.mxu0 0.0
      %678 = vmatmul.mubr.f32.gmra.mrb[0].mxu0 %v521
      %v679 = vpop.f32.mrb[0].mxu0
      %v680 = vadd.f32 0.0, %v679
      %v681 = vpop.f32.mrb[0].mxu0
      %v682 = vadd.f32 0.0, %v681
      %683 = vdwg.mxu0
      %v684 = vld [vmem:[%s4] sm:$0xff]
      %v685 = vld [vmem:[%s4 + $0x8] sm:$0xff]
      %v686 = vld [vmem:[%s5] sm:$0xff]
      %v687 = vld [vmem:[%s5 + $0x8] sm:$0xff]
      %689 = vset.pattern.permute.xlu0 0
      %690 = vperm.xlu0 %689, %v686
      %v691 = vpop.permute.xlu0 %690
      %694 = vset.pattern.permute.xlu0 0
      %695 = vperm.xlu0 %694, %v687
      %v696 = vpop.permute.xlu0 %695
      %v699 = vsel %vm357, %v684, 0
      %v702 = vsel %vm357, %v685, 0
      %704 = vmatprep.subr.mxu0 0.0
      %705 = vmatpush1.msra.mxu0 %v441
      %706 = vmatprep.subr.mxu0 0.0
      %707 = vmatpush1.msra.mxu0 %v442
      %708 = vmatprep.subr.mxu0 0.0
      %709 = vmatpush1.msra.mxu0 0.0
      %710 = vmatprep.subr.mxu0 0.0
      %711 = vmatpush1.msra.mxu0 0.0
      %712 = vmatprep.subr.mxu0 0.0
      %713 = vmatpush1.msra.mxu0 0.0
      %714 = vmatprep.subr.mxu0 0.0
      %715 = vmatpush1.msra.mxu0 0.0
      %716 = vmatprep.subr.mxu0 0.0
      %717 = vmatpush1.msra.mxu0 0.0
      %718 = vmatprep.subr.mxu0 0.0
      %719 = vmatpush1.msra.mxu0 0.0
      %720 = vmatprep.subr.mxu0 0.0
      %721 = vmatpush1.msra.mxu0 0.0
      %722 = vmatprep.subr.mxu0 0.0
      %723 = vmatpush1.msra.mxu0 0.0
      %724 = vmatprep.subr.mxu0 0.0
      %725 = vmatpush1.msra.mxu0 0.0
      %726 = vmatprep.subr.mxu0 0.0
      %727 = vmatpush1.msra.mxu0 0.0
      %728 = vmatprep.subr.mxu0 0.0
      %729 = vmatpush1.msra.mxu0 0.0
      %730 = vmatprep.subr.mxu0 0.0
      %731 = vmatpush1.msra.mxu0 0.0
      %732 = vmatprep.subr.mxu0 0.0
      %733 = vmatpush1.msra.mxu0 0.0
      %734 = vmatprep.subr.mxu0 0.0
      %735 = vmatpush1.msra.mxu0 0.0
      %736 = vmatprep.subr.mxu0 0.0
      %737 = vmatpush1.msra.mxu0 0.0
      %738 = vmatprep.subr.mxu0 0.0
      %739 = vmatpush1.msra.mxu0 0.0
      %740 = vmatprep.subr.mxu0 0.0
      %741 = vmatpush1.msra.mxu0 0.0
      %742 = vmatprep.subr.mxu0 0.0
      %743 = vmatpush1.msra.mxu0 0.0
      %744 = vmatprep.subr.mxu0 0.0
      %745 = vmatpush1.msra.mxu0 0.0
      %746 = vmatprep.subr.mxu0 0.0
      %747 = vmatpush1.msra.mxu0 0.0
      %748 = vmatprep.subr.mxu0 0.0
      %749 = vmatpush1.msra.mxu0 0.0
      %750 = vmatprep.subr.mxu0 0.0
      %751 = vmatpush1.msra.mxu0 0.0
      %752 = vmatprep.subr.mxu0 0.0
      %753 = vmatpush1.msra.mxu0 0.0
      %754 = vmatprep.subr.mxu0 0.0
      %755 = vmatpush1.msra.mxu0 0.0
      %756 = vmatprep.subr.mxu0 0.0
      %757 = vmatpush1.msra.mxu0 0.0
      %758 = vmatprep.subr.mxu0 0.0
      %759 = vmatpush1.msra.mxu0 0.0
      %760 = vmatprep.subr.mxu0 0.0
      %761 = vmatpush1.msra.mxu0 0.0
      %762 = vmatprep.subr.mxu0 0.0
      %763 = vmatpush1.msra.mxu0 0.0
      %764 = vmatprep.subr.mxu0 0.0
      %765 = vmatpush1.msra.mxu0 0.0
      %766 = vmatprep.subr.mxu0 0.0
      %767 = vmatpush1.msra.mxu0 0.0
      %768 = vmatprep.mubr.f32.mxu0 0.0
      %769 = vmatmul.mubr.f32.gmra.mrb[0].mxu0 %v699
      %v770 = vpop.f32.mrb[0].mxu0
      %v771 = vadd.f32 %v691, %v770
      %v772 = vpop.f32.mrb[0].mxu0
      %773 = vmatprep.mubr.f32.mxu0 0.0
      %774 = vmatmul.mubr.f32.gmra.mrb[0].mxu0 %v702
      %v775 = vpop.f32.mrb[0].mxu0
      %v776 = vadd.f32 %v696, %v775
      %v777 = vpop.f32.mrb[0].mxu0
      %778 = vdwg.mxu0
      %v779 = vmax.f32 %v590, %v602
      %v780 = vmax.f32 %v596, %v608
      %v781 = vmax.f32 %v779, %v614
      %v782 = vmax.f32 %v780, %v620
      %v783 = vmax.f32 %v781, %v626
      %v784 = vmax.f32 %v782, %v632
      %v785 = vmax.f32 %v783, %v638
      %v786 = vmax.f32 %v784, %v644
      %v787 = vmax.f32 %v785, %v650
      %v788 = vmax.f32 %v786, %v656
      %v789 = vmax.f32 %v787, %v662
      %v790 = vmax.f32 %v788, %v668
      %v791 = vmax.f32 %v789, %v674
      %v792 = vmax.f32 %v790, %v680
      %v793 = vmax.f32 %v791, %v792
      %v794 = vrot.slane %v793, 4
      %v795 = vmax.f32 %v793, %v794
      %v796 = vrot.slane %v795, 2
      %v797 = vmax.f32 %v795, %v796
      %v798 = vrot.slane %v797, 1
      %v799 = vmax.f32 %v797, %v798
      %v800 = vmax.f32 %v592, %v604
      %v801 = vmax.f32 %v598, %v610
      %v802 = vmax.f32 %v800, %v616
      %v803 = vmax.f32 %v801, %v622
      %v804 = vmax.f32 %v802, %v628
      %v805 = vmax.f32 %v803, %v634
      %v806 = vmax.f32 %v804, %v640
      %v807 = vmax.f32 %v805, %v646
      %v808 = vmax.f32 %v806, %v652
      %v809 = vmax.f32 %v807, %v658
      %v810 = vmax.f32 %v808, %v664
      %v811 = vmax.f32 %v809, %v670
      %v812 = vmax.f32 %v810, %v676
      %v813 = vmax.f32 %v811, %v682
      %v814 = vmax.f32 %v812, %v813
      %v815 = vrot.slane %v814, 4
      %v816 = vmax.f32 %v814, %v815
      %v817 = vrot.slane %v816, 2
      %v818 = vmax.f32 %v816, %v817
      %v819 = vrot.slane %v818, 1
      %v820 = vmax.f32 %v818, %v819
      %v821 = vsub.f32 -inf, %v799
      %v822 = vsub.f32 -inf, %v820
      %v823 = vmul.f32 %v821, 1.442695
      %v824 = vpow.pop %v823
      %v825 = vmul.f32 %v822, 1.442695
      %v826 = vpow.pop %v825
      %v827 = vsub.f32 %v590, %v799
      %v828 = vsub.f32 %v592, %v820
      %v829 = vsub.f32 %v596, %v799
      %v830 = vsub.f32 %v598, %v820
      %v831 = vsub.f32 %v602, %v799
      %v832 = vsub.f32 %v604, %v820
      %v833 = vsub.f32 %v608, %v799
      %v834 = vsub.f32 %v610, %v820
      %v835 = vsub.f32 %v614, %v799
      %v836 = vsub.f32 %v616, %v820
      %v837 = vsub.f32 %v620, %v799
      %v838 = vsub.f32 %v622, %v820
      %v839 = vsub.f32 %v626, %v799
      %v840 = vsub.f32 %v628, %v820
      %v841 = vsub.f32 %v632, %v799
      %v842 = vsub.f32 %v634, %v820
      %v843 = vsub.f32 %v638, %v799
      %v844 = vsub.f32 %v640, %v820
      %v845 = vsub.f32 %v644, %v799
      %v846 = vsub.f32 %v646, %v820
      %v847 = vsub.f32 %v650, %v799
      %v848 = vsub.f32 %v652, %v820
      %v849 = vsub.f32 %v656, %v799
      %v850 = vsub.f32 %v658, %v820
      %v851 = vsub.f32 %v662, %v799
      %v852 = vsub.f32 %v664, %v820
      %v853 = vsub.f32 %v668, %v799
      %v854 = vsub.f32 %v670, %v820
      %v855 = vsub.f32 %v674, %v799
      %v856 = vsub.f32 %v676, %v820
      %v857 = vsub.f32 %v680, %v799
      %v858 = vsub.f32 %v682, %v820
      %v859 = vmul.f32 %v827, 1.442695
      %v860 = vpow.pop %v859
      %v861 = vmul.f32 %v828, 1.442695
      %v862 = vpow.pop %v861
      %v863 = vmul.f32 %v829, 1.442695
      %v864 = vpow.pop %v863
      %v865 = vmul.f32 %v830, 1.442695
      %v866 = vpow.pop %v865
      %v867 = vmul.f32 %v831, 1.442695
      %v868 = vpow.pop %v867
      %v869 = vmul.f32 %v832, 1.442695
      %v870 = vpow.pop %v869
      %v871 = vmul.f32 %v833, 1.442695
      %v872 = vpow.pop %v871
      %v873 = vmul.f32 %v834, 1.442695
      %v874 = vpow.pop %v873
      %v875 = vmul.f32 %v835, 1.442695
      %v876 = vpow.pop %v875
      %v877 = vmul.f32 %v836, 1.442695
      %v878 = vpow.pop %v877
      %v879 = vmul.f32 %v837, 1.442695
      %v880 = vpow.pop %v879
      %v881 = vmul.f32 %v838, 1.442695
      %v882 = vpow.pop %v881
      %v883 = vmul.f32 %v839, 1.442695
      %v884 = vpow.pop %v883
      %v885 = vmul.f32 %v840, 1.442695
      %v886 = vpow.pop %v885
      %v887 = vmul.f32 %v841, 1.442695
      %v888 = vpow.pop %v887
      %v889 = vmul.f32 %v842, 1.442695
      %v890 = vpow.pop %v889
      %v891 = vmul.f32 %v843, 1.442695
      %v892 = vpow.pop %v891
      %v893 = vmul.f32 %v844, 1.442695
      %v894 = vpow.pop %v893
      %v895 = vmul.f32 %v845, 1.442695
      %v896 = vpow.pop %v895
      %v897 = vmul.f32 %v846, 1.442695
      %v898 = vpow.pop %v897
      %v899 = vmul.f32 %v847, 1.442695
      %v900 = vpow.pop %v899
      %v901 = vmul.f32 %v848, 1.442695
      %v902 = vpow.pop %v901
      %v903 = vmul.f32 %v849, 1.442695
      %v904 = vpow.pop %v903
      %v905 = vmul.f32 %v850, 1.442695
      %v906 = vpow.pop %v905
      %v907 = vmul.f32 %v851, 1.442695
      %v908 = vpow.pop %v907
      %v909 = vmul.f32 %v852, 1.442695
      %v910 = vpow.pop %v909
      %v911 = vmul.f32 %v853, 1.442695
      %v912 = vpow.pop %v911
      %v913 = vmul.f32 %v854, 1.442695
      %v914 = vpow.pop %v913
      %v915 = vmul.f32 %v855, 1.442695
      %v916 = vpow.pop %v915
      %v917 = vmul.f32 %v856, 1.442695
      %v918 = vpow.pop %v917
      %v919 = vmul.f32 %v857, 1.442695
      %v920 = vpow.pop %v919
      %v921 = vmul.f32 %v858, 1.442695
      %v922 = vpow.pop %v921
      %v923 = vmul.f32 %v824, 0.0
      %v924 = vmul.f32 %v826, 0.0
      %v925 = vadd.f32 %v860, %v864
      %v926 = vadd.f32 %v925, %v868
      %v927 = vadd.f32 %v926, %v872
      %v928 = vadd.f32 %v927, %v876
      %v929 = vadd.f32 %v928, %v880
      %v930 = vadd.f32 %v929, %v884
      %v931 = vadd.f32 %v930, %v888
      %v932 = vadd.f32 %v931, %v892
      %v933 = vadd.f32 %v932, %v896
      %v934 = vadd.f32 %v933, %v900
      %v935 = vadd.f32 %v934, %v904
      %v936 = vadd.f32 %v935, %v908
      %v937 = vadd.f32 %v936, %v912
      %v938 = vadd.f32 %v937, %v916
      %v939 = vadd.f32 %v938, %v920
      %v940 = vrot.slane %v939, 4
      %v941 = vadd.f32 %v939, %v940
      %v942 = vrot.slane %v941, 2
      %v943 = vadd.f32 %v941, %v942
      %v944 = vrot.slane %v943, 1
      %v945 = vadd.f32 %v943, %v944
      %v946 = vadd.f32 %v862, %v866
      %v947 = vadd.f32 %v946, %v870
      %v948 = vadd.f32 %v947, %v874
      %v949 = vadd.f32 %v948, %v878
      %v950 = vadd.f32 %v949, %v882
      %v951 = vadd.f32 %v950, %v886
      %v952 = vadd.f32 %v951, %v890
      %v953 = vadd.f32 %v952, %v894
      %v954 = vadd.f32 %v953, %v898
      %v955 = vadd.f32 %v954, %v902
      %v956 = vadd.f32 %v955, %v906
      %v957 = vadd.f32 %v956, %v910
      %v958 = vadd.f32 %v957, %v914
      %v959 = vadd.f32 %v958, %v918
      %v960 = vadd.f32 %v959, %v922
      %v961 = vrot.slane %v960, 4
      %v962 = vadd.f32 %v960, %v961
      %v963 = vrot.slane %v962, 2
      %v964 = vadd.f32 %v962, %v963
      %v965 = vrot.slane %v964, 1
      %v966 = vadd.f32 %v964, %v965
      %v967 = vadd.f32 %v923, %v945
      %v968 = vadd.f32 %v924, %v966
      %969 = vmatprep.subr.mxu0 %v862
      %970 = vmatpush1.msra.mxu0 %v860
      %971 = vmatprep.subr.mxu0 %v866
      %972 = vmatpush1.msra.mxu0 %v864
      %973 = vmatprep.subr.mxu0 %v870
      %974 = vmatpush1.msra.mxu0 %v868
      %975 = vmatprep.subr.mxu0 %v874
      %976 = vmatpush1.msra.mxu0 %v872
      %977 = vmatprep.subr.mxu0 %v878
      %978 = vmatpush1.msra.mxu0 %v876
      %979 = vmatprep.subr.mxu0 %v882
      %980 = vmatpush1.msra.mxu0 %v880
      %981 = vmatprep.subr.mxu0 %v886
      %982 = vmatpush1.msra.mxu0 %v884
      %983 = vmatprep.subr.mxu0 %v890
      %984 = vmatpush1.msra.mxu0 %v888
      %985 = vmatprep.subr.mxu0 %v894
      %986 = vmatpush1.msra.mxu0 %v892
      %987 = vmatprep.subr.mxu0 %v898
      %988 = vmatpush1.msra.mxu0 %v896
      %989 = vmatprep.subr.mxu0 %v902
      %990 = vmatpush1.msra.mxu0 %v900
      %991 = vmatprep.subr.mxu0 %v906
      %992 = vmatpush1.msra.mxu0 %v904
      %993 = vmatprep.subr.mxu0 %v910
      %994 = vmatpush1.msra.mxu0 %v908
      %995 = vmatprep.subr.mxu0 %v914
      %996 = vmatpush1.msra.mxu0 %v912
      %997 = vmatprep.subr.mxu0 %v918
      %998 = vmatpush1.msra.mxu0 %v916
      %999 = vmatprep.subr.mxu0 %v922
      %1000 = vmatpush1.msra.mxu0 %v920
      %1001 = vmatprep.subr.mxu0 0.0
      %1002 = vmatpush1.msra.mxu0 0.0
      %1003 = vmatprep.subr.mxu0 0.0
      %1004 = vmatpush1.msra.mxu0 0.0
      %1005 = vmatprep.subr.mxu0 0.0
      %1006 = vmatpush1.msra.mxu0 0.0
      %1007 = vmatprep.subr.mxu0 0.0
      %1008 = vmatpush1.msra.mxu0 0.0
      %1009 = vmatprep.subr.mxu0 0.0
      %1010 = vmatpush1.msra.mxu0 0.0
      %1011 = vmatprep.subr.mxu0 0.0
      %1012 = vmatpush1.msra.mxu0 0.0
      %1013 = vmatprep.subr.mxu0 0.0
      %1014 = vmatpush1.msra.mxu0 0.0
      %1015 = vmatprep.subr.mxu0 0.0
      %1016 = vmatpush1.msra.mxu0 0.0
      %1017 = vmatprep.subr.mxu0 0.0
      %1018 = vmatpush1.msra.mxu0 0.0
      %1019 = vmatprep.subr.mxu0 0.0
      %1020 = vmatpush1.msra.mxu0 0.0
      %1021 = vmatprep.subr.mxu0 0.0
      %1022 = vmatpush1.msra.mxu0 0.0
      %1023 = vmatprep.subr.mxu0 0.0
      %1024 = vmatpush1.msra.mxu0 0.0
      %1025 = vmatprep.subr.mxu0 0.0
      %1026 = vmatpush1.msra.mxu0 0.0
      %1027 = vmatprep.subr.mxu0 0.0
      %1028 = vmatpush1.msra.mxu0 0.0
      %1029 = vmatprep.subr.mxu0 0.0
      %1030 = vmatpush1.msra.mxu0 0.0
      %1031 = vmatprep.subr.mxu0 0.0
      %1032 = vmatpush1.msra.mxu0 0.0
      %1033 = vmatprep.mubr.f32.mxu0 0.0
      %1034 = vmatmul.mubr.f32.gmra.mrb[0].mxu0 %v771
      %v1035 = vpop.f32.mrb[0].mxu0
      %v1036 = vadd.f32 0.0, %v1035
      %v1037 = vpop.f32.mrb[0].mxu0
      %v1038 = vadd.f32 0.0, %v1037
      %1039 = vmatprep.mubr.f32.mxu0 0.0
      %1040 = vmatmul.mubr.f32.gmra.mrb[0].mxu0 %v776
      %v1041 = vpop.f32.mrb[0].mxu0
      %v1042 = vadd.f32 0.0, %v1041
      %v1043 = vpop.f32.mrb[0].mxu0
      %v1044 = vadd.f32 0.0, %v1043
      %1045 = vdwg.mxu0
      %v1046 = vadd.f32 %v923, %v1036
      %v1047 = vadd.f32 %v924, %v1038
      %v1048 = vadd.f32 %v923, %v1042
      %v1049 = vadd.f32 %v924, %v1044
      %v1050 = vld [vmem:[%s328 + $0x8] sm:$0xff]
      %v1051 = vld [vmem:[%s328 + $0x18] sm:$0xff]
      %1052 = vxpose.xlu0.b32.start [1/16] %v1050, 128
      %1053 = vxpose.xlu0.b32.cont [2/16] %v1051, 128
      %1054 = vxpose.xlu0.b32.cont [3/16] 0.0, 128
      %1055 = vxpose.xlu0.b32.cont [4/16] 0.0, 128
      %1056 = vxpose.xlu0.b32.cont [5/16] 0.0, 128
      %1057 = vxpose.xlu0.b32.cont [6/16] 0.0, 128
      %1058 = vxpose.xlu0.b32.cont [7/16] 0.0, 128
      %1059 = vxpose.xlu0.b32.cont [8/16] 0.0, 128
      %1060 = vxpose.xlu0.b32.cont [9/16] 0.0, 128
      %1061 = vxpose.xlu0.b32.cont [10/16] 0.0, 128
      %1062 = vxpose.xlu0.b32.cont [11/16] 0.0, 128
      %1063 = vxpose.xlu0.b32.cont [12/16] 0.0, 128
      %1064 = vxpose.xlu0.b32.cont [13/16] 0.0, 128
      %1065 = vxpose.xlu0.b32.cont [14/16] 0.0, 128
      %1066 = vxpose.xlu0.b32.cont [15/16] 0.0, 128
      %1067 = vxpose.xlu0.b32.end [16/16] 0.0, 128
      %v1068 = vpop.trf.xlu0
      %v1069 = vpop.trf.xlu0
      %v1070 = vpop.trf.xlu0
      %v1071 = vpop.trf.xlu0
      %v1072 = vpop.trf.xlu0
      %v1073 = vpop.trf.xlu0
      %v1074 = vpop.trf.xlu0
      %v1075 = vpop.trf.xlu0
      %v1076 = vpop.trf.xlu0
      %v1077 = vpop.trf.xlu0
      %v1078 = vpop.trf.xlu0
      %v1079 = vpop.trf.xlu0
      %v1080 = vpop.trf.xlu0
      %v1081 = vpop.trf.xlu0
      %v1082 = vpop.trf.xlu0
      %v1083 = vpop.trf.xlu0
      %v1085 = vsel %vm357, %v1068, 0
      %v1088 = vsel %vm357, %v1069, 0
      %v1091 = vsel %vm357, %v1070, 0
      %v1094 = vsel %vm357, %v1071, 0
      %v1097 = vsel %vm357, %v1072, 0
      %v1100 = vsel %vm357, %v1073, 0
      %v1103 = vsel %vm357, %v1074, 0
      %v1106 = vsel %vm357, %v1075, 0
      %v1109 = vsel %vm357, %v1076, 0
      %v1112 = vsel %vm357, %v1077, 0
      %v1115 = vsel %vm357, %v1078, 0
      %v1118 = vsel %vm357, %v1079, 0
      %v1121 = vsel %vm357, %v1080, 0
      %v1124 = vsel %vm357, %v1081, 0
      %v1127 = vsel %vm357, %v1082, 0
      %v1130 = vsel %vm357, %v1083, 0
      %1132 = vmatprep.subr.mxu0 %v433
      %1133 = vmatpush1.msra.mxu0 %v431
      %1134 = vmatprep.subr.mxu0 %v439
      %1135 = vmatpush1.msra.mxu0 %v437
      %1136 = vmatprep.subr.mxu0 0.0
      %1137 = vmatpush1.msra.mxu0 0.0
      %1138 = vmatprep.subr.mxu0 0.0
      %1139 = vmatpush1.msra.mxu0 0.0
      %1140 = vmatprep.subr.mxu0 0.0
      %1141 = vmatpush1.msra.mxu0 0.0
      %1142 = vmatprep.subr.mxu0 0.0
      %1143 = vmatpush1.msra.mxu0 0.0
      %1144 = vmatprep.subr.mxu0 0.0
      %1145 = vmatpush1.msra.mxu0 0.0
      %1146 = vmatprep.subr.mxu0 0.0
      %1147 = vmatpush1.msra.mxu0 0.0
      %1148 = vmatprep.subr.mxu0 0.0
      %1149 = vmatpush1.msra.mxu0 0.0
      %1150 = vmatprep.subr.mxu0 0.0
      %1151 = vmatpush1.msra.mxu0 0.0
      %1152 = vmatprep.subr.mxu0 0.0
      %1153 = vmatpush1.msra.mxu0 0.0
      %1154 = vmatprep.subr.mxu0 0.0
      %1155 = vmatpush1.msra.mxu0 0.0
      %1156 = vmatprep.subr.mxu0 0.0
      %1157 = vmatpush1.msra.mxu0 0.0
      %1158 = vmatprep.subr.mxu0 0.0
      %1159 = vmatpush1.msra.mxu0 0.0
      %1160 = vmatprep.subr.mxu0 0.0
      %1161 = vmatpush1.msra.mxu0 0.0
      %1162 = vmatprep.subr.mxu0 0.0
      %1163 = vmatpush1.msra.mxu0 0.0
      %1164 = vmatprep.subr.mxu0 0.0
      %1165 = vmatpush1.msra.mxu0 0.0
      %1166 = vmatprep.subr.mxu0 0.0
      %1167 = vmatpush1.msra.mxu0 0.0
      %1168 = vmatprep.subr.mxu0 0.0
      %1169 = vmatpush1.msra.mxu0 0.0
      %1170 = vmatprep.subr.mxu0 0.0
      %1171 = vmatpush1.msra.mxu0 0.0
      %1172 = vmatprep.subr.mxu0 0.0
      %1173 = vmatpush1.msra.mxu0 0.0
      %1174 = vmatprep.subr.mxu0 0.0
      %1175 = vmatpush1.msra.mxu0 0.0
      %1176 = vmatprep.subr.mxu0 0.0
      %1177 = vmatpush1.msra.mxu0 0.0
      %1178 = vmatprep.subr.mxu0 0.0
      %1179 = vmatpush1.msra.mxu0 0.0
      %1180 = vmatprep.subr.mxu0 0.0
      %1181 = vmatpush1.msra.mxu0 0.0
      %1182 = vmatprep.subr.mxu0 0.0
      %1183 = vmatpush1.msra.mxu0 0.0
      %1184 = vmatprep.subr.mxu0 0.0
      %1185 = vmatpush1.msra.mxu0 0.0
      %1186 = vmatprep.subr.mxu0 0.0
      %1187 = vmatpush1.msra.mxu0 0.0
      %1188 = vmatprep.subr.mxu0 0.0
      %1189 = vmatpush1.msra.mxu0 0.0
      %1190 = vmatprep.subr.mxu0 0.0
      %1191 = vmatpush1.msra.mxu0 0.0
      %1192 = vmatprep.subr.mxu0 0.0
      %1193 = vmatpush1.msra.mxu0 0.0
      %1194 = vmatprep.subr.mxu0 0.0
      %1195 = vmatpush1.msra.mxu0 0.0
      %1196 = vmatprep.mubr.f32.mxu0 0.0
      %1197 = vmatmul.mubr.f32.gmra.mrb[0].mxu0 %v1085
      %v1198 = vpop.f32.mrb[0].mxu0
      %v1199 = vadd.f32 0.0, %v1198
      %v1200 = vpop.f32.mrb[0].mxu0
      %v1201 = vadd.f32 0.0, %v1200
      %1202 = vmatprep.mubr.f32.mxu0 0.0
      %1203 = vmatmul.mubr.f32.gmra.mrb[0].mxu0 %v1088
      %v1204 = vpop.f32.mrb[0].mxu0
      %v1205 = vadd.f32 0.0, %v1204
      %v1206 = vpop.f32.mrb[0].mxu0
      %v1207 = vadd.f32 0.0, %v1206
      %1208 = vmatprep.mubr.f32.mxu0 0.0
      %1209 = vmatmul.mubr.f32.gmra.mrb[0].mxu0 %v1091
      %v1210 = vpop.f32.mrb[0].mxu0
      %v1211 = vadd.f32 0.0, %v1210
      %v1212 = vpop.f32.mrb[0].mxu0
      %v1213 = vadd.f32 0.0, %v1212
      %1214 = vmatprep.mubr.f32.mxu0 0.0
      %1215 = vmatmul.mubr.f32.gmra.mrb[0].mxu0 %v1094
      %v1216 = vpop.f32.mrb[0].mxu0
      %v1217 = vadd.f32 0.0, %v1216
      %v1218 = vpop.f32.mrb[0].mxu0
      %v1219 = vadd.f32 0.0, %v1218
      %1220 = vmatprep.mubr.f32.mxu0 0.0
      %1221 = vmatmul.mubr.f32.gmra.mrb[0].mxu0 %v1097
      %v1222 = vpop.f32.mrb[0].mxu0
      %v1223 = vadd.f32 0.0, %v1222
      %v1224 = vpop.f32.mrb[0].mxu0
      %v1225 = vadd.f32 0.0, %v1224
      %1226 = vmatprep.mubr.f32.mxu0 0.0
      %1227 = vmatmul.mubr.f32.gmra.mrb[0].mxu0 %v1100
      %v1228 = vpop.f32.mrb[0].mxu0
      %v1229 = vadd.f32 0.0, %v1228
      %v1230 = vpop.f32.mrb[0].mxu0
      %v1231 = vadd.f32 0.0, %v1230
      %1232 = vmatprep.mubr.f32.mxu0 0.0
      %1233 = vmatmul.mubr.f32.gmra.mrb[0].mxu0 %v1103
      %v1234 = vpop.f32.mrb[0].mxu0
      %v1235 = vadd.f32 0.0, %v1234
      %v1236 = vpop.f32.mrb[0].mxu0
      %v1237 = vadd.f32 0.0, %v1236
      %1238 = vmatprep.mubr.f32.mxu0 0.0
      %1239 = vmatmul.mubr.f32.gmra.mrb[0].mxu0 %v1106
      %v1240 = vpop.f32.mrb[0].mxu0
      %v1241 = vadd.f32 0.0, %v1240
      %v1242 = vpop.f32.mrb[0].mxu0
      %v1243 = vadd.f32 0.0, %v1242
      %1244 = vmatprep.mubr.f32.mxu0 0.0
      %1245 = vmatmul.mubr.f32.gmra.mrb[0].mxu0 %v1109
      %v1246 = vpop.f32.mrb[0].mxu0
      %v1247 = vadd.f32 0.0, %v1246
      %v1248 = vpop.f32.mrb[0].mxu0
      %v1249 = vadd.f32 0.0, %v1248
      %1250 = vmatprep.mubr.f32.mxu0 0.0
      %1251 = vmatmul.mubr.f32.gmra.mrb[0].mxu0 %v1112
      %v1252 = vpop.f32.mrb[0].mxu0
      %v1253 = vadd.f32 0.0, %v1252
      %v1254 = vpop.f32.mrb[0].mxu0
      %v1255 = vadd.f32 0.0, %v1254
      %1256 = vmatprep.mubr.f32.mxu0 0.0
      %1257 = vmatmul.mubr.f32.gmra.mrb[0].mxu0 %v1115
      %v1258 = vpop.f32.mrb[0].mxu0
      %v1259 = vadd.f32 0.0, %v1258
      %v1260 = vpop.f32.mrb[0].mxu0
      %v1261 = vadd.f32 0.0, %v1260
      %1262 = vmatprep.mubr.f32.mxu0 0.0
      %1263 = vmatmul.mubr.f32.gmra.mrb[0].mxu0 %v1118
      %v1264 = vpop.f32.mrb[0].mxu0
      %v1265 = vadd.f32 0.0, %v1264
      %v1266 = vpop.f32.mrb[0].mxu0
      %v1267 = vadd.f32 0.0, %v1266
      %1268 = vmatprep.mubr.f32.mxu0 0.0
      %1269 = vmatmul.mubr.f32.gmra.mrb[0].mxu0 %v1121
      %v1270 = vpop.f32.mrb[0].mxu0
      %v1271 = vadd.f32 0.0, %v1270
      %v1272 = vpop.f32.mrb[0].mxu0
      %v1273 = vadd.f32 0.0, %v1272
      %1274 = vmatprep.mubr.f32.mxu0 0.0
      %1275 = vmatmul.mubr.f32.gmra.mrb[0].mxu0 %v1124
      %v1276 = vpop.f32.mrb[0].mxu0
      %v1277 = vadd.f32 0.0, %v1276
      %v1278 = vpop.f32.mrb[0].mxu0
      %v1279 = vadd.f32 0.0, %v1278
      %1280 = vmatprep.mubr.f32.mxu0 0.0
      %1281 = vmatmul.mubr.f32.gmra.mrb[0].mxu0 %v1127
      %v1282 = vpop.f32.mrb[0].mxu0
      %v1283 = vadd.f32 0.0, %v1282
      %v1284 = vpop.f32.mrb[0].mxu0
      %v1285 = vadd.f32 0.0, %v1284
      %1286 = vmatprep.mubr.f32.mxu0 0.0
      %1287 = vmatmul.mubr.f32.gmra.mrb[0].mxu0 %v1130
      %v1288 = vpop.f32.mrb[0].mxu0
      %v1289 = vadd.f32 0.0, %v1288
      %v1290 = vpop.f32.mrb[0].mxu0
      %v1291 = vadd.f32 0.0, %v1290
      %1292 = vdwg.mxu0
      %1293 = vmatprep.subr.mxu0 0.0
      %1294 = vmatpush1.msra.mxu0 %v1050
      %1295 = vmatprep.subr.mxu0 0.0
      %1296 = vmatpush1.msra.mxu0 %v1051
      %1297 = vmatprep.subr.mxu0 0.0
      %1298 = vmatpush1.msra.mxu0 0.0
      %1299 = vmatprep.subr.mxu0 0.0
      %1300 = vmatpush1.msra.mxu0 0.0
      %1301 = vmatprep.subr.mxu0 0.0
      %1302 = vmatpush1.msra.mxu0 0.0
      %1303 = vmatprep.subr.mxu0 0.0
      %1304 = vmatpush1.msra.mxu0 0.0
      %1305 = vmatprep.subr.mxu0 0.0
      %1306 = vmatpush1.msra.mxu0 0.0
      %1307 = vmatprep.subr.mxu0 0.0
      %1308 = vmatpush1.msra.mxu0 0.0
      %1309 = vmatprep.subr.mxu0 0.0
      %1310 = vmatpush1.msra.mxu0 0.0
      %1311 = vmatprep.subr.mxu0 0.0
      %1312 = vmatpush1.msra.mxu0 0.0
      %1313 = vmatprep.subr.mxu0 0.0
      %1314 = vmatpush1.msra.mxu0 0.0
      %1315 = vmatprep.subr.mxu0 0.0
      %1316 = vmatpush1.msra.mxu0 0.0
      %1317 = vmatprep.subr.mxu0 0.0
      %1318 = vmatpush1.msra.mxu0 0.0
      %1319 = vmatprep.subr.mxu0 0.0
      %1320 = vmatpush1.msra.mxu0 0.0
      %1321 = vmatprep.subr.mxu0 0.0
      %1322 = vmatpush1.msra.mxu0 0.0
      %1323 = vmatprep.subr.mxu0 0.0
      %1324 = vmatpush1.msra.mxu0 0.0
      %1325 = vmatprep.subr.mxu0 0.0
      %1326 = vmatpush1.msra.mxu0 0.0
      %1327 = vmatprep.subr.mxu0 0.0
      %1328 = vmatpush1.msra.mxu0 0.0
      %1329 = vmatprep.subr.mxu0 0.0
      %1330 = vmatpush1.msra.mxu0 0.0
      %1331 = vmatprep.subr.mxu0 0.0
      %1332 = vmatpush1.msra.mxu0 0.0
      %1333 = vmatprep.subr.mxu0 0.0
      %1334 = vmatpush1.msra.mxu0 0.0
      %1335 = vmatprep.subr.mxu0 0.0
      %1336 = vmatpush1.msra.mxu0 0.0
      %1337 = vmatprep.subr.mxu0 0.0
      %1338 = vmatpush1.msra.mxu0 0.0
      %1339 = vmatprep.subr.mxu0 0.0
      %1340 = vmatpush1.msra.mxu0 0.0
      %1341 = vmatprep.subr.mxu0 0.0
      %1342 = vmatpush1.msra.mxu0 0.0
      %1343 = vmatprep.subr.mxu0 0.0
      %1344 = vmatpush1.msra.mxu0 0.0
      %1345 = vmatprep.subr.mxu0 0.0
      %1346 = vmatpush1.msra.mxu0 0.0
      %1347 = vmatprep.subr.mxu0 0.0
      %1348 = vmatpush1.msra.mxu0 0.0
      %1349 = vmatprep.subr.mxu0 0.0
      %1350 = vmatpush1.msra.mxu0 0.0
      %1351 = vmatprep.subr.mxu0 0.0
      %1352 = vmatpush1.msra.mxu0 0.0
      %1353 = vmatprep.subr.mxu0 0.0
      %1354 = vmatpush1.msra.mxu0 0.0
      %1355 = vmatprep.subr.mxu0 0.0
      %1356 = vmatpush1.msra.mxu0 0.0
      %1357 = vmatprep.mubr.f32.mxu0 0.0
      %1358 = vmatmul.mubr.f32.gmra.mrb[0].mxu0 %v699
      %v1359 = vpop.f32.mrb[0].mxu0
      %v1360 = vadd.f32 %v691, %v1359
      %v1361 = vpop.f32.mrb[0].mxu0
      %1362 = vmatprep.mubr.f32.mxu0 0.0
      %1363 = vmatmul.mubr.f32.gmra.mrb[0].mxu0 %v702
      %v1364 = vpop.f32.mrb[0].mxu0
      %v1365 = vadd.f32 %v696, %v1364
      %v1366 = vpop.f32.mrb[0].mxu0
      %1367 = vdwg.mxu0
      %v1368 = vmax.f32 %v1199, %v1211
      %v1369 = vmax.f32 %v1205, %v1217
      %v1370 = vmax.f32 %v1368, %v1223
      %v1371 = vmax.f32 %v1369, %v1229
      %v1372 = vmax.f32 %v1370, %v1235
      %v1373 = vmax.f32 %v1371, %v1241
      %v1374 = vmax.f32 %v1372, %v1247
      %v1375 = vmax.f32 %v1373, %v1253
      %v1376 = vmax.f32 %v1374, %v1259
      %v1377 = vmax.f32 %v1375, %v1265
      %v1378 = vmax.f32 %v1376, %v1271
      %v1379 = vmax.f32 %v1377, %v1277
      %v1380 = vmax.f32 %v1378, %v1283
      %v1381 = vmax.f32 %v1379, %v1289
      %v1382 = vmax.f32 %v1380, %v1381
      %v1383 = vrot.slane %v1382, 4
      %v1384 = vmax.f32 %v1382, %v1383
      %v1385 = vrot.slane %v1384, 2
      %v1386 = vmax.f32 %v1384, %v1385
      %v1387 = vrot.slane %v1386, 1
      %v1388 = vmax.f32 %v1386, %v1387
      %v1389 = vmax.f32 %v1201, %v1213
      %v1390 = vmax.f32 %v1207, %v1219
      %v1391 = vmax.f32 %v1389, %v1225
      %v1392 = vmax.f32 %v1390, %v1231
      %v1393 = vmax.f32 %v1391, %v1237
      %v1394 = vmax.f32 %v1392, %v1243
      %v1395 = vmax.f32 %v1393, %v1249
      %v1396 = vmax.f32 %v1394, %v1255
      %v1397 = vmax.f32 %v1395, %v1261
      %v1398 = vmax.f32 %v1396, %v1267
      %v1399 = vmax.f32 %v1397, %v1273
      %v1400 = vmax.f32 %v1398, %v1279
      %v1401 = vmax.f32 %v1399, %v1285
      %v1402 = vmax.f32 %v1400, %v1291
      %v1403 = vmax.f32 %v1401, %v1402
      %v1404 = vrot.slane %v1403, 4
      %v1405 = vmax.f32 %v1403, %v1404
      %v1406 = vrot.slane %v1405, 2
      %v1407 = vmax.f32 %v1405, %v1406
      %v1408 = vrot.slane %v1407, 1
      %v1409 = vmax.f32 %v1407, %v1408
      %v1410 = vmax.f32 %v799, %v1388
      %v1411 = vmax.f32 %v820, %v1409
      %v1412 = vsub.f32 %v799, %v1410
      %v1413 = vsub.f32 %v820, %v1411
      %v1414 = vmul.f32 %v1412, 1.442695
      %v1415 = vpow.pop %v1414
      %v1416 = vmul.f32 %v1413, 1.442695
      %v1417 = vpow.pop %v1416
      %v1418 = vsub.f32 %v1199, %v1410
      %v1419 = vsub.f32 %v1201, %v1411
      %v1420 = vsub.f32 %v1205, %v1410
      %v1421 = vsub.f32 %v1207, %v1411
      %v1422 = vsub.f32 %v1211, %v1410
      %v1423 = vsub.f32 %v1213, %v1411
      %v1424 = vsub.f32 %v1217, %v1410
      %v1425 = vsub.f32 %v1219, %v1411
      %v1426 = vsub.f32 %v1223, %v1410
      %v1427 = vsub.f32 %v1225, %v1411
      %v1428 = vsub.f32 %v1229, %v1410
      %v1429 = vsub.f32 %v1231, %v1411
      %v1430 = vsub.f32 %v1235, %v1410
      %v1431 = vsub.f32 %v1237, %v1411
      %v1432 = vsub.f32 %v1241, %v1410
      %v1433 = vsub.f32 %v1243, %v1411
      %v1434 = vsub.f32 %v1247, %v1410
      %v1435 = vsub.f32 %v1249, %v1411
      %v1436 = vsub.f32 %v1253, %v1410
      %v1437 = vsub.f32 %v1255, %v1411
      %v1438 = vsub.f32 %v1259, %v1410
      %v1439 = vsub.f32 %v1261, %v1411
      %v1440 = vsub.f32 %v1265, %v1410
      %v1441 = vsub.f32 %v1267, %v1411
      %v1442 = vsub.f32 %v1271, %v1410
      %v1443 = vsub.f32 %v1273, %v1411
      %v1444 = vsub.f32 %v1277, %v1410
      %v1445 = vsub.f32 %v1279, %v1411
      %v1446 = vsub.f32 %v1283, %v1410
      %v1447 = vsub.f32 %v1285, %v1411
      %v1448 = vsub.f32 %v1289, %v1410
      %v1449 = vsub.f32 %v1291, %v1411
      %v1450 = vmul.f32 %v1418, 1.442695
      %v1451 = vpow.pop %v1450
      %v1452 = vmul.f32 %v1419, 1.442695
      %v1453 = vpow.pop %v1452
      %v1454 = vmul.f32 %v1420, 1.442695
      %v1455 = vpow.pop %v1454
      %v1456 = vmul.f32 %v1421, 1.442695
      %v1457 = vpow.pop %v1456
      %v1458 = vmul.f32 %v1422, 1.442695
      %v1459 = vpow.pop %v1458
      %v1460 = vmul.f32 %v1423, 1.442695
      %v1461 = vpow.pop %v1460
      %v1462 = vmul.f32 %v1424, 1.442695
      %v1463 = vpow.pop %v1462
      %v1464 = vmul.f32 %v1425, 1.442695
      %v1465 = vpow.pop %v1464
      %v1466 = vmul.f32 %v1426, 1.442695
      %v1467 = vpow.pop %v1466
      %v1468 = vmul.f32 %v1427, 1.442695
      %v1469 = vpow.pop %v1468
      %v1470 = vmul.f32 %v1428, 1.442695
      %v1471 = vpow.pop %v1470
      %v1472 = vmul.f32 %v1429, 1.442695
      %v1473 = vpow.pop %v1472
      %v1474 = vmul.f32 %v1430, 1.442695
      %v1475 = vpow.pop %v1474
      %v1476 = vmul.f32 %v1431, 1.442695
      %v1477 = vpow.pop %v1476
      %v1478 = vmul.f32 %v1432, 1.442695
      %v1479 = vpow.pop %v1478
      %v1480 = vmul.f32 %v1433, 1.442695
      %v1481 = vpow.pop %v1480
      %v1482 = vmul.f32 %v1434, 1.442695
      %v1483 = vpow.pop %v1482
      %v1484 = vmul.f32 %v1435, 1.442695
      %v1485 = vpow.pop %v1484
      %v1486 = vmul.f32 %v1436, 1.442695
      %v1487 = vpow.pop %v1486
      %v1488 = vmul.f32 %v1437, 1.442695
      %v1489 = vpow.pop %v1488
      %v1490 = vmul.f32 %v1438, 1.442695
      %v1491 = vpow.pop %v1490
      %v1492 = vmul.f32 %v1439, 1.442695
      %v1493 = vpow.pop %v1492
      %v1494 = vmul.f32 %v1440, 1.442695
      %v1495 = vpow.pop %v1494
      %v1496 = vmul.f32 %v1441, 1.442695
      %v1497 = vpow.pop %v1496
      %v1498 = vmul.f32 %v1442, 1.442695
      %v1499 = vpow.pop %v1498
      %v1500 = vmul.f32 %v1443, 1.442695
      %v1501 = vpow.pop %v1500
      %v1502 = vmul.f32 %v1444, 1.442695
      %v1503 = vpow.pop %v1502
      %v1504 = vmul.f32 %v1445, 1.442695
      %v1505 = vpow.pop %v1504
      %v1506 = vmul.f32 %v1446, 1.442695
      %v1507 = vpow.pop %v1506
      %v1508 = vmul.f32 %v1447, 1.442695
      %v1509 = vpow.pop %v1508
      %v1510 = vmul.f32 %v1448, 1.442695
      %v1511 = vpow.pop %v1510
      %v1512 = vmul.f32 %v1449, 1.442695
      %v1513 = vpow.pop %v1512
      %v1514 = vmul.f32 %v1415, %v967
      %v1515 = vmul.f32 %v1417, %v968
      %v1516 = vadd.f32 %v1451, %v1455
      %v1517 = vadd.f32 %v1516, %v1459
      %v1518 = vadd.f32 %v1517, %v1463
      %v1519 = vadd.f32 %v1518, %v1467
      %v1520 = vadd.f32 %v1519, %v1471
      %v1521 = vadd.f32 %v1520, %v1475
      %v1522 = vadd.f32 %v1521, %v1479
      %v1523 = vadd.f32 %v1522, %v1483
      %v1524 = vadd.f32 %v1523, %v1487
      %v1525 = vadd.f32 %v1524, %v1491
      %v1526 = vadd.f32 %v1525, %v1495
      %v1527 = vadd.f32 %v1526, %v1499
      %v1528 = vadd.f32 %v1527, %v1503
      %v1529 = vadd.f32 %v1528, %v1507
      %v1530 = vadd.f32 %v1529, %v1511
      %v1531 = vrot.slane %v1530, 4
      %v1532 = vadd.f32 %v1530, %v1531
      %v1533 = vrot.slane %v1532, 2
      %v1534 = vadd.f32 %v1532, %v1533
      %v1535 = vrot.slane %v1534, 1
      %v1536 = vadd.f32 %v1534, %v1535
      %v1537 = vadd.f32 %v1453, %v1457
      %v1538 = vadd.f32 %v1537, %v1461
      %v1539 = vadd.f32 %v1538, %v1465
      %v1540 = vadd.f32 %v1539, %v1469
      %v1541 = vadd.f32 %v1540, %v1473
      %v1542 = vadd.f32 %v1541, %v1477
      %v1543 = vadd.f32 %v1542, %v1481
      %v1544 = vadd.f32 %v1543, %v1485
      %v1545 = vadd.f32 %v1544, %v1489
      %v1546 = vadd.f32 %v1545, %v1493
      %v1547 = vadd.f32 %v1546, %v1497
      %v1548 = vadd.f32 %v1547, %v1501
      %v1549 = vadd.f32 %v1548, %v1505
      %v1550 = vadd.f32 %v1549, %v1509
      %v1551 = vadd.f32 %v1550, %v1513
      %v1552 = vrot.slane %v1551, 4
      %v1553 = vadd.f32 %v1551, %v1552
      %v1554 = vrot.slane %v1553, 2
      %v1555 = vadd.f32 %v1553, %v1554
      %v1556 = vrot.slane %v1555, 1
      %v1557 = vadd.f32 %v1555, %v1556
      %v1558 = vadd.f32 %v1514, %v1536
      %v1559 = vadd.f32 %v1515, %v1557
      %v1560 = vmul.f32 %v1415, %v1046
      %v1561 = vmul.f32 %v1417, %v1047
      %v1562 = vmul.f32 %v1415, %v1048
      %v1563 = vmul.f32 %v1417, %v1049
      %1564 = vmatprep.subr.mxu0 %v1453
      %1565 = vmatpush1.msra.mxu0 %v1451
      %1566 = vmatprep.subr.mxu0 %v1457
      %1567 = vmatpush1.msra.mxu0 %v1455
      %1568 = vmatprep.subr.mxu0 %v1461
      %1569 = vmatpush1.msra.mxu0 %v1459
      %1570 = vmatprep.subr.mxu0 %v1465
      %1571 = vmatpush1.msra.mxu0 %v1463
      %1572 = vmatprep.subr.mxu0 %v1469
      %1573 = vmatpush1.msra.mxu0 %v1467
      %1574 = vmatprep.subr.mxu0 %v1473
      %1575 = vmatpush1.msra.mxu0 %v1471
      %1576 = vmatprep.subr.mxu0 %v1477
      %1577 = vmatpush1.msra.mxu0 %v1475
      %1578 = vmatprep.subr.mxu0 %v1481
      %1579 = vmatpush1.msra.mxu0 %v1479
      %1580 = vmatprep.subr.mxu0 %v1485
      %1581 = vmatpush1.msra.mxu0 %v1483
      %1582 = vmatprep.subr.mxu0 %v1489
      %1583 = vmatpush1.msra.mxu0 %v1487
      %1584 = vmatprep.subr.mxu0 %v1493
      %1585 = vmatpush1.msra.mxu0 %v1491
      %1586 = vmatprep.subr.mxu0 %v1497
      %1587 = vmatpush1.msra.mxu0 %v1495
      %1588 = vmatprep.subr.mxu0 %v1501
      %1589 = vmatpush1.msra.mxu0 %v1499
      %1590 = vmatprep.subr.mxu0 %v1505
      %1591 = vmatpush1.msra.mxu0 %v1503
      %1592 = vmatprep.subr.mxu0 %v1509
      %1593 = vmatpush1.msra.mxu0 %v1507
      %1594 = vmatprep.subr.mxu0 %v1513
      %1595 = vmatpush1.msra.mxu0 %v1511
      %1596 = vmatprep.subr.mxu0 0.0
      %1597 = vmatpush1.msra.mxu0 0.0
      %1598 = vmatprep.subr.mxu0 0.0
      %1599 = vmatpush1.msra.mxu0 0.0
      %1600 = vmatprep.subr.mxu0 0.0
      %1601 = vmatpush1.msra.mxu0 0.0
      %1602 = vmatprep.subr.mxu0 0.0
      %1603 = vmatpush1.msra.mxu0 0.0
      %1604 = vmatprep.subr.mxu0 0.0
      %1605 = vmatpush1.msra.mxu0 0.0
      %1606 = vmatprep.subr.mxu0 0.0
      %1607 = vmatpush1.msra.mxu0 0.0
      %1608 = vmatprep.subr.mxu0 0.0
      %1609 = vmatpush1.msra.mxu0 0.0
      %1610 = vmatprep.subr.mxu0 0.0
      %1611 = vmatpush1.msra.mxu0 0.0
      %1612 = vmatprep.subr.mxu0 0.0
      %1613 = vmatpush1.msra.mxu0 0.0
      %1614 = vmatprep.subr.mxu0 0.0
      %1615 = vmatpush1.msra.mxu0 0.0
      %1616 = vmatprep.subr.mxu0 0.0
      %1617 = vmatpush1.msra.mxu0 0.0
      %1618 = vmatprep.subr.mxu0 0.0
      %1619 = vmatpush1.msra.mxu0 0.0
      %1620 = vmatprep.subr.mxu0 0.0
      %1621 = vmatpush1.msra.mxu0 0.0
      %1622 = vmatprep.subr.mxu0 0.0
      %1623 = vmatpush1.msra.mxu0 0.0
      %1624 = vmatprep.subr.mxu0 0.0
      %1625 = vmatpush1.msra.mxu0 0.0
      %1626 = vmatprep.subr.mxu0 0.0
      %1627 = vmatpush1.msra.mxu0 0.0
      %1628 = vmatprep.mubr.f32.mxu0 0.0
      %1629 = vmatmul.mubr.f32.gmra.mrb[0].mxu0 %v1360
      %v1630 = vpop.f32.mrb[0].mxu0
      %v1631 = vadd.f32 0.0, %v1630
      %v1632 = vpop.f32.mrb[0].mxu0
      %v1633 = vadd.f32 0.0, %v1632
      %1634 = vmatprep.mubr.f32.mxu0 0.0
      %1635 = vmatmul.mubr.f32.gmra.mrb[0].mxu0 %v1365
      %v1636 = vpop.f32.mrb[0].mxu0
      %v1637 = vadd.f32 0.0, %v1636
      %v1638 = vpop.f32.mrb[0].mxu0
      %v1639 = vadd.f32 0.0, %v1638
      %1640 = vdwg.mxu0
      %v1641 = vadd.f32 %v1560, %v1631
      %v1642 = vadd.f32 %v1561, %v1633
      %v1643 = vadd.f32 %v1562, %v1637
      %v1644 = vadd.f32 %v1563, %v1639
      %s1645 = sld [smem:[#allocation2]]
      %v1646 = vrcp.pop %v1558
      %v1647 = vrcp.pop %v1559
      %v1648 = vmul.f32 %v1641, %v1646
      %v1649 = vmul.f32 %v1642, %v1647
      %v1650 = vmul.f32 %v1643, %v1646
      %v1651 = vmul.f32 %v1644, %v1647
      %v1652 = vstv %s1645
      %v1653 = vmul.f32 %v1652, %v1648
      %v1654 = vmul.f32 %v1652, %v1649
      %v1655 = vmul.f32 %v1652, %v1650
      %v1656 = vmul.f32 %v1652, %v1651
      %v1657 = vadd.f32 %v1653, %v339
      %v1658 = vadd.f32 %v1654, %v340
      %v1659 = vadd.f32 %v1655, %v341
      %v1660 = vadd.f32 %v1656, %v342
      %v1661 = vmax.f32 %v1657, %v1659
      %v1662 = vrot.slane %v1661, 4
      %v1663 = vmax.f32 %v1661, %v1662
      %v1664 = vrot.slane %v1663, 2
      %v1665 = vmax.f32 %v1663, %v1664
      %v1666 = vrot.slane %v1665, 1
      %v1667 = vmax.f32 %v1665, %v1666
      %v1668 = vmax.f32 %v1658, %v1660
      %v1669 = vrot.slane %v1668, 4
      %v1670 = vmax.f32 %v1668, %v1669
      %v1671 = vrot.slane %v1670, 2
      %v1672 = vmax.f32 %v1670, %v1671
      %v1673 = vrot.slane %v1672, 1
      %v1674 = vmax.f32 %v1672, %v1673
      %v1675 = vsub.f32 %v1657, %v1667
      %v1676 = vsub.f32 %v1658, %v1674
      %v1677 = vsub.f32 %v1659, %v1667
      %v1678 = vsub.f32 %v1660, %v1674
      %v1679 = vmul.f32 %v1675, 1.442695
      %v1680 = vpow.pop %v1679
      %v1681 = vmul.f32 %v1676, 1.442695
      %v1682 = vpow.pop %v1681
      %v1683 = vmul.f32 %v1677, 1.442695
      %v1684 = vpow.pop %v1683
      %v1685 = vmul.f32 %v1678, 1.442695
      %v1686 = vpow.pop %v1685
      %v1687 = vadd.f32 %v1680, %v1684
      %v1688 = vrot.slane %v1687, 4
      %v1689 = vadd.f32 %v1687, %v1688
      %v1690 = vrot.slane %v1689, 2
      %v1691 = vadd.f32 %v1689, %v1690
      %v1692 = vrot.slane %v1691, 1
      %v1693 = vadd.f32 %v1691, %v1692
      %v1694 = vadd.f32 %v1682, %v1686
      %v1695 = vrot.slane %v1694, 4
      %v1696 = vadd.f32 %v1694, %v1695
      %v1697 = vrot.slane %v1696, 2
      %v1698 = vadd.f32 %v1696, %v1697
      %v1699 = vrot.slane %v1698, 1
      %v1700 = vadd.f32 %v1698, %v1699
      %v1701 = vrcp.pop %v1693
      %v1702 = vrcp.pop %v1700
      %v1703 = vmul.f32 %v1680, %v1701
      %v1704 = vmul.f32 %v1682, %v1702
      %v1705 = vmul.f32 %v1684, %v1701
      %v1706 = vmul.f32 %v1686, %v1702
      %1707 = vst [vmem:[%s337] sm:$0xff] %v1703
      %1708 = vst [vmem:[%s337 + $0x8] sm:$0xff] %v1704
      %1709 = vst [vmem:[%s337 + $0x10] sm:$0xff] %v1705
      %1710 = vst [vmem:[%s337 + $0x18] sm:$0xff] %v1706
      %s1711 = smul.u32 2, %s24
      %p1712 = scmp.lt.s32.totalorder %s23, 1
      %s1713 = scalar_select %p1712, %s23, 1
      %p1714 = scmp.lt.s32.totalorder %s1711, 1
      %s1715 = scalar_select %p1714, %s1711, 1
      %s1716 = smul.addr %s1713, 4
      %s1717 = sadd.s32 %s1715, %s1716
      %s1718 = smul.addr %s1717, 8
      %s1719 = scalar_lea.vmem %s7, %s1718
      // Predicated region
      $region49: #{decoder_forward.7} parent=47 // pred_check
        %p1720 = pneg %p210
      $region50: #{decoder_forward.7} parent=47 // pred_check_branch
        %1722 = sbr.rel (%p1720) target = $region52
      $region51: #{decoder_forward.7} parent=47 // pred_region
        %s1723 = smul.u32 2, %s24
      $region52: #{decoder_forward.7} parent=47 // pred_fallthru
        _
    $region48: #{decoder_forward.7} parent=5 // pred_fallthru
      _
    %p1724 = scmp.le.s32.totalorder 2, %s14
    // Predicated region
    $region53: #{decoder_forward.7} parent=5 // pred_check
      %p1725 = pneg %p1724
    $region54: #{decoder_forward.7} parent=5 // pred_check_branch
      %1727 = sbr.rel (%p1725) target = $region56
    $region55: #{decoder_forward.7} parent=5 // pred_region
      %s1728 = ssub.s32 %s14, 2
      // Predicated region
      $region57: #{decoder_forward.7} parent=55 // pred_check
        %p1729 = pneg %p216
      $region58: #{decoder_forward.7} parent=55 // pred_check_branch
        %1731 = sbr.rel (%p1729) target = $region60
      $region59: #{decoder_forward.7} parent=55 // pred_region
        %s1732 = smul.u32 2, %s26
        %p1733 = scmp.lt.s32.totalorder %s25, 1
        %s1734 = scalar_select %p1733, %s25, 1
        %p1735 = scmp.lt.s32.totalorder %s1732, 1
        %s1736 = scalar_select %p1735, %s1732, 1
        %s1737 = smul.addr %s1734, 4
        %s1738 = sadd.s32 %s1736, %s1737
        %s1739 = smul.addr %s1738, 8
        %s1740 = scalar_lea.vmem %s7, %s1739
      $region60: #{decoder_forward.7} parent=55 // pred_fallthru
        _
    $region56: #{decoder_forward.7} parent=5 // pred_fallthru
      _
  $region6: #{decoder_forward.7} parent=0 // loop_footer
    %s18 = sadd.s32 1, %s14
  $region7: #{decoder_forward.7} parent=0 // loop_footer_branch
    %13 = sbr.rel target = $region3
  $region8: #{decoder_forward.7} parent=0 // loop_exit
    _

</llo_original>
